<compile_context>
chip_gen: v7x
topology: tpu7x:2x2x1
jax: 0.10.0
libtpu: 0.0.40
codegen_flags: <defaults>
</compile_context>

<pallas_src>
import jax
import jax.numpy as jnp
import numpy as np
from jax.experimental import pallas as pl
from jax.experimental.pallas import tpu as pltpu

_B_TILE = 8  # images per grid step (keeps every reshape sublane-aligned)


# ------------------------------ fused kernel --------------------------------

def _lenet5_kernel(x_ref, m1_ref, b1_ref, p1e_ref, p1o_ref,
                   m2_ref, b2_ref, p2e_ref, p2o_ref,
                   f1_ref, fb1_ref, f2_ref, fb2_ref, f3_ref, fb3_ref,
                   out_ref):
    f32 = jnp.float32
    x = x_ref[0]                              # (28, B, 28)  [H, batch, W]
    B = x.shape[1]

    # ---- conv1 + ReLU: sum over 4 kh taps of banded matmuls over W ----------
    acc1 = jnp.zeros((25 * B, 150), f32)
    for kh in range(4):
        xs = x[kh:kh + 25].reshape(25 * B, 28)            # rows = (h', b)
        acc1 = acc1 + jnp.dot(xs, m1_ref[kh], preferred_element_type=f32)
    y1 = jnp.maximum(acc1 + b1_ref[...], 0.0)             # lanes = (w', c)

    # ---- pool1 (2x2, floor) -------------------------------------------------
    y1 = y1.reshape(25, B, 150)[:24].reshape(12, 2, B, 150)
    y1 = jnp.maximum(y1[:, 0], y1[:, 1]).reshape(12 * B, 150)          # H pool
    a2 = jnp.maximum(jnp.dot(y1, p1e_ref[...], preferred_element_type=f32),
                     jnp.dot(y1, p1o_ref[...], preferred_element_type=f32))
    a2 = a2.reshape(12, B, 72)                            # lanes = (w, cin)

    # ---- conv2 + ReLU -------------------------------------------------------
    acc2 = jnp.zeros((9 * B, 144), f32)
    for kh in range(4):
        xs = a2[kh:kh + 9].reshape(9 * B, 72)
        acc2 = acc2 + jnp.dot(xs, m2_ref[kh], preferred_element_type=f32)
    y2 = jnp.maximum(acc2 + b2_ref[...], 0.0)             # lanes = (w2, cout)

    # ---- pool2 --------------------------------------------------------------
    y2 = y2.reshape(9, B, 144)[:8].reshape(4, 2, B, 144)
    y2 = jnp.maximum(y2[:, 0], y2[:, 1]).reshape(4 * B, 144)
    a3 = jnp.maximum(jnp.dot(y2, p2e_ref[...], preferred_element_type=f32),
                     jnp.dot(y2, p2o_ref[...], preferred_element_type=f32))
    a3 = a3.reshape(4, B, 64)                             # lanes = (w, cout)

    # ---- fc1 + ReLU (NCHW flatten folded into f1 row order) ----------------
    h = jnp.zeros((B, 128), f32)
    for hh in range(4):
        h = h + jnp.dot(a3[hh], f1_ref[hh], preferred_element_type=f32)
    h = jnp.maximum(h + fb1_ref[...], 0.0)

    # ---- fc2 + ReLU, fc3 (all padded to 128 lanes) --------------------------
    h = jnp.maximum(jnp.dot(h, f2_ref[...], preferred_element_type=f32)
                    + fb2_ref[...], 0.0)
    out_ref[...] = (jnp.dot(h, f3_ref[...], preferred_element_type=f32)
                    + fb3_ref[...])


# ------------------------ one-time weight preparation ------------------------

def prepare_params(params):
    """PyTorch-layout LeNet5 params -> fused-kernel operand pytree."""
    c1w, c1b, c2w, c2b, f1w, f1b, f2w, f2b, f3w, f3b = [
        np.asarray(p, np.float32) for p in params]
    C1, C2 = 6, 16
    W1o, W2o = 25, 9

    # conv1 banded matrices: M1[kh, w, w'*6+c] = c1w[c, 0, kh, w-w'] (valid taps)
    M1 = np.zeros((4, 28, W1o * C1), np.float32)
    for kh in range(4):
        for wp in range(W1o):
            for kw in range(4):
                M1[kh, wp + kw, wp * C1:(wp + 1) * C1] = c1w[:, 0, kh, kw]
    b1t = np.tile(c1b, W1o).reshape(1, -1)                       # (1, 150)

    # pool1 even/odd lane-group selection (w' -> w), keeps channel minor order
    P1e = np.zeros((W1o * C1, 12 * C1), np.float32)
    P1o = np.zeros((W1o * C1, 12 * C1), np.float32)
    for j in range(12):
        for c in range(C1):
            P1e[(2 * j) * C1 + c, j * C1 + c] = 1.0
            P1o[(2 * j + 1) * C1 + c, j * C1 + c] = 1.0

    # conv2 banded matrices: rows = (w, cin) lanes, cols = (w2, cout) lanes
    M2 = np.zeros((4, 12 * C1, W2o * C2), np.float32)
    for kh in range(4):
        for w2 in range(W2o):
            for kw in range(4):
                w = w2 + kw
                for ci in range(C1):
                    M2[kh, w * C1 + ci, w2 * C2:(w2 + 1) * C2] = c2w[:, ci, kh, kw]
    b2t = np.tile(c2b, W2o).reshape(1, -1)                       # (1, 144)

    # pool2 selection matrices
    P2e = np.zeros((W2o * C2, 4 * C2), np.float32)
    P2o = np.zeros((W2o * C2, 4 * C2), np.float32)
    for j in range(4):
        for c in range(C2):
            P2e[(2 * j) * C2 + c, j * C2 + c] = 1.0
            P2o[(2 * j + 1) * C2 + c, j * C2 + c] = 1.0

    # fc1: rows reordered so the (w, cout) lane layout matches the NCHW flatten
    # feature index co*16 + h*4 + w; lane-padded to 128 outputs.
    F1 = np.zeros((4, 64, 128), np.float32)
    t = f1w.reshape(16, 4, 4, 120)                               # [co, h, w, o]
    F1[:, :, :120] = np.transpose(t, (1, 2, 0, 3)).reshape(4, 64, 120)
    fb1 = np.zeros((1, 128), np.float32); fb1[0, :120] = f1b
    F2 = np.zeros((128, 128), np.float32); F2[:120, :84] = f2w
    fb2 = np.zeros((1, 128), np.float32); fb2[0, :84] = f2b
    F3 = np.zeros((128, 128), np.float32); F3[:84, :10] = f3w
    fb3 = np.zeros((1, 128), np.float32); fb3[0, :10] = f3b

    return tuple(jnp.asarray(a) for a in
                 (M1, b1t, P1e, P1o, M2, b2t, P2e, P2o,
                  F1, fb1, F2, fb2, F3, fb3))


# --------------------------------- wrapper -----------------------------------

def lenet5_forward(x, prepared):
    """x: (N, 1, 28, 28) float32 -> logits (N, 10)."""
    N = x.shape[0]
    Np = ((N + _B_TILE - 1) // _B_TILE) * _B_TILE
    G = Np // _B_TILE

    xb = x[:, 0, :, :]                                           # (N, 28, 28)
    if Np != N:
        xb = jnp.pad(xb, ((0, Np - N), (0, 0), (0, 0)))
    # (G, 28, B, 28) = [group, H, batch-in-tile, W]
    xb = jnp.transpose(xb.reshape(G, _B_TILE, 28, 28), (0, 2, 1, 3))

    def const_spec(a):
        n = a.ndim
        return pl.BlockSpec(a.shape, lambda g, _n=n: (0,) * _n)

    weights = prepared
    out = pl.pallas_call(
        _lenet5_kernel,
        out_shape=jax.ShapeDtypeStruct((Np, 128), jnp.float32),
        grid_spec=pltpu.PrefetchScalarGridSpec(
            num_scalar_prefetch=0,
            grid=(G,),
            in_specs=[pl.BlockSpec((1, 28, _B_TILE, 28),
                                   lambda g: (g, 0, 0, 0))]
                     + [const_spec(a) for a in weights],
            out_specs=pl.BlockSpec((_B_TILE, 128), lambda g: (g, 0)),
        ),
        compiler_params=pltpu.CompilerParams(
            dimension_semantics=("parallel",)),
    )(xb, *weights)
    return out[:N, :10]


# --------------------------- reference + params ------------------------------

def _maxpool_nchw_ref(x):
    N, C, H, W = x.shape
    Hp, Wp = H // 2, W // 2
    x = x[:, :, :2 * Hp, :2 * Wp].reshape(N, C, Hp, 2, Wp, 2)
    return x.max(axis=(3, 5))


def lenet5_reference(x, params):
    """Pure-JAX mirror of the PyTorch forward (for verification)."""
    c1w, c1b, c2w, c2b, f1w, f1b, f2w, f2b, f3w, f3b = params
    dn = ('NCHW', 'OIHW', 'NCHW')
    y = jax.lax.conv_general_dilated(x, c1w, (1, 1), 'VALID',
                                     dimension_numbers=dn,
                                     precision=jax.lax.Precision.HIGHEST)
    y = jnp.maximum(y + c1b[None, :, None, None], 0.0)
    y = _maxpool_nchw_ref(y)
    y = jax.lax.conv_general_dilated(y, c2w, (1, 1), 'VALID',
                                     dimension_numbers=dn,
                                     precision=jax.lax.Precision.HIGHEST)
    y = jnp.maximum(y + c2b[None, :, None, None], 0.0)
    y = _maxpool_nchw_ref(y)
    y = y.reshape(y.shape[0], -1)
    y = jnp.maximum(y @ f1w + f1b, 0.0)
    y = jnp.maximum(y @ f2w + f2b, 0.0)
    return y @ f3w + f3b


def init_params(key):
    def u(k, shape, fan_in):
        bound = 1.0 / np.sqrt(fan_in)
        return jax.random.uniform(k, shape, jnp.float32, -bound, bound)

    ks = jax.random.split(key, 10)
    c1w = u(ks[0], (6, 1, 4, 4), 1 * 4 * 4)
    c1b = u(ks[1], (6,), 1 * 4 * 4)
    c2w = u(ks[2], (16, 6, 4, 4), 6 * 4 * 4)
    c2b = u(ks[3], (16,), 6 * 4 * 4)
    f1w = u(ks[4], (256, 120), 256)   # stored (in, out); PyTorch stores (out, in)
    f1b = u(ks[5], (120,), 256)
    f2w = u(ks[6], (120, 84), 120)
    f2b = u(ks[7], (84,), 120)
    f3w = u(ks[8], (84, 10), 84)
    f3b = u(ks[9], (10,), 84)
    return (c1w, c1b, c2w, c2b, f1w, f1b, f2w, f2b, f3w, f3b)


if __name__ == "__main__":
    key = jax.random.PRNGKey(0)
    kp, kx = jax.random.split(key)
    params = init_params(kp)
    prepared = prepare_params(params)      # one-time host-side weight packing

    # fc1 expects 16*4*4 features => 28x28 single-channel input
    x = jax.random.normal(kx, (16, 1, 28, 28), dtype=jnp.float32)

    fwd = jax.jit(lenet5_forward)
    out = jax.block_until_ready(fwd(x, prepared))
    ref = jax.block_until_ready(lenet5_reference(x, params))

    assert out.shape == (16, 10)
    assert bool(jnp.allclose(out, ref, atol=1e-2, rtol=1e-2)), \
        float(jnp.max(jnp.abs(out - ref)))
    print("KERNEL_OK")
</pallas_src>

<mosaic_0001>
module attributes {stable_mosaic.version = 11 : i64} {
  func.func @_lenet5_kernel(%arg0: i32, %arg1: memref<1x28x8x28xf32, #tpu.memory_space<vmem>>, %arg2: memref<4x28x150xf32, #tpu.memory_space<vmem>>, %arg3: memref<1x150xf32, #tpu.memory_space<vmem>>, %arg4: memref<150x72xf32, #tpu.memory_space<vmem>>, %arg5: memref<150x72xf32, #tpu.memory_space<vmem>>, %arg6: memref<4x72x144xf32, #tpu.memory_space<vmem>>, %arg7: memref<1x144xf32, #tpu.memory_space<vmem>>, %arg8: memref<144x64xf32, #tpu.memory_space<vmem>>, %arg9: memref<144x64xf32, #tpu.memory_space<vmem>>, %arg10: memref<4x64x128xf32, #tpu.memory_space<vmem>>, %arg11: memref<1x128xf32, #tpu.memory_space<vmem>>, %arg12: memref<128x128xf32, #tpu.memory_space<vmem>>, %arg13: memref<1x128xf32, #tpu.memory_space<vmem>>, %arg14: memref<128x128xf32, #tpu.memory_space<vmem>>, %arg15: memref<1x128xf32, #tpu.memory_space<vmem>>, %arg16: memref<8x128xf32, #tpu.memory_space<vmem>>) attributes {dimension_semantics = [#tpu.dimension_semantics<parallel>], iteration_bounds = array<i64: 2>, scalar_prefetch = 0 : i64, scratch_operands = 0 : i64, tpu.core_type = #tpu.core_type<tc>, window_params = [{transform_indices = @transform_0, window_bounds = array<i64: 1, 28, 8, 28>}, {pipeline_mode = #tpu.pipeline_mode<synchronous>, transform_indices = @transform_1, window_bounds = array<i64: 4, 28, 150>}, {pipeline_mode = #tpu.pipeline_mode<synchronous>, transform_indices = @transform_2, window_bounds = array<i64: 1, 150>}, {pipeline_mode = #tpu.pipeline_mode<synchronous>, transform_indices = @transform_3, window_bounds = array<i64: 150, 72>}, {pipeline_mode = #tpu.pipeline_mode<synchronous>, transform_indices = @transform_4, window_bounds = array<i64: 150, 72>}, {pipeline_mode = #tpu.pipeline_mode<synchronous>, transform_indices = @transform_5, window_bounds = array<i64: 4, 72, 144>}, {pipeline_mode = #tpu.pipeline_mode<synchronous>, transform_indices = @transform_6, window_bounds = array<i64: 1, 144>}, {pipeline_mode = #tpu.pipeline_mode<synchronous>, transform_indices = @transform_7, window_bounds = array<i64: 144, 64>}, {pipeline_mode = #tpu.pipeline_mode<synchronous>, transform_indices = @transform_8, window_bounds = array<i64: 144, 64>}, {pipeline_mode = #tpu.pipeline_mode<synchronous>, transform_indices = @transform_9, window_bounds = array<i64: 4, 64, 128>}, {pipeline_mode = #tpu.pipeline_mode<synchronous>, transform_indices = @transform_10, window_bounds = array<i64: 1, 128>}, {pipeline_mode = #tpu.pipeline_mode<synchronous>, transform_indices = @transform_11, window_bounds = array<i64: 128, 128>}, {pipeline_mode = #tpu.pipeline_mode<synchronous>, transform_indices = @transform_12, window_bounds = array<i64: 1, 128>}, {pipeline_mode = #tpu.pipeline_mode<synchronous>, transform_indices = @transform_13, window_bounds = array<i64: 128, 128>}, {pipeline_mode = #tpu.pipeline_mode<synchronous>, transform_indices = @transform_14, window_bounds = array<i64: 1, 128>}, {transform_indices = @transform_15, window_bounds = array<i64: 8, 128>}]} {
    %c0 = arith.constant 0 : index
    %c0_0 = arith.constant 0 : index
    %c0_1 = arith.constant 0 : index
    %c0_2 = arith.constant 0 : index
    %0 = vector.load %arg1[%c0, %c0_0, %c0_1, %c0_2] : memref<1x28x8x28xf32, #tpu.memory_space<vmem>>, vector<1x28x8x28xf32>
    %1 = vector.shape_cast %0 : vector<1x28x8x28xf32> to vector<28x8x28xf32>
    %cst = arith.constant 0.000000e+00 : f32
    %2 = vector.broadcast %cst : f32 to vector<200x150xf32>
    %3 = vector.extract_strided_slice %1 {offsets = [0, 0, 0], sizes = [25, 8, 28], strides = [1, 1, 1]} : vector<28x8x28xf32> to vector<25x8x28xf32>
    %4 = vector.shape_cast %3 : vector<25x8x28xf32> to vector<200x28xf32>
    %c0_3 = arith.constant 0 : index
    %c0_4 = arith.constant 0 : index
    %c0_5 = arith.constant 0 : index
    %5 = vector.load %arg2[%c0_3, %c0_4, %c0_5] : memref<4x28x150xf32, #tpu.memory_space<vmem>>, vector<1x28x150xf32>
    %6 = vector.shape_cast %5 : vector<1x28x150xf32> to vector<28x150xf32>
    %cst_6 = arith.constant dense<0.000000e+00> : vector<200x150xf32>
    %7 = tpu.matmul %4, %6, %cst_6 {dimension_numbers = #tpu.dot_dimension_numbers<[1], [0], [0], [1], [0, 0, 1, 1], [], []>} : vector<200x28xf32>, vector<28x150xf32>, vector<200x150xf32> -> vector<200x150xf32>
    %8 = arith.addf %2, %7 : vector<200x150xf32>
    %9 = vector.extract_strided_slice %1 {offsets = [1, 0, 0], sizes = [25, 8, 28], strides = [1, 1, 1]} : vector<28x8x28xf32> to vector<25x8x28xf32>
    %10 = vector.shape_cast %9 : vector<25x8x28xf32> to vector<200x28xf32>
    %c1 = arith.constant 1 : index
    %c0_7 = arith.constant 0 : index
    %c0_8 = arith.constant 0 : index
    %11 = vector.load %arg2[%c1, %c0_7, %c0_8] : memref<4x28x150xf32, #tpu.memory_space<vmem>>, vector<1x28x150xf32>
    %12 = vector.shape_cast %11 : vector<1x28x150xf32> to vector<28x150xf32>
    %cst_9 = arith.constant dense<0.000000e+00> : vector<200x150xf32>
    %13 = tpu.matmul %10, %12, %cst_9 {dimension_numbers = #tpu.dot_dimension_numbers<[1], [0], [0], [1], [0, 0, 1, 1], [], []>} : vector<200x28xf32>, vector<28x150xf32>, vector<200x150xf32> -> vector<200x150xf32>
    %14 = arith.addf %8, %13 : vector<200x150xf32>
    %15 = vector.extract_strided_slice %1 {offsets = [2, 0, 0], sizes = [25, 8, 28], strides = [1, 1, 1]} : vector<28x8x28xf32> to vector<25x8x28xf32>
    %16 = vector.shape_cast %15 : vector<25x8x28xf32> to vector<200x28xf32>
    %c2 = arith.constant 2 : index
    %c0_10 = arith.constant 0 : index
    %c0_11 = arith.constant 0 : index
    %17 = vector.load %arg2[%c2, %c0_10, %c0_11] : memref<4x28x150xf32, #tpu.memory_space<vmem>>, vector<1x28x150xf32>
    %18 = vector.shape_cast %17 : vector<1x28x150xf32> to vector<28x150xf32>
    %cst_12 = arith.constant dense<0.000000e+00> : vector<200x150xf32>
    %19 = tpu.matmul %16, %18, %cst_12 {dimension_numbers = #tpu.dot_dimension_numbers<[1], [0], [0], [1], [0, 0, 1, 1], [], []>} : vector<200x28xf32>, vector<28x150xf32>, vector<200x150xf32> -> vector<200x150xf32>
    %20 = arith.addf %14, %19 : vector<200x150xf32>
    %21 = vector.extract_strided_slice %1 {offsets = [3, 0, 0], sizes = [25, 8, 28], strides = [1, 1, 1]} : vector<28x8x28xf32> to vector<25x8x28xf32>
    %22 = vector.shape_cast %21 : vector<25x8x28xf32> to vector<200x28xf32>
    %c3 = arith.constant 3 : index
    %c0_13 = arith.constant 0 : index
    %c0_14 = arith.constant 0 : index
    %23 = vector.load %arg2[%c3, %c0_13, %c0_14] : memref<4x28x150xf32, #tpu.memory_space<vmem>>, vector<1x28x150xf32>
    %24 = vector.shape_cast %23 : vector<1x28x150xf32> to vector<28x150xf32>
    %cst_15 = arith.constant dense<0.000000e+00> : vector<200x150xf32>
    %25 = tpu.matmul %22, %24, %cst_15 {dimension_numbers = #tpu.dot_dimension_numbers<[1], [0], [0], [1], [0, 0, 1, 1], [], []>} : vector<200x28xf32>, vector<28x150xf32>, vector<200x150xf32> -> vector<200x150xf32>
    %26 = arith.addf %20, %25 : vector<200x150xf32>
    %c0_16 = arith.constant 0 : index
    %c0_17 = arith.constant 0 : index
    %27 = vector.load %arg3[%c0_16, %c0_17] : memref<1x150xf32, #tpu.memory_space<vmem>>, vector<1x150xf32>
    %28 = vector.broadcast %27 : vector<1x150xf32> to vector<200x150xf32>
    %29 = arith.addf %26, %28 : vector<200x150xf32>
    %cst_18 = arith.constant 0.000000e+00 : f32
    %30 = vector.broadcast %cst_18 : f32 to vector<200x150xf32>
    %31 = arith.maximumf %29, %30 : vector<200x150xf32>
    %32 = vector.shape_cast %31 : vector<200x150xf32> to vector<25x8x150xf32>
    %33 = vector.extract_strided_slice %32 {offsets = [0, 0, 0], sizes = [24, 8, 150], strides = [1, 1, 1]} : vector<25x8x150xf32> to vector<24x8x150xf32>
    %34 = vector.shape_cast %33 : vector<24x8x150xf32> to vector<12x2x8x150xf32>
    %35 = vector.extract_strided_slice %34 {offsets = [0, 0, 0, 0], sizes = [12, 1, 8, 150], strides = [1, 1, 1, 1]} : vector<12x2x8x150xf32> to vector<12x1x8x150xf32>
    %36 = vector.shape_cast %35 : vector<12x1x8x150xf32> to vector<12x8x150xf32>
    %37 = vector.extract_strided_slice %34 {offsets = [0, 1, 0, 0], sizes = [12, 1, 8, 150], strides = [1, 1, 1, 1]} : vector<12x2x8x150xf32> to vector<12x1x8x150xf32>
    %38 = vector.shape_cast %37 : vector<12x1x8x150xf32> to vector<12x8x150xf32>
    %39 = arith.maximumf %36, %38 : vector<12x8x150xf32>
    %40 = vector.shape_cast %39 : vector<12x8x150xf32> to vector<96x150xf32>
    %c0_19 = arith.constant 0 : index
    %c0_20 = arith.constant 0 : index
    %41 = vector.load %arg4[%c0_19, %c0_20] : memref<150x72xf32, #tpu.memory_space<vmem>>, vector<150x72xf32>
    %cst_21 = arith.constant dense<0.000000e+00> : vector<96x72xf32>
    %42 = tpu.matmul %40, %41, %cst_21 {dimension_numbers = #tpu.dot_dimension_numbers<[1], [0], [0], [1], [0, 0, 1, 1], [], []>} : vector<96x150xf32>, vector<150x72xf32>, vector<96x72xf32> -> vector<96x72xf32>
    %c0_22 = arith.constant 0 : index
    %c0_23 = arith.constant 0 : index
    %43 = vector.load %arg5[%c0_22, %c0_23] : memref<150x72xf32, #tpu.memory_space<vmem>>, vector<150x72xf32>
    %cst_24 = arith.constant dense<0.000000e+00> : vector<96x72xf32>
    %44 = tpu.matmul %40, %43, %cst_24 {dimension_numbers = #tpu.dot_dimension_numbers<[1], [0], [0], [1], [0, 0, 1, 1], [], []>} : vector<96x150xf32>, vector<150x72xf32>, vector<96x72xf32> -> vector<96x72xf32>
    %45 = arith.maximumf %42, %44 : vector<96x72xf32>
    %46 = vector.shape_cast %45 : vector<96x72xf32> to vector<12x8x72xf32>
    %cst_25 = arith.constant 0.000000e+00 : f32
    %47 = vector.broadcast %cst_25 : f32 to vector<72x144xf32>
    %48 = vector.extract_strided_slice %46 {offsets = [0, 0, 0], sizes = [9, 8, 72], strides = [1, 1, 1]} : vector<12x8x72xf32> to vector<9x8x72xf32>
    %49 = vector.shape_cast %48 : vector<9x8x72xf32> to vector<72x72xf32>
    %c0_26 = arith.constant 0 : index
    %c0_27 = arith.constant 0 : index
    %c0_28 = arith.constant 0 : index
    %50 = vector.load %arg6[%c0_26, %c0_27, %c0_28] : memref<4x72x144xf32, #tpu.memory_space<vmem>>, vector<1x72x144xf32>
    %51 = vector.shape_cast %50 : vector<1x72x144xf32> to vector<72x144xf32>
    %cst_29 = arith.constant dense<0.000000e+00> : vector<72x144xf32>
    %52 = tpu.matmul %49, %51, %cst_29 {dimension_numbers = #tpu.dot_dimension_numbers<[1], [0], [0], [1], [0, 0, 1, 1], [], []>} : vector<72x72xf32>, vector<72x144xf32>, vector<72x144xf32> -> vector<72x144xf32>
    %53 = arith.addf %47, %52 : vector<72x144xf32>
    %54 = vector.extract_strided_slice %46 {offsets = [1, 0, 0], sizes = [9, 8, 72], strides = [1, 1, 1]} : vector<12x8x72xf32> to vector<9x8x72xf32>
    %55 = vector.shape_cast %54 : vector<9x8x72xf32> to vector<72x72xf32>
    %c1_30 = arith.constant 1 : index
    %c0_31 = arith.constant 0 : index
    %c0_32 = arith.constant 0 : index
    %56 = vector.load %arg6[%c1_30, %c0_31, %c0_32] : memref<4x72x144xf32, #tpu.memory_space<vmem>>, vector<1x72x144xf32>
    %57 = vector.shape_cast %56 : vector<1x72x144xf32> to vector<72x144xf32>
    %cst_33 = arith.constant dense<0.000000e+00> : vector<72x144xf32>
    %58 = tpu.matmul %55, %57, %cst_33 {dimension_numbers = #tpu.dot_dimension_numbers<[1], [0], [0], [1], [0, 0, 1, 1], [], []>} : vector<72x72xf32>, vector<72x144xf32>, vector<72x144xf32> -> vector<72x144xf32>
    %59 = arith.addf %53, %58 : vector<72x144xf32>
    %60 = vector.extract_strided_slice %46 {offsets = [2, 0, 0], sizes = [9, 8, 72], strides = [1, 1, 1]} : vector<12x8x72xf32> to vector<9x8x72xf32>
    %61 = vector.shape_cast %60 : vector<9x8x72xf32> to vector<72x72xf32>
    %c2_34 = arith.constant 2 : index
    %c0_35 = arith.constant 0 : index
    %c0_36 = arith.constant 0 : index
    %62 = vector.load %arg6[%c2_34, %c0_35, %c0_36] : memref<4x72x144xf32, #tpu.memory_space<vmem>>, vector<1x72x144xf32>
    %63 = vector.shape_cast %62 : vector<1x72x144xf32> to vector<72x144xf32>
    %cst_37 = arith.constant dense<0.000000e+00> : vector<72x144xf32>
    %64 = tpu.matmul %61, %63, %cst_37 {dimension_numbers = #tpu.dot_dimension_numbers<[1], [0], [0], [1], [0, 0, 1, 1], [], []>} : vector<72x72xf32>, vector<72x144xf32>, vector<72x144xf32> -> vector<72x144xf32>
    %65 = arith.addf %59, %64 : vector<72x144xf32>
    %66 = vector.extract_strided_slice %46 {offsets = [3, 0, 0], sizes = [9, 8, 72], strides = [1, 1, 1]} : vector<12x8x72xf32> to vector<9x8x72xf32>
    %67 = vector.shape_cast %66 : vector<9x8x72xf32> to vector<72x72xf32>
    %c3_38 = arith.constant 3 : index
    %c0_39 = arith.constant 0 : index
    %c0_40 = arith.constant 0 : index
    %68 = vector.load %arg6[%c3_38, %c0_39, %c0_40] : memref<4x72x144xf32, #tpu.memory_space<vmem>>, vector<1x72x144xf32>
    %69 = vector.shape_cast %68 : vector<1x72x144xf32> to vector<72x144xf32>
    %cst_41 = arith.constant dense<0.000000e+00> : vector<72x144xf32>
    %70 = tpu.matmul %67, %69, %cst_41 {dimension_numbers = #tpu.dot_dimension_numbers<[1], [0], [0], [1], [0, 0, 1, 1], [], []>} : vector<72x72xf32>, vector<72x144xf32>, vector<72x144xf32> -> vector<72x144xf32>
    %71 = arith.addf %65, %70 : vector<72x144xf32>
    %c0_42 = arith.constant 0 : index
    %c0_43 = arith.constant 0 : index
    %72 = vector.load %arg7[%c0_42, %c0_43] : memref<1x144xf32, #tpu.memory_space<vmem>>, vector<1x144xf32>
    %73 = vector.broadcast %72 : vector<1x144xf32> to vector<72x144xf32>
    %74 = arith.addf %71, %73 : vector<72x144xf32>
    %cst_44 = arith.constant 0.000000e+00 : f32
    %75 = vector.broadcast %cst_44 : f32 to vector<72x144xf32>
    %76 = arith.maximumf %74, %75 : vector<72x144xf32>
    %77 = vector.shape_cast %76 : vector<72x144xf32> to vector<9x8x144xf32>
    %78 = vector.extract_strided_slice %77 {offsets = [0, 0, 0], sizes = [8, 8, 144], strides = [1, 1, 1]} : vector<9x8x144xf32> to vector<8x8x144xf32>
    %79 = vector.shape_cast %78 : vector<8x8x144xf32> to vector<4x2x8x144xf32>
    %80 = vector.extract_strided_slice %79 {offsets = [0, 0, 0, 0], sizes = [4, 1, 8, 144], strides = [1, 1, 1, 1]} : vector<4x2x8x144xf32> to vector<4x1x8x144xf32>
    %81 = vector.shape_cast %80 : vector<4x1x8x144xf32> to vector<4x8x144xf32>
    %82 = vector.extract_strided_slice %79 {offsets = [0, 1, 0, 0], sizes = [4, 1, 8, 144], strides = [1, 1, 1, 1]} : vector<4x2x8x144xf32> to vector<4x1x8x144xf32>
    %83 = vector.shape_cast %82 : vector<4x1x8x144xf32> to vector<4x8x144xf32>
    %84 = arith.maximumf %81, %83 : vector<4x8x144xf32>
    %85 = vector.shape_cast %84 : vector<4x8x144xf32> to vector<32x144xf32>
    %c0_45 = arith.constant 0 : index
    %c0_46 = arith.constant 0 : index
    %86 = vector.load %arg8[%c0_45, %c0_46] : memref<144x64xf32, #tpu.memory_space<vmem>>, vector<144x64xf32>
    %cst_47 = arith.constant dense<0.000000e+00> : vector<32x64xf32>
    %87 = tpu.matmul %85, %86, %cst_47 {dimension_numbers = #tpu.dot_dimension_numbers<[1], [0], [0], [1], [0, 0, 1, 1], [], []>} : vector<32x144xf32>, vector<144x64xf32>, vector<32x64xf32> -> vector<32x64xf32>
    %c0_48 = arith.constant 0 : index
    %c0_49 = arith.constant 0 : index
    %88 = vector.load %arg9[%c0_48, %c0_49] : memref<144x64xf32, #tpu.memory_space<vmem>>, vector<144x64xf32>
    %cst_50 = arith.constant dense<0.000000e+00> : vector<32x64xf32>
    %89 = tpu.matmul %85, %88, %cst_50 {dimension_numbers = #tpu.dot_dimension_numbers<[1], [0], [0], [1], [0, 0, 1, 1], [], []>} : vector<32x144xf32>, vector<144x64xf32>, vector<32x64xf32> -> vector<32x64xf32>
    %90 = arith.maximumf %87, %89 : vector<32x64xf32>
    %91 = vector.shape_cast %90 : vector<32x64xf32> to vector<4x8x64xf32>
    %cst_51 = arith.constant 0.000000e+00 : f32
    %92 = vector.broadcast %cst_51 : f32 to vector<8x128xf32>
    %93 = vector.extract_strided_slice %91 {offsets = [0, 0, 0], sizes = [1, 8, 64], strides = [1, 1, 1]} : vector<4x8x64xf32> to vector<1x8x64xf32>
    %94 = vector.shape_cast %93 : vector<1x8x64xf32> to vector<8x64xf32>
    %c0_52 = arith.constant 0 : index
    %c0_53 = arith.constant 0 : index
    %c0_54 = arith.constant 0 : index
    %95 = vector.load %arg10[%c0_52, %c0_53, %c0_54] : memref<4x64x128xf32, #tpu.memory_space<vmem>>, vector<1x64x128xf32>
    %96 = vector.shape_cast %95 : vector<1x64x128xf32> to vector<64x128xf32>
    %cst_55 = arith.constant dense<0.000000e+00> : vector<8x128xf32>
    %97 = tpu.matmul %94, %96, %cst_55 {dimension_numbers = #tpu.dot_dimension_numbers<[1], [0], [0], [1], [0, 0, 1, 1], [], []>} : vector<8x64xf32>, vector<64x128xf32>, vector<8x128xf32> -> vector<8x128xf32>
    %98 = arith.addf %92, %97 : vector<8x128xf32>
    %99 = vector.extract_strided_slice %91 {offsets = [1, 0, 0], sizes = [1, 8, 64], strides = [1, 1, 1]} : vector<4x8x64xf32> to vector<1x8x64xf32>
    %100 = vector.shape_cast %99 : vector<1x8x64xf32> to vector<8x64xf32>
    %c1_56 = arith.constant 1 : index
    %c0_57 = arith.constant 0 : index
    %c0_58 = arith.constant 0 : index
    %101 = vector.load %arg10[%c1_56, %c0_57, %c0_58] : memref<4x64x128xf32, #tpu.memory_space<vmem>>, vector<1x64x128xf32>
    %102 = vector.shape_cast %101 : vector<1x64x128xf32> to vector<64x128xf32>
    %cst_59 = arith.constant dense<0.000000e+00> : vector<8x128xf32>
    %103 = tpu.matmul %100, %102, %cst_59 {dimension_numbers = #tpu.dot_dimension_numbers<[1], [0], [0], [1], [0, 0, 1, 1], [], []>} : vector<8x64xf32>, vector<64x128xf32>, vector<8x128xf32> -> vector<8x128xf32>
    %104 = arith.addf %98, %103 : vector<8x128xf32>
    %105 = vector.extract_strided_slice %91 {offsets = [2, 0, 0], sizes = [1, 8, 64], strides = [1, 1, 1]} : vector<4x8x64xf32> to vector<1x8x64xf32>
    %106 = vector.shape_cast %105 : vector<1x8x64xf32> to vector<8x64xf32>
    %c2_60 = arith.constant 2 : index
    %c0_61 = arith.constant 0 : index
    %c0_62 = arith.constant 0 : index
    %107 = vector.load %arg10[%c2_60, %c0_61, %c0_62] : memref<4x64x128xf32, #tpu.memory_space<vmem>>, vector<1x64x128xf32>
    %108 = vector.shape_cast %107 : vector<1x64x128xf32> to vector<64x128xf32>
    %cst_63 = arith.constant dense<0.000000e+00> : vector<8x128xf32>
    %109 = tpu.matmul %106, %108, %cst_63 {dimension_numbers = #tpu.dot_dimension_numbers<[1], [0], [0], [1], [0, 0, 1, 1], [], []>} : vector<8x64xf32>, vector<64x128xf32>, vector<8x128xf32> -> vector<8x128xf32>
    %110 = arith.addf %104, %109 : vector<8x128xf32>
    %111 = vector.extract_strided_slice %91 {offsets = [3, 0, 0], sizes = [1, 8, 64], strides = [1, 1, 1]} : vector<4x8x64xf32> to vector<1x8x64xf32>
    %112 = vector.shape_cast %111 : vector<1x8x64xf32> to vector<8x64xf32>
    %c3_64 = arith.constant 3 : index
    %c0_65 = arith.constant 0 : index
    %c0_66 = arith.constant 0 : index
    %113 = vector.load %arg10[%c3_64, %c0_65, %c0_66] : memref<4x64x128xf32, #tpu.memory_space<vmem>>, vector<1x64x128xf32>
    %114 = vector.shape_cast %113 : vector<1x64x128xf32> to vector<64x128xf32>
    %cst_67 = arith.constant dense<0.000000e+00> : vector<8x128xf32>
    %115 = tpu.matmul %112, %114, %cst_67 {dimension_numbers = #tpu.dot_dimension_numbers<[1], [0], [0], [1], [0, 0, 1, 1], [], []>} : vector<8x64xf32>, vector<64x128xf32>, vector<8x128xf32> -> vector<8x128xf32>
    %116 = arith.addf %110, %115 : vector<8x128xf32>
    %c0_68 = arith.constant 0 : index
    %c0_69 = arith.constant 0 : index
    %117 = vector.load %arg11[%c0_68, %c0_69] : memref<1x128xf32, #tpu.memory_space<vmem>>, vector<1x128xf32>
    %118 = vector.broadcast %117 : vector<1x128xf32> to vector<8x128xf32>
    %119 = arith.addf %116, %118 : vector<8x128xf32>
    %cst_70 = arith.constant 0.000000e+00 : f32
    %120 = vector.broadcast %cst_70 : f32 to vector<8x128xf32>
    %121 = arith.maximumf %119, %120 : vector<8x128xf32>
    %c0_71 = arith.constant 0 : index
    %c0_72 = arith.constant 0 : index
    %122 = vector.load %arg12[%c0_71, %c0_72] : memref<128x128xf32, #tpu.memory_space<vmem>>, vector<128x128xf32>
    %cst_73 = arith.constant dense<0.000000e+00> : vector<8x128xf32>
    %123 = tpu.matmul %121, %122, %cst_73 {dimension_numbers = #tpu.dot_dimension_numbers<[1], [0], [0], [1], [0, 0, 1, 1], [], []>} : vector<8x128xf32>, vector<128x128xf32>, vector<8x128xf32> -> vector<8x128xf32>
    %c0_74 = arith.constant 0 : index
    %c0_75 = arith.constant 0 : index
    %124 = vector.load %arg13[%c0_74, %c0_75] : memref<1x128xf32, #tpu.memory_space<vmem>>, vector<1x128xf32>
    %125 = vector.broadcast %124 : vector<1x128xf32> to vector<8x128xf32>
    %126 = arith.addf %123, %125 : vector<8x128xf32>
    %cst_76 = arith.constant 0.000000e+00 : f32
    %127 = vector.broadcast %cst_76 : f32 to vector<8x128xf32>
    %128 = arith.maximumf %126, %127 : vector<8x128xf32>
    %c0_77 = arith.constant 0 : index
    %c0_78 = arith.constant 0 : index
    %129 = vector.load %arg14[%c0_77, %c0_78] : memref<128x128xf32, #tpu.memory_space<vmem>>, vector<128x128xf32>
    %cst_79 = arith.constant dense<0.000000e+00> : vector<8x128xf32>
    %130 = tpu.matmul %128, %129, %cst_79 {dimension_numbers = #tpu.dot_dimension_numbers<[1], [0], [0], [1], [0, 0, 1, 1], [], []>} : vector<8x128xf32>, vector<128x128xf32>, vector<8x128xf32> -> vector<8x128xf32>
    %c0_80 = arith.constant 0 : index
    %c0_81 = arith.constant 0 : index
    %131 = vector.load %arg15[%c0_80, %c0_81] : memref<1x128xf32, #tpu.memory_space<vmem>>, vector<1x128xf32>
    %132 = vector.broadcast %131 : vector<1x128xf32> to vector<8x128xf32>
    %133 = arith.addf %130, %132 : vector<8x128xf32>
    %c0_82 = arith.constant 0 : index
    %c0_83 = arith.constant 0 : index
    %134 = vector.load %arg16[%c0_82, %c0_83] : memref<8x128xf32, #tpu.memory_space<vmem>>, vector<8x128xf32>
    tpu.vector_store %arg16[%c0_82, %c0_83], %133 {strides = array<i32>} : memref<8x128xf32, #tpu.memory_space<vmem>>, vector<8x128xf32>,
    return
  }
  func.func @transform_0(%arg0: i32) -> (i32, i32, i32, i32) {
    %c0_i32 = arith.constant 0 : i32
    %c0_i32_0 = arith.constant 0 : i32
    %c0_i32_1 = arith.constant 0 : i32
    %c0_i32_2 = arith.constant 0 : i32
    return %arg0, %c0_i32, %c0_i32_0, %c0_i32_1 : i32, i32, i32, i32
  }
  func.func @transform_1(%arg0: i32) -> (i32, i32, i32) {
    %c0_i32 = arith.constant 0 : i32
    %c0_i32_0 = arith.constant 0 : i32
    %c0_i32_1 = arith.constant 0 : i32
    %c0_i32_2 = arith.constant 0 : i32
    return %c0_i32, %c0_i32_0, %c0_i32_1 : i32, i32, i32
  }
  func.func @transform_2(%arg0: i32) -> (i32, i32) {
    %c0_i32 = arith.constant 0 : i32
    %c0_i32_0 = arith.constant 0 : i32
    %c0_i32_1 = arith.constant 0 : i32
    return %c0_i32, %c0_i32_0 : i32, i32
  }
  func.func @transform_3(%arg0: i32) -> (i32, i32) {
    %c0_i32 = arith.constant 0 : i32
    %c0_i32_0 = arith.constant 0 : i32
    %c0_i32_1 = arith.constant 0 : i32
    return %c0_i32, %c0_i32_0 : i32, i32
  }
  func.func @transform_4(%arg0: i32) -> (i32, i32) {
    %c0_i32 = arith.constant 0 : i32
    %c0_i32_0 = arith.constant 0 : i32
    %c0_i32_1 = arith.constant 0 : i32
    return %c0_i32, %c0_i32_0 : i32, i32
  }
  func.func @transform_5(%arg0: i32) -> (i32, i32, i32) {
    %c0_i32 = arith.constant 0 : i32
    %c0_i32_0 = arith.constant 0 : i32
    %c0_i32_1 = arith.constant 0 : i32
    %c0_i32_2 = arith.constant 0 : i32
    return %c0_i32, %c0_i32_0, %c0_i32_1 : i32, i32, i32
  }
  func.func @transform_6(%arg0: i32) -> (i32, i32) {
    %c0_i32 = arith.constant 0 : i32
    %c0_i32_0 = arith.constant 0 : i32
    %c0_i32_1 = arith.constant 0 : i32
    return %c0_i32, %c0_i32_0 : i32, i32
  }
  func.func @transform_7(%arg0: i32) -> (i32, i32) {
    %c0_i32 = arith.constant 0 : i32
    %c0_i32_0 = arith.constant 0 : i32
    %c0_i32_1 = arith.constant 0 : i32
    return %c0_i32, %c0_i32_0 : i32, i32
  }
  func.func @transform_8(%arg0: i32) -> (i32, i32) {
    %c0_i32 = arith.constant 0 : i32
    %c0_i32_0 = arith.constant 0 : i32
    %c0_i32_1 = arith.constant 0 : i32
    return %c0_i32, %c0_i32_0 : i32, i32
  }
  func.func @transform_9(%arg0: i32) -> (i32, i32, i32) {
    %c0_i32 = arith.constant 0 : i32
    %c0_i32_0 = arith.constant 0 : i32
    %c0_i32_1 = arith.constant 0 : i32
    %c0_i32_2 = arith.constant 0 : i32
    return %c0_i32, %c0_i32_0, %c0_i32_1 : i32, i32, i32
  }
  func.func @transform_10(%arg0: i32) -> (i32, i32) {
    %c0_i32 = arith.constant 0 : i32
    %c0_i32_0 = arith.constant 0 : i32
    %c0_i32_1 = arith.constant 0 : i32
    return %c0_i32, %c0_i32_0 : i32, i32
  }
  func.func @transform_11(%arg0: i32) -> (i32, i32) {
    %c0_i32 = arith.constant 0 : i32
    %c0_i32_0 = arith.constant 0 : i32
    %c0_i32_1 = arith.constant 0 : i32
    return %c0_i32, %c0_i32_0 : i32, i32
  }
  func.func @transform_12(%arg0: i32) -> (i32, i32) {
    %c0_i32 = arith.constant 0 : i32
    %c0_i32_0 = arith.constant 0 : i32
    %c0_i32_1 = arith.constant 0 : i32
    return %c0_i32, %c0_i32_0 : i32, i32
  }
  func.func @transform_13(%arg0: i32) -> (i32, i32) {
    %c0_i32 = arith.constant 0 : i32
    %c0_i32_0 = arith.constant 0 : i32
    %c0_i32_1 = arith.constant 0 : i32
    return %c0_i32, %c0_i32_0 : i32, i32
  }
  func.func @transform_14(%arg0: i32) -> (i32, i32) {
    %c0_i32 = arith.constant 0 : i32
    %c0_i32_0 = arith.constant 0 : i32
    %c0_i32_1 = arith.constant 0 : i32
    return %c0_i32, %c0_i32_0 : i32, i32
  }
  func.func @transform_15(%arg0: i32) -> (i32, i32) {
    %c0_i32 = arith.constant 0 : i32
    %c0_i32_0 = arith.constant 0 : i32
    return %arg0, %c0_i32 : i32, i32
  }
}

</mosaic_0001>

<llo_original>
// kernel: lenet5_forward.1
$region0: #{lenet5_forward.1}
  #allocation0 [shape = 'u32[]', space=smem, size = 0x4, offset = 0x4, fixed_abs, tag = 'smem constant byte address 0x4 - core index']
  #allocation1 [shape = 'u32[144,128]{1,0:T(1,128)}', space=vmem, size = 0x12000, scoped, tag = 'internal scratch']
  %s0 = inlined_call_operand.vmem [shape: f32[2,28,8,28], index: 0, kind: input, shape index: {}]
  %s1 = inlined_call_operand.vmem [shape: f32[4,28,150], index: 1, kind: input, shape index: {}]
  %s2 = inlined_call_operand.vmem [shape: f32[1,150], index: 2, kind: input, shape index: {}]
  %s3 = inlined_call_operand.vmem [shape: f32[150,72], index: 3, kind: input, shape index: {}]
  %s4 = inlined_call_operand.vmem [shape: f32[150,72], index: 4, kind: input, shape index: {}]
  %s5 = inlined_call_operand.vmem [shape: f32[4,72,144], index: 5, kind: input, shape index: {}]
  %s6 = inlined_call_operand.vmem [shape: f32[1,144], index: 6, kind: input, shape index: {}]
  %s7 = inlined_call_operand.vmem [shape: f32[144,64], index: 7, kind: input, shape index: {}]
  %s8 = inlined_call_operand.vmem [shape: f32[144,64], index: 8, kind: input, shape index: {}]
  %s9 = inlined_call_operand.vmem [shape: f32[4,64,128], index: 9, kind: input, shape index: {}]
  %s10 = inlined_call_operand.vmem [shape: f32[1,128], index: 10, kind: input, shape index: {}]
  %s11 = inlined_call_operand.vmem [shape: f32[128,128], index: 11, kind: input, shape index: {}]
  %s12 = inlined_call_operand.vmem [shape: f32[1,128], index: 12, kind: input, shape index: {}]
  %s13 = inlined_call_operand.vmem [shape: f32[128,128], index: 13, kind: input, shape index: {}]
  %s14 = inlined_call_operand.vmem [shape: f32[1,128], index: 14, kind: input, shape index: {}]
  %s15 = inlined_call_operand.hbm [shape: f32[16,128], index: 15, kind: output, shape index: {}]
  %s16 = sld [smem:[#allocation0]]
  $region93: #{lenet5_forward.1} parent=0
    _
  %s18 = ssub.s32 1, %s16
  %s19 = scalar_select 0, %s18, %s16
  $region1: #{lenet5_forward.1} parent=0
    #allocation2 [shape = 'u8[8192]{0}', space=vmem, size = 0x2000, scoped, tag = 'output window, operand 0']
    #allocation3 [shape = 's32[2]{0}', space=sflag, size = 0x8, scoped, tag = 'scoped memory for lenet5_forward.1']
    %20 = vsyncpa [#allocation3], 0
    %s21 = scalar_lea.sflag [#allocation3], 1
    %22 = vsyncpa %s21, 0
    loop: start=0, step=1, limit=4
    $region2: #{lenet5_forward.1} parent=1 // loop_pre_header
      _
    $region3: #{lenet5_forward.1} parent=1 // loop_header
      %s24 = sphi 0, %s28
      %p25 = scmp.ge.s32.totalorder %s24, 4
      %s34 = sphi 0, %s36
      %s37 = sphi 0, %s34
      %s38 = sphi 0, %s37
      %s54 = sphi 0, %s38
      %s58 = sphi 0, %s58
      %s60 = sphi 0, %s58
      %s61 = sphi 0, %s60
      %s75 = sphi 0, %s61
      %s79 = sphi 0, %s79
      %s81 = sphi 0, %s79
      %s82 = sphi 0, %s81
      %s96 = sphi 0, %s82
      %s100 = sphi 0, %s100
      %s102 = sphi 0, %s100
      %s103 = sphi 0, %s102
      %s117 = sphi 0, %s103
      %s121 = sphi 0, %s121
      %s123 = sphi 0, %s121
      %s124 = sphi 0, %s123
      %s138 = sphi 0, %s124
      %s142 = sphi 0, %s142
      %s144 = sphi 0, %s142
      %s145 = sphi 0, %s144
      %s159 = sphi 0, %s145
      %s163 = sphi 0, %s163
      %s165 = sphi 0, %s163
      %s166 = sphi 0, %s165
      %s180 = sphi 0, %s166
      %s184 = sphi 0, %s184
      %s186 = sphi 0, %s184
      %s187 = sphi 0, %s186
      %s201 = sphi 0, %s187
      %s205 = sphi 0, %s205
      %s207 = sphi 0, %s205
      %s208 = sphi 0, %s207
      %s222 = sphi 0, %s208
      %s226 = sphi 0, %s226
      %s228 = sphi 0, %s226
      %s229 = sphi 0, %s228
      %s243 = sphi 0, %s229
      %s247 = sphi 0, %s247
      %s249 = sphi 0, %s247
      %s250 = sphi 0, %s249
      %s264 = sphi 0, %s250
      %s268 = sphi 0, %s268
      %s270 = sphi 0, %s268
      %s271 = sphi 0, %s270
      %s285 = sphi 0, %s271
      %s289 = sphi 0, %s289
      %s291 = sphi 0, %s289
      %s292 = sphi 0, %s291
      %s306 = sphi 0, %s292
      %s310 = sphi 0, %s310
      %s312 = sphi 0, %s310
      %s313 = sphi 0, %s312
      %s327 = sphi 0, %s313
      %s331 = sphi 0, %s331
      %s333 = sphi 0, %s331
      %s334 = sphi 0, %s333
      %s348 = sphi 0, %s334
      %s354 = sphi 0, %s356
      %s357 = sphi 0, %s354
      %s358 = sphi 0, %s357
      %s374 = sphi 0, %s358
    $region4: #{lenet5_forward.1} parent=1 // loop_header_branch
      %27 = sbr.rel (%p25) target = $region8
    $region5: #{lenet5_forward.1} parent=1 // loop_body
      %s29 = ssub.s32 %s24, 1
      %s30 = ssub.s32 %s24, 2
      %s31 = sadd.s32 %s24, 1
      %s32 = ssub.s32 %s24, %s31
      %p33 = scmp.eq.s32.totalorder %s32, 0
      %s35 = sadd.s32 %s34, 1
      %s36 = scalar_select %p33, %s34, %s35
      %p39 = pneg %p33
      %p40 = scmp.eq.s32.totalorder %s24, 1
      %p41 = por %p39, %p40
      %p42 = scmp.ne.s32.totalorder %s34, %s37
      %p43 = scmp.eq.s32.totalorder %s24, 0
      %p44 = por %p42, %p43
      %p45 = scmp.ne.s32.totalorder %s34, %s37
      %p46 = scmp.eq.s32.totalorder %s29, 1
      %p47 = por %p45, %p46
      %p48 = scmp.ne.s32.totalorder %s37, %s38
      %p49 = scmp.eq.s32.totalorder %s29, 0
      %p50 = por %p48, %p49
      %p51 = scmp.ne.s32.totalorder %s37, %s38
      %p52 = scmp.eq.s32.totalorder %s30, 1
      %p53 = por %p51, %p52
      %p55 = scmp.ne.s32.totalorder %s38, %s54
      %p56 = scmp.eq.s32.totalorder %s30, 0
      %p57 = por %p55, %p56
      %s59 = sadd.s32 %s58, 1
      %p62 = scmp.eq.s32.totalorder %s24, 1
      %p63 = scmp.ne.s32.totalorder %s58, %s60
      %p64 = scmp.eq.s32.totalorder %s24, 0
      %p65 = por %p63, %p64
      %p66 = scmp.ne.s32.totalorder %s58, %s60
      %p67 = scmp.eq.s32.totalorder %s29, 1
      %p68 = por %p66, %p67
      %p69 = scmp.ne.s32.totalorder %s60, %s61
      %p70 = scmp.eq.s32.totalorder %s29, 0
      %p71 = por %p69, %p70
      %p72 = scmp.ne.s32.totalorder %s60, %s61
      %p73 = scmp.eq.s32.totalorder %s30, 1
      %p74 = por %p72, %p73
      %p76 = scmp.ne.s32.totalorder %s61, %s75
      %p77 = scmp.eq.s32.totalorder %s30, 0
      %p78 = por %p76, %p77
      %s80 = sadd.s32 %s79, 1
      %p83 = scmp.eq.s32.totalorder %s24, 1
      %p84 = scmp.ne.s32.totalorder %s79, %s81
      %p85 = scmp.eq.s32.totalorder %s24, 0
      %p86 = por %p84, %p85
      %p87 = scmp.ne.s32.totalorder %s79, %s81
      %p88 = scmp.eq.s32.totalorder %s29, 1
      %p89 = por %p87, %p88
      %p90 = scmp.ne.s32.totalorder %s81, %s82
      %p91 = scmp.eq.s32.totalorder %s29, 0
      %p92 = por %p90, %p91
      %p93 = scmp.ne.s32.totalorder %s81, %s82
      %p94 = scmp.eq.s32.totalorder %s30, 1
      %p95 = por %p93, %p94
      %p97 = scmp.ne.s32.totalorder %s82, %s96
      %p98 = scmp.eq.s32.totalorder %s30, 0
      %p99 = por %p97, %p98
      %s101 = sadd.s32 %s100, 1
      %p104 = scmp.eq.s32.totalorder %s24, 1
      %p105 = scmp.ne.s32.totalorder %s100, %s102
      %p106 = scmp.eq.s32.totalorder %s24, 0
      %p107 = por %p105, %p106
      %p108 = scmp.ne.s32.totalorder %s100, %s102
      %p109 = scmp.eq.s32.totalorder %s29, 1
      %p110 = por %p108, %p109
      %p111 = scmp.ne.s32.totalorder %s102, %s103
      %p112 = scmp.eq.s32.totalorder %s29, 0
      %p113 = por %p111, %p112
      %p114 = scmp.ne.s32.totalorder %s102, %s103
      %p115 = scmp.eq.s32.totalorder %s30, 1
      %p116 = por %p114, %p115
      %p118 = scmp.ne.s32.totalorder %s103, %s117
      %p119 = scmp.eq.s32.totalorder %s30, 0
      %p120 = por %p118, %p119
      %s122 = sadd.s32 %s121, 1
      %p125 = scmp.eq.s32.totalorder %s24, 1
      %p126 = scmp.ne.s32.totalorder %s121, %s123
      %p127 = scmp.eq.s32.totalorder %s24, 0
      %p128 = por %p126, %p127
      %p129 = scmp.ne.s32.totalorder %s121, %s123
      %p130 = scmp.eq.s32.totalorder %s29, 1
      %p131 = por %p129, %p130
      %p132 = scmp.ne.s32.totalorder %s123, %s124
      %p133 = scmp.eq.s32.totalorder %s29, 0
      %p134 = por %p132, %p133
      %p135 = scmp.ne.s32.totalorder %s123, %s124
      %p136 = scmp.eq.s32.totalorder %s30, 1
      %p137 = por %p135, %p136
      %p139 = scmp.ne.s32.totalorder %s124, %s138
      %p140 = scmp.eq.s32.totalorder %s30, 0
      %p141 = por %p139, %p140
      %s143 = sadd.s32 %s142, 1
      %p146 = scmp.eq.s32.totalorder %s24, 1
      %p147 = scmp.ne.s32.totalorder %s142, %s144
      %p148 = scmp.eq.s32.totalorder %s24, 0
      %p149 = por %p147, %p148
      %p150 = scmp.ne.s32.totalorder %s142, %s144
      %p151 = scmp.eq.s32.totalorder %s29, 1
      %p152 = por %p150, %p151
      %p153 = scmp.ne.s32.totalorder %s144, %s145
      %p154 = scmp.eq.s32.totalorder %s29, 0
      %p155 = por %p153, %p154
      %p156 = scmp.ne.s32.totalorder %s144, %s145
      %p157 = scmp.eq.s32.totalorder %s30, 1
      %p158 = por %p156, %p157
      %p160 = scmp.ne.s32.totalorder %s145, %s159
      %p161 = scmp.eq.s32.totalorder %s30, 0
      %p162 = por %p160, %p161
      %s164 = sadd.s32 %s163, 1
      %p167 = scmp.eq.s32.totalorder %s24, 1
      %p168 = scmp.ne.s32.totalorder %s163, %s165
      %p169 = scmp.eq.s32.totalorder %s24, 0
      %p170 = por %p168, %p169
      %p171 = scmp.ne.s32.totalorder %s163, %s165
      %p172 = scmp.eq.s32.totalorder %s29, 1
      %p173 = por %p171, %p172
      %p174 = scmp.ne.s32.totalorder %s165, %s166
      %p175 = scmp.eq.s32.totalorder %s29, 0
      %p176 = por %p174, %p175
      %p177 = scmp.ne.s32.totalorder %s165, %s166
      %p178 = scmp.eq.s32.totalorder %s30, 1
      %p179 = por %p177, %p178
      %p181 = scmp.ne.s32.totalorder %s166, %s180
      %p182 = scmp.eq.s32.totalorder %s30, 0
      %p183 = por %p181, %p182
      %s185 = sadd.s32 %s184, 1
      %p188 = scmp.eq.s32.totalorder %s24, 1
      %p189 = scmp.ne.s32.totalorder %s184, %s186
      %p190 = scmp.eq.s32.totalorder %s24, 0
      %p191 = por %p189, %p190
      %p192 = scmp.ne.s32.totalorder %s184, %s186
      %p193 = scmp.eq.s32.totalorder %s29, 1
      %p194 = por %p192, %p193
      %p195 = scmp.ne.s32.totalorder %s186, %s187
      %p196 = scmp.eq.s32.totalorder %s29, 0
      %p197 = por %p195, %p196
      %p198 = scmp.ne.s32.totalorder %s186, %s187
      %p199 = scmp.eq.s32.totalorder %s30, 1
      %p200 = por %p198, %p199
      %p202 = scmp.ne.s32.totalorder %s187, %s201
      %p203 = scmp.eq.s32.totalorder %s30, 0
      %p204 = por %p202, %p203
      %s206 = sadd.s32 %s205, 1
      %p209 = scmp.eq.s32.totalorder %s24, 1
      %p210 = scmp.ne.s32.totalorder %s205, %s207
      %p211 = scmp.eq.s32.totalorder %s24, 0
      %p212 = por %p210, %p211
      %p213 = scmp.ne.s32.totalorder %s205, %s207
      %p214 = scmp.eq.s32.totalorder %s29, 1
      %p215 = por %p213, %p214
      %p216 = scmp.ne.s32.totalorder %s207, %s208
      %p217 = scmp.eq.s32.totalorder %s29, 0
      %p218 = por %p216, %p217
      %p219 = scmp.ne.s32.totalorder %s207, %s208
      %p220 = scmp.eq.s32.totalorder %s30, 1
      %p221 = por %p219, %p220
      %p223 = scmp.ne.s32.totalorder %s208, %s222
      %p224 = scmp.eq.s32.totalorder %s30, 0
      %p225 = por %p223, %p224
      %s227 = sadd.s32 %s226, 1
      %p230 = scmp.eq.s32.totalorder %s24, 1
      %p231 = scmp.ne.s32.totalorder %s226, %s228
      %p232 = scmp.eq.s32.totalorder %s24, 0
      %p233 = por %p231, %p232
      %p234 = scmp.ne.s32.totalorder %s226, %s228
      %p235 = scmp.eq.s32.totalorder %s29, 1
      %p236 = por %p234, %p235
      %p237 = scmp.ne.s32.totalorder %s228, %s229
      %p238 = scmp.eq.s32.totalorder %s29, 0
      %p239 = por %p237, %p238
      %p240 = scmp.ne.s32.totalorder %s228, %s229
      %p241 = scmp.eq.s32.totalorder %s30, 1
      %p242 = por %p240, %p241
      %p244 = scmp.ne.s32.totalorder %s229, %s243
      %p245 = scmp.eq.s32.totalorder %s30, 0
      %p246 = por %p244, %p245
      %s248 = sadd.s32 %s247, 1
      %p251 = scmp.eq.s32.totalorder %s24, 1
      %p252 = scmp.ne.s32.totalorder %s247, %s249
      %p253 = scmp.eq.s32.totalorder %s24, 0
      %p254 = por %p252, %p253
      %p255 = scmp.ne.s32.totalorder %s247, %s249
      %p256 = scmp.eq.s32.totalorder %s29, 1
      %p257 = por %p255, %p256
      %p258 = scmp.ne.s32.totalorder %s249, %s250
      %p259 = scmp.eq.s32.totalorder %s29, 0
      %p260 = por %p258, %p259
      %p261 = scmp.ne.s32.totalorder %s249, %s250
      %p262 = scmp.eq.s32.totalorder %s30, 1
      %p263 = por %p261, %p262
      %p265 = scmp.ne.s32.totalorder %s250, %s264
      %p266 = scmp.eq.s32.totalorder %s30, 0
      %p267 = por %p265, %p266
      %s269 = sadd.s32 %s268, 1
      %p272 = scmp.eq.s32.totalorder %s24, 1
      %p273 = scmp.ne.s32.totalorder %s268, %s270
      %p274 = scmp.eq.s32.totalorder %s24, 0
      %p275 = por %p273, %p274
      %p276 = scmp.ne.s32.totalorder %s268, %s270
      %p277 = scmp.eq.s32.totalorder %s29, 1
      %p278 = por %p276, %p277
      %p279 = scmp.ne.s32.totalorder %s270, %s271
      %p280 = scmp.eq.s32.totalorder %s29, 0
      %p281 = por %p279, %p280
      %p282 = scmp.ne.s32.totalorder %s270, %s271
      %p283 = scmp.eq.s32.totalorder %s30, 1
      %p284 = por %p282, %p283
      %p286 = scmp.ne.s32.totalorder %s271, %s285
      %p287 = scmp.eq.s32.totalorder %s30, 0
      %p288 = por %p286, %p287
      %s290 = sadd.s32 %s289, 1
      %p293 = scmp.eq.s32.totalorder %s24, 1
      %p294 = scmp.ne.s32.totalorder %s289, %s291
      %p295 = scmp.eq.s32.totalorder %s24, 0
      %p296 = por %p294, %p295
      %p297 = scmp.ne.s32.totalorder %s289, %s291
      %p298 = scmp.eq.s32.totalorder %s29, 1
      %p299 = por %p297, %p298
      %p300 = scmp.ne.s32.totalorder %s291, %s292
      %p301 = scmp.eq.s32.totalorder %s29, 0
      %p302 = por %p300, %p301
      %p303 = scmp.ne.s32.totalorder %s291, %s292
      %p304 = scmp.eq.s32.totalorder %s30, 1
      %p305 = por %p303, %p304
      %p307 = scmp.ne.s32.totalorder %s292, %s306
      %p308 = scmp.eq.s32.totalorder %s30, 0
      %p309 = por %p307, %p308
      %s311 = sadd.s32 %s310, 1
      %p314 = scmp.eq.s32.totalorder %s24, 1
      %p315 = scmp.ne.s32.totalorder %s310, %s312
      %p316 = scmp.eq.s32.totalorder %s24, 0
      %p317 = por %p315, %p316
      %p318 = scmp.ne.s32.totalorder %s310, %s312
      %p319 = scmp.eq.s32.totalorder %s29, 1
      %p320 = por %p318, %p319
      %p321 = scmp.ne.s32.totalorder %s312, %s313
      %p322 = scmp.eq.s32.totalorder %s29, 0
      %p323 = por %p321, %p322
      %p324 = scmp.ne.s32.totalorder %s312, %s313
      %p325 = scmp.eq.s32.totalorder %s30, 1
      %p326 = por %p324, %p325
      %p328 = scmp.ne.s32.totalorder %s313, %s327
      %p329 = scmp.eq.s32.totalorder %s30, 0
      %p330 = por %p328, %p329
      %s332 = sadd.s32 %s331, 1
      %p335 = scmp.eq.s32.totalorder %s24, 1
      %p336 = scmp.ne.s32.totalorder %s331, %s333
      %p337 = scmp.eq.s32.totalorder %s24, 0
      %p338 = por %p336, %p337
      %p339 = scmp.ne.s32.totalorder %s331, %s333
      %p340 = scmp.eq.s32.totalorder %s29, 1
      %p341 = por %p339, %p340
      %p342 = scmp.ne.s32.totalorder %s333, %s334
      %p343 = scmp.eq.s32.totalorder %s29, 0
      %p344 = por %p342, %p343
      %p345 = scmp.ne.s32.totalorder %s333, %s334
      %p346 = scmp.eq.s32.totalorder %s30, 1
      %p347 = por %p345, %p346
      %p349 = scmp.ne.s32.totalorder %s334, %s348
      %p350 = scmp.eq.s32.totalorder %s30, 0
      %p351 = por %p349, %p350
      %s352 = ssub.s32 %s24, %s31
      %p353 = scmp.eq.s32.totalorder %s352, 0
      %s355 = sadd.s32 %s354, 1
      %s356 = scalar_select %p353, %s354, %s355
      %p359 = pneg %p353
      %p360 = scmp.eq.s32.totalorder %s24, 1
      %p361 = por %p359, %p360
      %p362 = scmp.ne.s32.totalorder %s354, %s357
      %p363 = scmp.eq.s32.totalorder %s24, 0
      %p364 = por %p362, %p363
      %p365 = scmp.ne.s32.totalorder %s354, %s357
      %p366 = scmp.eq.s32.totalorder %s29, 1
      %p367 = por %p365, %p366
      %p368 = scmp.ne.s32.totalorder %s357, %s358
      %p369 = scmp.eq.s32.totalorder %s29, 0
      %p370 = por %p368, %p369
      %p371 = scmp.ne.s32.totalorder %s357, %s358
      %p372 = scmp.eq.s32.totalorder %s30, 1
      %p373 = por %p371, %p372
      %p375 = scmp.ne.s32.totalorder %s358, %s374
      %p376 = scmp.eq.s32.totalorder %s30, 0
      %p377 = por %p375, %p376
      %p378 = scmp.le.s32.totalorder 1, %s24
      %p379 = scmp.lt.s32.totalorder %s24, 3
      %p380 = pnand %p378, %p379
      %p381 = pneg %p380
      // Predicated region
      $region9: #{lenet5_forward.1} parent=5 // pred_check
        _
      $region10: #{lenet5_forward.1} parent=5 // pred_check_branch
        %383 = sbr.rel (%p380) target = $region12
      $region11: #{lenet5_forward.1} parent=5 // pred_region
        %s384 = ssub.s32 %s24, 1
        // Predicated region
        $region13: #{lenet5_forward.1} parent=11 // pred_check
          %p385 = pneg %p71
        $region14: #{lenet5_forward.1} parent=11 // pred_check_branch
          %387 = sbr.rel (%p385) target = $region16
        $region15: #{lenet5_forward.1} parent=11 // pred_region
          _
        $region16: #{lenet5_forward.1} parent=11 // pred_fallthru
          _
        // Predicated region
        $region17: #{lenet5_forward.1} parent=11 // pred_check
          %p388 = pneg %p92
        $region18: #{lenet5_forward.1} parent=11 // pred_check_branch
          %390 = sbr.rel (%p388) target = $region20
        $region19: #{lenet5_forward.1} parent=11 // pred_region
          _
        $region20: #{lenet5_forward.1} parent=11 // pred_fallthru
          _
        // Predicated region
        $region21: #{lenet5_forward.1} parent=11 // pred_check
          %p391 = pneg %p113
        $region22: #{lenet5_forward.1} parent=11 // pred_check_branch
          %393 = sbr.rel (%p391) target = $region24
        $region23: #{lenet5_forward.1} parent=11 // pred_region
          _
        $region24: #{lenet5_forward.1} parent=11 // pred_fallthru
          _
        // Predicated region
        $region25: #{lenet5_forward.1} parent=11 // pred_check
          %p394 = pneg %p134
        $region26: #{lenet5_forward.1} parent=11 // pred_check_branch
          %396 = sbr.rel (%p394) target = $region28
        $region27: #{lenet5_forward.1} parent=11 // pred_region
          _
        $region28: #{lenet5_forward.1} parent=11 // pred_fallthru
          _
        // Predicated region
        $region29: #{lenet5_forward.1} parent=11 // pred_check
          %p397 = pneg %p155
        $region30: #{lenet5_forward.1} parent=11 // pred_check_branch
          %399 = sbr.rel (%p397) target = $region32
        $region31: #{lenet5_forward.1} parent=11 // pred_region
          _
        $region32: #{lenet5_forward.1} parent=11 // pred_fallthru
          _
        // Predicated region
        $region33: #{lenet5_forward.1} parent=11 // pred_check
          %p400 = pneg %p176
        $region34: #{lenet5_forward.1} parent=11 // pred_check_branch
          %402 = sbr.rel (%p400) target = $region36
        $region35: #{lenet5_forward.1} parent=11 // pred_region
          _
        $region36: #{lenet5_forward.1} parent=11 // pred_fallthru
          _
        // Predicated region
        $region37: #{lenet5_forward.1} parent=11 // pred_check
          %p403 = pneg %p197
        $region38: #{lenet5_forward.1} parent=11 // pred_check_branch
          %405 = sbr.rel (%p403) target = $region40
        $region39: #{lenet5_forward.1} parent=11 // pred_region
          _
        $region40: #{lenet5_forward.1} parent=11 // pred_fallthru
          _
        // Predicated region
        $region41: #{lenet5_forward.1} parent=11 // pred_check
          %p406 = pneg %p218
        $region42: #{lenet5_forward.1} parent=11 // pred_check_branch
          %408 = sbr.rel (%p406) target = $region44
        $region43: #{lenet5_forward.1} parent=11 // pred_region
          _
        $region44: #{lenet5_forward.1} parent=11 // pred_fallthru
          _
        // Predicated region
        $region45: #{lenet5_forward.1} parent=11 // pred_check
          %p409 = pneg %p239
        $region46: #{lenet5_forward.1} parent=11 // pred_check_branch
          %411 = sbr.rel (%p409) target = $region48
        $region47: #{lenet5_forward.1} parent=11 // pred_region
          _
        $region48: #{lenet5_forward.1} parent=11 // pred_fallthru
          _
        // Predicated region
        $region49: #{lenet5_forward.1} parent=11 // pred_check
          %p412 = pneg %p260
        $region50: #{lenet5_forward.1} parent=11 // pred_check_branch
          %414 = sbr.rel (%p412) target = $region52
        $region51: #{lenet5_forward.1} parent=11 // pred_region
          _
        $region52: #{lenet5_forward.1} parent=11 // pred_fallthru
          _
        // Predicated region
        $region53: #{lenet5_forward.1} parent=11 // pred_check
          %p415 = pneg %p281
        $region54: #{lenet5_forward.1} parent=11 // pred_check_branch
          %417 = sbr.rel (%p415) target = $region56
        $region55: #{lenet5_forward.1} parent=11 // pred_region
          _
        $region56: #{lenet5_forward.1} parent=11 // pred_fallthru
          _
        // Predicated region
        $region57: #{lenet5_forward.1} parent=11 // pred_check
          %p418 = pneg %p302
        $region58: #{lenet5_forward.1} parent=11 // pred_check_branch
          %420 = sbr.rel (%p418) target = $region60
        $region59: #{lenet5_forward.1} parent=11 // pred_region
          _
        $region60: #{lenet5_forward.1} parent=11 // pred_fallthru
          _
        // Predicated region
        $region61: #{lenet5_forward.1} parent=11 // pred_check
          %p421 = pneg %p323
        $region62: #{lenet5_forward.1} parent=11 // pred_check_branch
          %423 = sbr.rel (%p421) target = $region64
        $region63: #{lenet5_forward.1} parent=11 // pred_region
          _
        $region64: #{lenet5_forward.1} parent=11 // pred_fallthru
          _
        // Predicated region
        $region65: #{lenet5_forward.1} parent=11 // pred_check
          %p424 = pneg %p344
        $region66: #{lenet5_forward.1} parent=11 // pred_check_branch
          %426 = sbr.rel (%p424) target = $region68
        $region67: #{lenet5_forward.1} parent=11 // pred_region
          _
        $region68: #{lenet5_forward.1} parent=11 // pred_fallthru
          _
      $region12: #{lenet5_forward.1} parent=5 // pred_fallthru
        _
      %p427 = scmp.lt.s32.totalorder %s24, 2
      // Predicated region
      $region69: #{lenet5_forward.1} parent=5 // pred_check
        %p428 = pneg %p427
      $region70: #{lenet5_forward.1} parent=5 // pred_check_branch
        %430 = sbr.rel (%p428) target = $region72
      $region71: #{lenet5_forward.1} parent=5 // pred_region
        // Predicated region
        $region73: #{lenet5_forward.1} parent=71 // pred_check
          %p431 = pneg %p44
        $region74: #{lenet5_forward.1} parent=71 // pred_check_branch
          %433 = sbr.rel (%p431) target = $region76
        $region75: #{lenet5_forward.1} parent=71 // pred_region
          %p434 = scmp.lt.s32.totalorder %s24, 1
          %s435 = scalar_select %p434, %s24, 1
          %s436 = smul.addr %s435, 28
          %s437 = smul.addr %s436, 8
          %s438 = scalar_lea.vmem %s0, %s437
        $region76: #{lenet5_forward.1} parent=71 // pred_fallthru
          _
      $region72: #{lenet5_forward.1} parent=5 // pred_fallthru
        _
      %p439 = scmp.le.s32.totalorder 1, %s24
      %p440 = scmp.lt.s32.totalorder %s24, 3
      %p441 = pnand %p439, %p440
      %p442 = pneg %p441
      // Predicated region
      $region77: #{lenet5_forward.1} parent=5 // pred_check
        _
      $region78: #{lenet5_forward.1} parent=5 // pred_check_branch
        %444 = sbr.rel (%p441) target = $region80
      $region79: #{lenet5_forward.1} parent=5 // pred_region
        %s445 = ssub.s32 %s24, 1
        %p446 = scmp.lt.s32.totalorder %s29, 1
        %s447 = scalar_select %p446, %s29, 1
        %s448 = smul.addr %s447, 28
        %s449 = smul.addr %s448, 8
        %s450 = scalar_lea.vmem %s0, %s449
        %p451 = pneg %p50
        %p452 = pneg %p47
        %p453 = pneg %p71
        %p454 = pneg %p68
        %p455 = pneg %p92
        %p456 = pneg %p89
        %p457 = pneg %p113
        %p458 = pneg %p110
        %p459 = pneg %p134
        %p460 = pneg %p131
        %p461 = pneg %p155
        %p462 = pneg %p152
        %p463 = pneg %p176
        %p464 = pneg %p173
        %p465 = pneg %p197
        %p466 = pneg %p194
        %p467 = pneg %p218
        %p468 = pneg %p215
        %p469 = pneg %p239
        %p470 = pneg %p236
        %p471 = pneg %p260
        %p472 = pneg %p257
        %p473 = pneg %p281
        %p474 = pneg %p278
        %p475 = pneg %p302
        %p476 = pneg %p299
        %p477 = pneg %p323
        %p478 = pneg %p320
        %p479 = pneg %p344
        %p480 = pneg %p341
        %p481 = pneg %p370
        %p482 = pneg %p367
        %s483 = sand.u32 %s357, 1
        %s484 = scalar_lea.sflag [#allocation3], %s483
        %s485 = sand.u32 %s357, 1
        %s486 = smul.addr %s485, 8
        %s487 = scalar_lea.vmem [#allocation2], %s486
        %p488 = scmp.lt.s32.totalorder %s29, 1
        %s489 = scalar_select %p488, %s29, 1
        %s490 = smul.addr %s489, 28
        %s491 = smul.addr %s490, 8
        %s492 = scalar_lea.vmem %s0, %s491
        %v493 = vld [vmem:[%s492] sm:$0xff]
        %v494 = vld [vmem:[%s492 + $0x8] sm:$0xff]
        %v495 = vld [vmem:[%s492 + $0x10] sm:$0xff]
        %v496 = vld [vmem:[%s492 + $0x18] sm:$0xff]
        %v497 = vld [vmem:[%s492 + $0x20] sm:$0xff]
        %v498 = vld [vmem:[%s492 + $0x28] sm:$0xff]
        %v499 = vld [vmem:[%s492 + $0x30] sm:$0xff]
        %v500 = vld [vmem:[%s492 + $0x38] sm:$0xff]
        %v501 = vld [vmem:[%s492 + $0x40] sm:$0xff]
        %v502 = vld [vmem:[%s492 + $0x48] sm:$0xff]
        %v503 = vld [vmem:[%s492 + $0x50] sm:$0xff]
        %v504 = vld [vmem:[%s492 + $0x58] sm:$0xff]
        %v505 = vld [vmem:[%s492 + $0x60] sm:$0xff]
        %v506 = vld [vmem:[%s492 + $0x68] sm:$0xff]
        %v507 = vld [vmem:[%s492 + $0x70] sm:$0xff]
        %v508 = vld [vmem:[%s492 + $0x78] sm:$0xff]
        %v509 = vld [vmem:[%s492 + $0x80] sm:$0xff]
        %v510 = vld [vmem:[%s492 + $0x88] sm:$0xff]
        %v511 = vld [vmem:[%s492 + $0x90] sm:$0xff]
        %v512 = vld [vmem:[%s492 + $0x98] sm:$0xff]
        %v513 = vld [vmem:[%s492 + $0xa0] sm:$0xff]
        %v514 = vld [vmem:[%s492 + $0xa8] sm:$0xff]
        %v515 = vld [vmem:[%s492 + $0xb0] sm:$0xff]
        %v516 = vld [vmem:[%s492 + $0xb8] sm:$0xff]
        %v517 = vld [vmem:[%s492 + $0xc0] sm:$0xff]
        %v518 = vld [vmem:[%s492 + $0xc8] sm:$0xff]
        %v519 = vld [vmem:[%s492 + $0xd0] sm:$0xff]
        %v520 = vld [vmem:[%s492 + $0xd8] sm:$0xff]
        %v521 = vld [vmem:[%s1] sm:$0xff]
        %v522 = vld [vmem:[%s1 + $0x8] sm:$0xff]
        %v523 = vld [vmem:[%s1 + $0x10] sm:$0xff]
        %v524 = vld [vmem:[%s1 + $0x18] sm:$0xff]
        %v525 = vld [vmem:[%s1 + $0x20] sm:$0xff]
        %v526 = vld [vmem:[%s1 + $0x28] sm:$0xff]
        %v527 = vld [vmem:[%s1 + $0x30] sm:$0xf]
        %v528 = vld [vmem:[%s1 + $0x38] sm:$0xf]
        %s529 = scalar_lea.vmem %s1, 64
        %v530 = vld [vmem:[%s529] sm:$0xff]
        %v531 = vld [vmem:[%s529 + $0x8] sm:$0xff]
        %v532 = vld [vmem:[%s529 + $0x10] sm:$0xff]
        %v533 = vld [vmem:[%s529 + $0x18] sm:$0xff]
        %v534 = vld [vmem:[%s529 + $0x20] sm:$0xff]
        %v535 = vld [vmem:[%s529 + $0x28] sm:$0xff]
        %v536 = vld [vmem:[%s529 + $0x30] sm:$0xf]
        %v537 = vld [vmem:[%s529 + $0x38] sm:$0xf]
        %vm538 = vcmask 228352
        %v540 = vsel %vm538, %v494, 0
        %v543 = vsel %vm538, %v495, 0
        %v546 = vsel %vm538, %v496, 0
        %v549 = vsel %vm538, %v497, 0
        %v552 = vsel %vm538, %v498, 0
        %v555 = vsel %vm538, %v499, 0
        %v558 = vsel %vm538, %v500, 0
        %v561 = vsel %vm538, %v501, 0
        %v564 = vsel %vm538, %v502, 0
        %v567 = vsel %vm538, %v503, 0
        %v570 = vsel %vm538, %v504, 0
        %v573 = vsel %vm538, %v505, 0
        %v576 = vsel %vm538, %v506, 0
        %v579 = vsel %vm538, %v507, 0
        %v582 = vsel %vm538, %v508, 0
        %v585 = vsel %vm538, %v509, 0
        %v588 = vsel %vm538, %v510, 0
        %v591 = vsel %vm538, %v511, 0
        %v594 = vsel %vm538, %v512, 0
        %v597 = vsel %vm538, %v513, 0
        %v600 = vsel %vm538, %v514, 0
        %v603 = vsel %vm538, %v515, 0
        %v606 = vsel %vm538, %v516, 0
        %v609 = vsel %vm538, %v517, 0
        %v612 = vsel %vm538, %v518, 0
        %vm614 = vcmask 1043456
        %v616 = vsel %vm614, %v536, 0
        %v619 = vsel %vm614, %v537, 0
        %621 = vmatprep.subr.mxu0 %v531
        %622 = vmatpush1.msra.mxu0 %v530
        %623 = vmatprep.subr.mxu0 %v533
        %624 = vmatpush1.msra.mxu0 %v532
        %625 = vmatprep.subr.mxu0 %v535
        %626 = vmatpush1.msra.mxu0 %v534
        %627 = vmatprep.subr.mxu0 %v619
        %628 = vmatpush1.msra.mxu0 %v616
        %629 = vmatprep.subr.mxu0 0.0
        %630 = vmatpush1.msra.mxu0 0.0
        %631 = vmatprep.subr.mxu0 0.0
        %632 = vmatpush1.msra.mxu0 0.0
        %633 = vmatprep.subr.mxu0 0.0
        %634 = vmatpush1.msra.mxu0 0.0
        %635 = vmatprep.subr.mxu0 0.0
        %636 = vmatpush1.msra.mxu0 0.0
        %637 = vmatprep.subr.mxu0 0.0
        %638 = vmatpush1.msra.mxu0 0.0
        %639 = vmatprep.subr.mxu0 0.0
        %640 = vmatpush1.msra.mxu0 0.0
        %641 = vmatprep.subr.mxu0 0.0
        %642 = vmatpush1.msra.mxu0 0.0
        %643 = vmatprep.subr.mxu0 0.0
        %644 = vmatpush1.msra.mxu0 0.0
        %645 = vmatprep.subr.mxu0 0.0
        %646 = vmatpush1.msra.mxu0 0.0
        %647 = vmatprep.subr.mxu0 0.0
        %648 = vmatpush1.msra.mxu0 0.0
        %649 = vmatprep.subr.mxu0 0.0
        %650 = vmatpush1.msra.mxu0 0.0
        %651 = vmatprep.subr.mxu0 0.0
        %652 = vmatpush1.msra.mxu0 0.0
        %653 = vmatprep.subr.mxu0 0.0
        %654 = vmatpush1.msra.mxu0 0.0
        %655 = vmatprep.subr.mxu0 0.0
        %656 = vmatpush1.msra.mxu0 0.0
        %657 = vmatprep.subr.mxu0 0.0
        %658 = vmatpush1.msra.mxu0 0.0
        %659 = vmatprep.subr.mxu0 0.0
        %660 = vmatpush1.msra.mxu0 0.0
        %661 = vmatprep.subr.mxu0 0.0
        %662 = vmatpush1.msra.mxu0 0.0
        %663 = vmatprep.subr.mxu0 0.0
        %664 = vmatpush1.msra.mxu0 0.0
        %665 = vmatprep.subr.mxu0 0.0
        %666 = vmatpush1.msra.mxu0 0.0
        %667 = vmatprep.subr.mxu0 0.0
        %668 = vmatpush1.msra.mxu0 0.0
        %669 = vmatprep.subr.mxu0 0.0
        %670 = vmatpush1.msra.mxu0 0.0
        %671 = vmatprep.subr.mxu0 0.0
        %672 = vmatpush1.msra.mxu0 0.0
        %673 = vmatprep.subr.mxu0 0.0
        %674 = vmatpush1.msra.mxu0 0.0
        %675 = vmatprep.subr.mxu0 0.0
        %676 = vmatpush1.msra.mxu0 0.0
        %677 = vmatprep.subr.mxu0 0.0
        %678 = vmatpush1.msra.mxu0 0.0
        %679 = vmatprep.subr.mxu0 0.0
        %680 = vmatpush1.msra.mxu0 0.0
        %681 = vmatprep.subr.mxu0 0.0
        %682 = vmatpush1.msra.mxu0 0.0
        %683 = vmatprep.subr.mxu0 0.0
        %684 = vmatpush1.msra.mxu0 0.0
        %685 = vmatprep.mubr.f32.mxu0 0.0
        %686 = vmatmul.mubr.f32.gmra.mrb[0].mxu0 %v540
        %v687 = vpop.f32.mrb[0].mxu0
        %v688 = vadd.f32 0.0, %v687
        %v689 = vpop.f32.mrb[0].mxu0
        %v690 = vadd.f32 0.0, %v689
        %691 = vmatprep.mubr.f32.mxu0 0.0
        %692 = vmatmul.mubr.f32.gmra.mrb[0].mxu0 %v543
        %v693 = vpop.f32.mrb[0].mxu0
        %v694 = vadd.f32 0.0, %v693
        %v695 = vpop.f32.mrb[0].mxu0
        %v696 = vadd.f32 0.0, %v695
        %697 = vmatprep.mubr.f32.mxu0 0.0
        %698 = vmatmul.mubr.f32.gmra.mrb[0].mxu0 %v546
        %v699 = vpop.f32.mrb[0].mxu0
        %v700 = vadd.f32 0.0, %v699
        %v701 = vpop.f32.mrb[0].mxu0
        %v702 = vadd.f32 0.0, %v701
        %703 = vmatprep.mubr.f32.mxu0 0.0
        %704 = vmatmul.mubr.f32.gmra.mrb[0].mxu0 %v549
        %v705 = vpop.f32.mrb[0].mxu0
        %v706 = vadd.f32 0.0, %v705
        %v707 = vpop.f32.mrb[0].mxu0
        %v708 = vadd.f32 0.0, %v707
        %709 = vmatprep.mubr.f32.mxu0 0.0
        %710 = vmatmul.mubr.f32.gmra.mrb[0].mxu0 %v552
        %v711 = vpop.f32.mrb[0].mxu0
        %v712 = vadd.f32 0.0, %v711
        %v713 = vpop.f32.mrb[0].mxu0
        %v714 = vadd.f32 0.0, %v713
        %715 = vmatprep.mubr.f32.mxu0 0.0
        %716 = vmatmul.mubr.f32.gmra.mrb[0].mxu0 %v555
        %v717 = vpop.f32.mrb[0].mxu0
        %v718 = vadd.f32 0.0, %v717
        %v719 = vpop.f32.mrb[0].mxu0
        %v720 = vadd.f32 0.0, %v719
        %721 = vmatprep.mubr.f32.mxu0 0.0
        %722 = vmatmul.mubr.f32.gmra.mrb[0].mxu0 %v558
        %v723 = vpop.f32.mrb[0].mxu0
        %v724 = vadd.f32 0.0, %v723
        %v725 = vpop.f32.mrb[0].mxu0
        %v726 = vadd.f32 0.0, %v725
        %727 = vmatprep.mubr.f32.mxu0 0.0
        %728 = vmatmul.mubr.f32.gmra.mrb[0].mxu0 %v561
        %v729 = vpop.f32.mrb[0].mxu0
        %v730 = vadd.f32 0.0, %v729
        %v731 = vpop.f32.mrb[0].mxu0
        %v732 = vadd.f32 0.0, %v731
        %733 = vmatprep.mubr.f32.mxu0 0.0
        %734 = vmatmul.mubr.f32.gmra.mrb[0].mxu0 %v564
        %v735 = vpop.f32.mrb[0].mxu0
        %v736 = vadd.f32 0.0, %v735
        %v737 = vpop.f32.mrb[0].mxu0
        %v738 = vadd.f32 0.0, %v737
        %739 = vmatprep.mubr.f32.mxu0 0.0
        %740 = vmatmul.mubr.f32.gmra.mrb[0].mxu0 %v567
        %v741 = vpop.f32.mrb[0].mxu0
        %v742 = vadd.f32 0.0, %v741
        %v743 = vpop.f32.mrb[0].mxu0
        %v744 = vadd.f32 0.0, %v743
        %745 = vmatprep.mubr.f32.mxu0 0.0
        %746 = vmatmul.mubr.f32.gmra.mrb[0].mxu0 %v570
        %v747 = vpop.f32.mrb[0].mxu0
        %v748 = vadd.f32 0.0, %v747
        %v749 = vpop.f32.mrb[0].mxu0
        %v750 = vadd.f32 0.0, %v749
        %751 = vmatprep.mubr.f32.mxu0 0.0
        %752 = vmatmul.mubr.f32.gmra.mrb[0].mxu0 %v573
        %v753 = vpop.f32.mrb[0].mxu0
        %v754 = vadd.f32 0.0, %v753
        %v755 = vpop.f32.mrb[0].mxu0
        %v756 = vadd.f32 0.0, %v755
        %757 = vmatprep.mubr.f32.mxu0 0.0
        %758 = vmatmul.mubr.f32.gmra.mrb[0].mxu0 %v576
        %v759 = vpop.f32.mrb[0].mxu0
        %v760 = vadd.f32 0.0, %v759
        %v761 = vpop.f32.mrb[0].mxu0
        %v762 = vadd.f32 0.0, %v761
        %763 = vmatprep.mubr.f32.mxu0 0.0
        %764 = vmatmul.mubr.f32.gmra.mrb[0].mxu0 %v579
        %v765 = vpop.f32.mrb[0].mxu0
        %v766 = vadd.f32 0.0, %v765
        %v767 = vpop.f32.mrb[0].mxu0
        %v768 = vadd.f32 0.0, %v767
        %769 = vmatprep.mubr.f32.mxu0 0.0
        %770 = vmatmul.mubr.f32.gmra.mrb[0].mxu0 %v582
        %v771 = vpop.f32.mrb[0].mxu0
        %v772 = vadd.f32 0.0, %v771
        %v773 = vpop.f32.mrb[0].mxu0
        %v774 = vadd.f32 0.0, %v773
        %775 = vmatprep.mubr.f32.mxu0 0.0
        %776 = vmatmul.mubr.f32.gmra.mrb[0].mxu0 %v585
        %v777 = vpop.f32.mrb[0].mxu0
        %v778 = vadd.f32 0.0, %v777
        %v779 = vpop.f32.mrb[0].mxu0
        %v780 = vadd.f32 0.0, %v779
        %781 = vmatprep.mubr.f32.mxu0 0.0
        %782 = vmatmul.mubr.f32.gmra.mrb[0].mxu0 %v588
        %v783 = vpop.f32.mrb[0].mxu0
        %v784 = vadd.f32 0.0, %v783
        %v785 = vpop.f32.mrb[0].mxu0
        %v786 = vadd.f32 0.0, %v785
        %787 = vmatprep.mubr.f32.mxu0 0.0
        %788 = vmatmul.mubr.f32.gmra.mrb[0].mxu0 %v591
        %v789 = vpop.f32.mrb[0].mxu0
        %v790 = vadd.f32 0.0, %v789
        %v791 = vpop.f32.mrb[0].mxu0
        %v792 = vadd.f32 0.0, %v791
        %793 = vmatprep.mubr.f32.mxu0 0.0
        %794 = vmatmul.mubr.f32.gmra.mrb[0].mxu0 %v594
        %v795 = vpop.f32.mrb[0].mxu0
        %v796 = vadd.f32 0.0, %v795
        %v797 = vpop.f32.mrb[0].mxu0
        %v798 = vadd.f32 0.0, %v797
        %799 = vmatprep.mubr.f32.mxu0 0.0
        %800 = vmatmul.mubr.f32.gmra.mrb[0].mxu0 %v597
        %v801 = vpop.f32.mrb[0].mxu0
        %v802 = vadd.f32 0.0, %v801
        %v803 = vpop.f32.mrb[0].mxu0
        %v804 = vadd.f32 0.0, %v803
        %805 = vmatprep.mubr.f32.mxu0 0.0
        %806 = vmatmul.mubr.f32.gmra.mrb[0].mxu0 %v600
        %v807 = vpop.f32.mrb[0].mxu0
        %v808 = vadd.f32 0.0, %v807
        %v809 = vpop.f32.mrb[0].mxu0
        %v810 = vadd.f32 0.0, %v809
        %811 = vmatprep.mubr.f32.mxu0 0.0
        %812 = vmatmul.mubr.f32.gmra.mrb[0].mxu0 %v603
        %v813 = vpop.f32.mrb[0].mxu0
        %v814 = vadd.f32 0.0, %v813
        %v815 = vpop.f32.mrb[0].mxu0
        %v816 = vadd.f32 0.0, %v815
        %817 = vmatprep.mubr.f32.mxu0 0.0
        %818 = vmatmul.mubr.f32.gmra.mrb[0].mxu0 %v606
        %v819 = vpop.f32.mrb[0].mxu0
        %v820 = vadd.f32 0.0, %v819
        %v821 = vpop.f32.mrb[0].mxu0
        %v822 = vadd.f32 0.0, %v821
        %823 = vmatprep.mubr.f32.mxu0 0.0
        %824 = vmatmul.mubr.f32.gmra.mrb[0].mxu0 %v609
        %v825 = vpop.f32.mrb[0].mxu0
        %v826 = vadd.f32 0.0, %v825
        %v827 = vpop.f32.mrb[0].mxu0
        %v828 = vadd.f32 0.0, %v827
        %829 = vmatprep.mubr.f32.mxu0 0.0
        %830 = vmatmul.mubr.f32.gmra.mrb[0].mxu0 %v612
        %v831 = vpop.f32.mrb[0].mxu0
        %v832 = vpop.f32.mrb[0].mxu0
        %833 = vdwg.mxu0
        %v835 = vsel %vm538, %v493, 0
        %v838 = vsel %vm614, %v527, 0
        %v841 = vsel %vm614, %v528, 0
        %843 = vmatprep.subr.mxu0 %v522
        %844 = vmatpush1.msra.mxu0 %v521
        %845 = vmatprep.subr.mxu0 %v524
        %846 = vmatpush1.msra.mxu0 %v523
        %847 = vmatprep.subr.mxu0 %v526
        %848 = vmatpush1.msra.mxu0 %v525
        %849 = vmatprep.subr.mxu0 %v841
        %850 = vmatpush1.msra.mxu0 %v838
        %851 = vmatprep.subr.mxu0 0.0
        %852 = vmatpush1.msra.mxu0 0.0
        %853 = vmatprep.subr.mxu0 0.0
        %854 = vmatpush1.msra.mxu0 0.0
        %855 = vmatprep.subr.mxu0 0.0
        %856 = vmatpush1.msra.mxu0 0.0
        %857 = vmatprep.subr.mxu0 0.0
        %858 = vmatpush1.msra.mxu0 0.0
        %859 = vmatprep.subr.mxu0 0.0
        %860 = vmatpush1.msra.mxu0 0.0
        %861 = vmatprep.subr.mxu0 0.0
        %862 = vmatpush1.msra.mxu0 0.0
        %863 = vmatprep.subr.mxu0 0.0
        %864 = vmatpush1.msra.mxu0 0.0
        %865 = vmatprep.subr.mxu0 0.0
        %866 = vmatpush1.msra.mxu0 0.0
        %867 = vmatprep.subr.mxu0 0.0
        %868 = vmatpush1.msra.mxu0 0.0
        %869 = vmatprep.subr.mxu0 0.0
        %870 = vmatpush1.msra.mxu0 0.0
        %871 = vmatprep.subr.mxu0 0.0
        %872 = vmatpush1.msra.mxu0 0.0
        %873 = vmatprep.subr.mxu0 0.0
        %874 = vmatpush1.msra.mxu0 0.0
        %875 = vmatprep.subr.mxu0 0.0
        %876 = vmatpush1.msra.mxu0 0.0
        %877 = vmatprep.subr.mxu0 0.0
        %878 = vmatpush1.msra.mxu0 0.0
        %879 = vmatprep.subr.mxu0 0.0
        %880 = vmatpush1.msra.mxu0 0.0
        %881 = vmatprep.subr.mxu0 0.0
        %882 = vmatpush1.msra.mxu0 0.0
        %883 = vmatprep.subr.mxu0 0.0
        %884 = vmatpush1.msra.mxu0 0.0
        %885 = vmatprep.subr.mxu0 0.0
        %886 = vmatpush1.msra.mxu0 0.0
        %887 = vmatprep.subr.mxu0 0.0
        %888 = vmatpush1.msra.mxu0 0.0
        %889 = vmatprep.subr.mxu0 0.0
        %890 = vmatpush1.msra.mxu0 0.0
        %891 = vmatprep.subr.mxu0 0.0
        %892 = vmatpush1.msra.mxu0 0.0
        %893 = vmatprep.subr.mxu0 0.0
        %894 = vmatpush1.msra.mxu0 0.0
        %895 = vmatprep.subr.mxu0 0.0
        %896 = vmatpush1.msra.mxu0 0.0
        %897 = vmatprep.subr.mxu0 0.0
        %898 = vmatpush1.msra.mxu0 0.0
        %899 = vmatprep.subr.mxu0 0.0
        %900 = vmatpush1.msra.mxu0 0.0
        %901 = vmatprep.subr.mxu0 0.0
        %902 = vmatpush1.msra.mxu0 0.0
        %903 = vmatprep.subr.mxu0 0.0
        %904 = vmatpush1.msra.mxu0 0.0
        %905 = vmatprep.subr.mxu0 0.0
        %906 = vmatpush1.msra.mxu0 0.0
        %907 = vmatprep.mubr.f32.mxu0 0.0
        %908 = vmatmul.mubr.f32.gmra.mrb[0].mxu0 %v835
        %v909 = vpop.f32.mrb[0].mxu0
        %v910 = vadd.f32 %v688, %v909
        %v911 = vpop.f32.mrb[0].mxu0
        %v912 = vadd.f32 %v690, %v911
        %913 = vmatprep.mubr.f32.mxu0 0.0
        %914 = vmatmul.mubr.f32.gmra.mrb[0].mxu0 %v540
        %v915 = vpop.f32.mrb[0].mxu0
        %v916 = vadd.f32 %v694, %v915
        %v917 = vpop.f32.mrb[0].mxu0
        %v918 = vadd.f32 %v696, %v917
        %919 = vmatprep.mubr.f32.mxu0 0.0
        %920 = vmatmul.mubr.f32.gmra.mrb[0].mxu0 %v543
        %v921 = vpop.f32.mrb[0].mxu0
        %v922 = vadd.f32 %v700, %v921
        %v923 = vpop.f32.mrb[0].mxu0
        %v924 = vadd.f32 %v702, %v923
        %925 = vmatprep.mubr.f32.mxu0 0.0
        %926 = vmatmul.mubr.f32.gmra.mrb[0].mxu0 %v546
        %v927 = vpop.f32.mrb[0].mxu0
        %v928 = vadd.f32 %v706, %v927
        %v929 = vpop.f32.mrb[0].mxu0
        %v930 = vadd.f32 %v708, %v929
        %931 = vmatprep.mubr.f32.mxu0 0.0
        %932 = vmatmul.mubr.f32.gmra.mrb[0].mxu0 %v549
        %v933 = vpop.f32.mrb[0].mxu0
        %v934 = vadd.f32 %v712, %v933
        %v935 = vpop.f32.mrb[0].mxu0
        %v936 = vadd.f32 %v714, %v935
        %937 = vmatprep.mubr.f32.mxu0 0.0
        %938 = vmatmul.mubr.f32.gmra.mrb[0].mxu0 %v552
        %v939 = vpop.f32.mrb[0].mxu0
        %v940 = vadd.f32 %v718, %v939
        %v941 = vpop.f32.mrb[0].mxu0
        %v942 = vadd.f32 %v720, %v941
        %943 = vmatprep.mubr.f32.mxu0 0.0
        %944 = vmatmul.mubr.f32.gmra.mrb[0].mxu0 %v555
        %v945 = vpop.f32.mrb[0].mxu0
        %v946 = vadd.f32 %v724, %v945
        %v947 = vpop.f32.mrb[0].mxu0
        %v948 = vadd.f32 %v726, %v947
        %949 = vmatprep.mubr.f32.mxu0 0.0
        %950 = vmatmul.mubr.f32.gmra.mrb[0].mxu0 %v558
        %v951 = vpop.f32.mrb[0].mxu0
        %v952 = vadd.f32 %v730, %v951
        %v953 = vpop.f32.mrb[0].mxu0
        %v954 = vadd.f32 %v732, %v953
        %955 = vmatprep.mubr.f32.mxu0 0.0
        %956 = vmatmul.mubr.f32.gmra.mrb[0].mxu0 %v561
        %v957 = vpop.f32.mrb[0].mxu0
        %v958 = vadd.f32 %v736, %v957
        %v959 = vpop.f32.mrb[0].mxu0
        %v960 = vadd.f32 %v738, %v959
        %961 = vmatprep.mubr.f32.mxu0 0.0
        %962 = vmatmul.mubr.f32.gmra.mrb[0].mxu0 %v564
        %v963 = vpop.f32.mrb[0].mxu0
        %v964 = vadd.f32 %v742, %v963
        %v965 = vpop.f32.mrb[0].mxu0
        %v966 = vadd.f32 %v744, %v965
        %967 = vmatprep.mubr.f32.mxu0 0.0
        %968 = vmatmul.mubr.f32.gmra.mrb[0].mxu0 %v567
        %v969 = vpop.f32.mrb[0].mxu0
        %v970 = vadd.f32 %v748, %v969
        %v971 = vpop.f32.mrb[0].mxu0
        %v972 = vadd.f32 %v750, %v971
        %973 = vmatprep.mubr.f32.mxu0 0.0
        %974 = vmatmul.mubr.f32.gmra.mrb[0].mxu0 %v570
        %v975 = vpop.f32.mrb[0].mxu0
        %v976 = vadd.f32 %v754, %v975
        %v977 = vpop.f32.mrb[0].mxu0
        %v978 = vadd.f32 %v756, %v977
        %979 = vmatprep.mubr.f32.mxu0 0.0
        %980 = vmatmul.mubr.f32.gmra.mrb[0].mxu0 %v573
        %v981 = vpop.f32.mrb[0].mxu0
        %v982 = vadd.f32 %v760, %v981
        %v983 = vpop.f32.mrb[0].mxu0
        %v984 = vadd.f32 %v762, %v983
        %985 = vmatprep.mubr.f32.mxu0 0.0
        %986 = vmatmul.mubr.f32.gmra.mrb[0].mxu0 %v576
        %v987 = vpop.f32.mrb[0].mxu0
        %v988 = vadd.f32 %v766, %v987
        %v989 = vpop.f32.mrb[0].mxu0
        %v990 = vadd.f32 %v768, %v989
        %991 = vmatprep.mubr.f32.mxu0 0.0
        %992 = vmatmul.mubr.f32.gmra.mrb[0].mxu0 %v579
        %v993 = vpop.f32.mrb[0].mxu0
        %v994 = vadd.f32 %v772, %v993
        %v995 = vpop.f32.mrb[0].mxu0
        %v996 = vadd.f32 %v774, %v995
        %997 = vmatprep.mubr.f32.mxu0 0.0
        %998 = vmatmul.mubr.f32.gmra.mrb[0].mxu0 %v582
        %v999 = vpop.f32.mrb[0].mxu0
        %v1000 = vadd.f32 %v778, %v999
        %v1001 = vpop.f32.mrb[0].mxu0
        %v1002 = vadd.f32 %v780, %v1001
        %1003 = vmatprep.mubr.f32.mxu0 0.0
        %1004 = vmatmul.mubr.f32.gmra.mrb[0].mxu0 %v585
        %v1005 = vpop.f32.mrb[0].mxu0
        %v1006 = vadd.f32 %v784, %v1005
        %v1007 = vpop.f32.mrb[0].mxu0
        %v1008 = vadd.f32 %v786, %v1007
        %1009 = vmatprep.mubr.f32.mxu0 0.0
        %1010 = vmatmul.mubr.f32.gmra.mrb[0].mxu0 %v588
        %v1011 = vpop.f32.mrb[0].mxu0
        %v1012 = vadd.f32 %v790, %v1011
        %v1013 = vpop.f32.mrb[0].mxu0
        %v1014 = vadd.f32 %v792, %v1013
        %1015 = vmatprep.mubr.f32.mxu0 0.0
        %1016 = vmatmul.mubr.f32.gmra.mrb[0].mxu0 %v591
        %v1017 = vpop.f32.mrb[0].mxu0
        %v1018 = vadd.f32 %v796, %v1017
        %v1019 = vpop.f32.mrb[0].mxu0
        %v1020 = vadd.f32 %v798, %v1019
        %1021 = vmatprep.mubr.f32.mxu0 0.0
        %1022 = vmatmul.mubr.f32.gmra.mrb[0].mxu0 %v594
        %v1023 = vpop.f32.mrb[0].mxu0
        %v1024 = vadd.f32 %v802, %v1023
        %v1025 = vpop.f32.mrb[0].mxu0
        %v1026 = vadd.f32 %v804, %v1025
        %1027 = vmatprep.mubr.f32.mxu0 0.0
        %1028 = vmatmul.mubr.f32.gmra.mrb[0].mxu0 %v597
        %v1029 = vpop.f32.mrb[0].mxu0
        %v1030 = vadd.f32 %v808, %v1029
        %v1031 = vpop.f32.mrb[0].mxu0
        %v1032 = vadd.f32 %v810, %v1031
        %1033 = vmatprep.mubr.f32.mxu0 0.0
        %1034 = vmatmul.mubr.f32.gmra.mrb[0].mxu0 %v600
        %v1035 = vpop.f32.mrb[0].mxu0
        %v1036 = vadd.f32 %v814, %v1035
        %v1037 = vpop.f32.mrb[0].mxu0
        %v1038 = vadd.f32 %v816, %v1037
        %1039 = vmatprep.mubr.f32.mxu0 0.0
        %1040 = vmatmul.mubr.f32.gmra.mrb[0].mxu0 %v603
        %v1041 = vpop.f32.mrb[0].mxu0
        %v1042 = vadd.f32 %v820, %v1041
        %v1043 = vpop.f32.mrb[0].mxu0
        %v1044 = vadd.f32 %v822, %v1043
        %1045 = vmatprep.mubr.f32.mxu0 0.0
        %1046 = vmatmul.mubr.f32.gmra.mrb[0].mxu0 %v606
        %v1047 = vpop.f32.mrb[0].mxu0
        %v1048 = vadd.f32 %v826, %v1047
        %v1049 = vpop.f32.mrb[0].mxu0
        %v1050 = vadd.f32 %v828, %v1049
        %1051 = vmatprep.mubr.f32.mxu0 0.0
        %1052 = vmatmul.mubr.f32.gmra.mrb[0].mxu0 %v609
        %v1053 = vpop.f32.mrb[0].mxu0
        %v1054 = vpop.f32.mrb[0].mxu0
        %1055 = vdwg.mxu0
        %s1056 = scalar_lea.vmem %s1, 128
        %v1057 = vld [vmem:[%s1056] sm:$0xff]
        %v1058 = vld [vmem:[%s1056 + $0x8] sm:$0xff]
        %v1059 = vld [vmem:[%s1056 + $0x10] sm:$0xff]
        %v1060 = vld [vmem:[%s1056 + $0x18] sm:$0xff]
        %v1061 = vld [vmem:[%s1056 + $0x20] sm:$0xff]
        %v1062 = vld [vmem:[%s1056 + $0x28] sm:$0xff]
        %v1063 = vld [vmem:[%s1056 + $0x30] sm:$0xf]
        %v1064 = vld [vmem:[%s1056 + $0x38] sm:$0xf]
        %v1066 = vsel %vm538, %v519, 0
        %v1069 = vsel %vm614, %v1063, 0
        %v1072 = vsel %vm614, %v1064, 0
        %1074 = vmatprep.subr.mxu0 %v1058
        %1075 = vmatpush1.msra.mxu0 %v1057
        %1076 = vmatprep.subr.mxu0 %v1060
        %1077 = vmatpush1.msra.mxu0 %v1059
        %1078 = vmatprep.subr.mxu0 %v1062
        %1079 = vmatpush1.msra.mxu0 %v1061
        %1080 = vmatprep.subr.mxu0 %v1072
        %1081 = vmatpush1.msra.mxu0 %v1069
        %1082 = vmatprep.subr.mxu0 0.0
        %1083 = vmatpush1.msra.mxu0 0.0
        %1084 = vmatprep.subr.mxu0 0.0
        %1085 = vmatpush1.msra.mxu0 0.0
        %1086 = vmatprep.subr.mxu0 0.0
        %1087 = vmatpush1.msra.mxu0 0.0
        %1088 = vmatprep.subr.mxu0 0.0
        %1089 = vmatpush1.msra.mxu0 0.0
        %1090 = vmatprep.subr.mxu0 0.0
        %1091 = vmatpush1.msra.mxu0 0.0
        %1092 = vmatprep.subr.mxu0 0.0
        %1093 = vmatpush1.msra.mxu0 0.0
        %1094 = vmatprep.subr.mxu0 0.0
        %1095 = vmatpush1.msra.mxu0 0.0
        %1096 = vmatprep.subr.mxu0 0.0
        %1097 = vmatpush1.msra.mxu0 0.0
        %1098 = vmatprep.subr.mxu0 0.0
        %1099 = vmatpush1.msra.mxu0 0.0
        %1100 = vmatprep.subr.mxu0 0.0
        %1101 = vmatpush1.msra.mxu0 0.0
        %1102 = vmatprep.subr.mxu0 0.0
        %1103 = vmatpush1.msra.mxu0 0.0
        %1104 = vmatprep.subr.mxu0 0.0
        %1105 = vmatpush1.msra.mxu0 0.0
        %1106 = vmatprep.subr.mxu0 0.0
        %1107 = vmatpush1.msra.mxu0 0.0
        %1108 = vmatprep.subr.mxu0 0.0
        %1109 = vmatpush1.msra.mxu0 0.0
        %1110 = vmatprep.subr.mxu0 0.0
        %1111 = vmatpush1.msra.mxu0 0.0
        %1112 = vmatprep.subr.mxu0 0.0
        %1113 = vmatpush1.msra.mxu0 0.0
        %1114 = vmatprep.subr.mxu0 0.0
        %1115 = vmatpush1.msra.mxu0 0.0
        %1116 = vmatprep.subr.mxu0 0.0
        %1117 = vmatpush1.msra.mxu0 0.0
        %1118 = vmatprep.subr.mxu0 0.0
        %1119 = vmatpush1.msra.mxu0 0.0
        %1120 = vmatprep.subr.mxu0 0.0
        %1121 = vmatpush1.msra.mxu0 0.0
        %1122 = vmatprep.subr.mxu0 0.0
        %1123 = vmatpush1.msra.mxu0 0.0
        %1124 = vmatprep.subr.mxu0 0.0
        %1125 = vmatpush1.msra.mxu0 0.0
        %1126 = vmatprep.subr.mxu0 0.0
        %1127 = vmatpush1.msra.mxu0 0.0
        %1128 = vmatprep.subr.mxu0 0.0
        %1129 = vmatpush1.msra.mxu0 0.0
        %1130 = vmatprep.subr.mxu0 0.0
        %1131 = vmatpush1.msra.mxu0 0.0
        %1132 = vmatprep.subr.mxu0 0.0
        %1133 = vmatpush1.msra.mxu0 0.0
        %1134 = vmatprep.subr.mxu0 0.0
        %1135 = vmatpush1.msra.mxu0 0.0
        %1136 = vmatprep.subr.mxu0 0.0
        %1137 = vmatpush1.msra.mxu0 0.0
        %1138 = vmatprep.mubr.f32.mxu0 0.0
        %1139 = vmatmul.mubr.f32.gmra.mrb[0].mxu0 %v543
        %v1140 = vpop.f32.mrb[0].mxu0
        %v1141 = vadd.f32 0.0, %v1140
        %v1142 = vpop.f32.mrb[0].mxu0
        %v1143 = vadd.f32 0.0, %v1142
        %1144 = vmatprep.mubr.f32.mxu0 0.0
        %1145 = vmatmul.mubr.f32.gmra.mrb[0].mxu0 %v546
        %v1146 = vpop.f32.mrb[0].mxu0
        %v1147 = vadd.f32 0.0, %v1146
        %v1148 = vpop.f32.mrb[0].mxu0
        %v1149 = vadd.f32 0.0, %v1148
        %1150 = vmatprep.mubr.f32.mxu0 0.0
        %1151 = vmatmul.mubr.f32.gmra.mrb[0].mxu0 %v549
        %v1152 = vpop.f32.mrb[0].mxu0
        %v1153 = vadd.f32 0.0, %v1152
        %v1154 = vpop.f32.mrb[0].mxu0
        %v1155 = vadd.f32 0.0, %v1154
        %1156 = vmatprep.mubr.f32.mxu0 0.0
        %1157 = vmatmul.mubr.f32.gmra.mrb[0].mxu0 %v552
        %v1158 = vpop.f32.mrb[0].mxu0
        %v1159 = vadd.f32 0.0, %v1158
        %v1160 = vpop.f32.mrb[0].mxu0
        %v1161 = vadd.f32 0.0, %v1160
        %1162 = vmatprep.mubr.f32.mxu0 0.0
        %1163 = vmatmul.mubr.f32.gmra.mrb[0].mxu0 %v555
        %v1164 = vpop.f32.mrb[0].mxu0
        %v1165 = vadd.f32 0.0, %v1164
        %v1166 = vpop.f32.mrb[0].mxu0
        %v1167 = vadd.f32 0.0, %v1166
        %1168 = vmatprep.mubr.f32.mxu0 0.0
        %1169 = vmatmul.mubr.f32.gmra.mrb[0].mxu0 %v558
        %v1170 = vpop.f32.mrb[0].mxu0
        %v1171 = vadd.f32 0.0, %v1170
        %v1172 = vpop.f32.mrb[0].mxu0
        %v1173 = vadd.f32 0.0, %v1172
        %1174 = vmatprep.mubr.f32.mxu0 0.0
        %1175 = vmatmul.mubr.f32.gmra.mrb[0].mxu0 %v561
        %v1176 = vpop.f32.mrb[0].mxu0
        %v1177 = vadd.f32 0.0, %v1176
        %v1178 = vpop.f32.mrb[0].mxu0
        %v1179 = vadd.f32 0.0, %v1178
        %1180 = vmatprep.mubr.f32.mxu0 0.0
        %1181 = vmatmul.mubr.f32.gmra.mrb[0].mxu0 %v564
        %v1182 = vpop.f32.mrb[0].mxu0
        %v1183 = vadd.f32 0.0, %v1182
        %v1184 = vpop.f32.mrb[0].mxu0
        %v1185 = vadd.f32 0.0, %v1184
        %1186 = vmatprep.mubr.f32.mxu0 0.0
        %1187 = vmatmul.mubr.f32.gmra.mrb[0].mxu0 %v567
        %v1188 = vpop.f32.mrb[0].mxu0
        %v1189 = vadd.f32 0.0, %v1188
        %v1190 = vpop.f32.mrb[0].mxu0
        %v1191 = vadd.f32 0.0, %v1190
        %1192 = vmatprep.mubr.f32.mxu0 0.0
        %1193 = vmatmul.mubr.f32.gmra.mrb[0].mxu0 %v570
        %v1194 = vpop.f32.mrb[0].mxu0
        %v1195 = vadd.f32 0.0, %v1194
        %v1196 = vpop.f32.mrb[0].mxu0
        %v1197 = vadd.f32 0.0, %v1196
        %1198 = vmatprep.mubr.f32.mxu0 0.0
        %1199 = vmatmul.mubr.f32.gmra.mrb[0].mxu0 %v573
        %v1200 = vpop.f32.mrb[0].mxu0
        %v1201 = vadd.f32 0.0, %v1200
        %v1202 = vpop.f32.mrb[0].mxu0
        %v1203 = vadd.f32 0.0, %v1202
        %1204 = vmatprep.mubr.f32.mxu0 0.0
        %1205 = vmatmul.mubr.f32.gmra.mrb[0].mxu0 %v576
        %v1206 = vpop.f32.mrb[0].mxu0
        %v1207 = vadd.f32 0.0, %v1206
        %v1208 = vpop.f32.mrb[0].mxu0
        %v1209 = vadd.f32 0.0, %v1208
        %1210 = vmatprep.mubr.f32.mxu0 0.0
        %1211 = vmatmul.mubr.f32.gmra.mrb[0].mxu0 %v579
        %v1212 = vpop.f32.mrb[0].mxu0
        %v1213 = vadd.f32 0.0, %v1212
        %v1214 = vpop.f32.mrb[0].mxu0
        %v1215 = vadd.f32 0.0, %v1214
        %1216 = vmatprep.mubr.f32.mxu0 0.0
        %1217 = vmatmul.mubr.f32.gmra.mrb[0].mxu0 %v582
        %v1218 = vpop.f32.mrb[0].mxu0
        %v1219 = vadd.f32 0.0, %v1218
        %v1220 = vpop.f32.mrb[0].mxu0
        %v1221 = vadd.f32 0.0, %v1220
        %1222 = vmatprep.mubr.f32.mxu0 0.0
        %1223 = vmatmul.mubr.f32.gmra.mrb[0].mxu0 %v585
        %v1224 = vpop.f32.mrb[0].mxu0
        %v1225 = vadd.f32 0.0, %v1224
        %v1226 = vpop.f32.mrb[0].mxu0
        %v1227 = vadd.f32 0.0, %v1226
        %1228 = vmatprep.mubr.f32.mxu0 0.0
        %1229 = vmatmul.mubr.f32.gmra.mrb[0].mxu0 %v588
        %v1230 = vpop.f32.mrb[0].mxu0
        %v1231 = vadd.f32 0.0, %v1230
        %v1232 = vpop.f32.mrb[0].mxu0
        %v1233 = vadd.f32 0.0, %v1232
        %1234 = vmatprep.mubr.f32.mxu0 0.0
        %1235 = vmatmul.mubr.f32.gmra.mrb[0].mxu0 %v591
        %v1236 = vpop.f32.mrb[0].mxu0
        %v1237 = vadd.f32 0.0, %v1236
        %v1238 = vpop.f32.mrb[0].mxu0
        %v1239 = vadd.f32 0.0, %v1238
        %1240 = vmatprep.mubr.f32.mxu0 0.0
        %1241 = vmatmul.mubr.f32.gmra.mrb[0].mxu0 %v594
        %v1242 = vpop.f32.mrb[0].mxu0
        %v1243 = vadd.f32 0.0, %v1242
        %v1244 = vpop.f32.mrb[0].mxu0
        %v1245 = vadd.f32 0.0, %v1244
        %1246 = vmatprep.mubr.f32.mxu0 0.0
        %1247 = vmatmul.mubr.f32.gmra.mrb[0].mxu0 %v597
        %v1248 = vpop.f32.mrb[0].mxu0
        %v1249 = vadd.f32 0.0, %v1248
        %v1250 = vpop.f32.mrb[0].mxu0
        %v1251 = vadd.f32 0.0, %v1250
        %1252 = vmatprep.mubr.f32.mxu0 0.0
        %1253 = vmatmul.mubr.f32.gmra.mrb[0].mxu0 %v600
        %v1254 = vpop.f32.mrb[0].mxu0
        %v1255 = vadd.f32 0.0, %v1254
        %v1256 = vpop.f32.mrb[0].mxu0
        %v1257 = vadd.f32 0.0, %v1256
        %1258 = vmatprep.mubr.f32.mxu0 0.0
        %1259 = vmatmul.mubr.f32.gmra.mrb[0].mxu0 %v603
        %v1260 = vpop.f32.mrb[0].mxu0
        %v1261 = vadd.f32 0.0, %v1260
        %v1262 = vpop.f32.mrb[0].mxu0
        %v1263 = vadd.f32 0.0, %v1262
        %1264 = vmatprep.mubr.f32.mxu0 0.0
        %1265 = vmatmul.mubr.f32.gmra.mrb[0].mxu0 %v606
        %v1266 = vpop.f32.mrb[0].mxu0
        %v1267 = vadd.f32 0.0, %v1266
        %v1268 = vpop.f32.mrb[0].mxu0
        %v1269 = vadd.f32 0.0, %v1268
        %1270 = vmatprep.mubr.f32.mxu0 0.0
        %1271 = vmatmul.mubr.f32.gmra.mrb[0].mxu0 %v609
        %v1272 = vpop.f32.mrb[0].mxu0
        %v1273 = vadd.f32 0.0, %v1272
        %v1274 = vpop.f32.mrb[0].mxu0
        %v1275 = vadd.f32 0.0, %v1274
        %1276 = vmatprep.mubr.f32.mxu0 0.0
        %1277 = vmatmul.mubr.f32.gmra.mrb[0].mxu0 %v612
        %v1278 = vpop.f32.mrb[0].mxu0
        %v1279 = vadd.f32 0.0, %v1278
        %v1280 = vpop.f32.mrb[0].mxu0
        %v1281 = vadd.f32 0.0, %v1280
        %1282 = vmatprep.mubr.f32.mxu0 0.0
        %1283 = vmatmul.mubr.f32.gmra.mrb[0].mxu0 %v1066
        %v1284 = vpop.f32.mrb[0].mxu0
        %v1285 = vpop.f32.mrb[0].mxu0
        %1286 = vdwg.mxu0
        %v1287 = vadd.f32 %v910, %v1141
        %v1288 = vadd.f32 %v912, %v1143
        %v1289 = vadd.f32 %v916, %v1147
        %v1290 = vadd.f32 %v918, %v1149
        %v1291 = vadd.f32 %v922, %v1153
        %v1292 = vadd.f32 %v924, %v1155
        %v1293 = vadd.f32 %v928, %v1159
        %v1294 = vadd.f32 %v930, %v1161
        %v1295 = vadd.f32 %v934, %v1165
        %v1296 = vadd.f32 %v936, %v1167
        %v1297 = vadd.f32 %v940, %v1171
        %v1298 = vadd.f32 %v942, %v1173
        %v1299 = vadd.f32 %v946, %v1177
        %v1300 = vadd.f32 %v948, %v1179
        %v1301 = vadd.f32 %v952, %v1183
        %v1302 = vadd.f32 %v954, %v1185
        %v1303 = vadd.f32 %v958, %v1189
        %v1304 = vadd.f32 %v960, %v1191
        %v1305 = vadd.f32 %v964, %v1195
        %v1306 = vadd.f32 %v966, %v1197
        %v1307 = vadd.f32 %v970, %v1201
        %v1308 = vadd.f32 %v972, %v1203
        %v1309 = vadd.f32 %v976, %v1207
        %v1310 = vadd.f32 %v978, %v1209
        %v1311 = vadd.f32 %v982, %v1213
        %v1312 = vadd.f32 %v984, %v1215
        %v1313 = vadd.f32 %v988, %v1219
        %v1314 = vadd.f32 %v990, %v1221
        %v1315 = vadd.f32 %v994, %v1225
        %v1316 = vadd.f32 %v996, %v1227
        %v1317 = vadd.f32 %v1000, %v1231
        %v1318 = vadd.f32 %v1002, %v1233
        %v1319 = vadd.f32 %v1006, %v1237
        %v1320 = vadd.f32 %v1008, %v1239
        %v1321 = vadd.f32 %v1012, %v1243
        %v1322 = vadd.f32 %v1014, %v1245
        %v1323 = vadd.f32 %v1018, %v1249
        %v1324 = vadd.f32 %v1020, %v1251
        %v1325 = vadd.f32 %v1024, %v1255
        %v1326 = vadd.f32 %v1026, %v1257
        %v1327 = vadd.f32 %v1030, %v1261
        %v1328 = vadd.f32 %v1032, %v1263
        %v1329 = vadd.f32 %v1036, %v1267
        %v1330 = vadd.f32 %v1038, %v1269
        %v1331 = vadd.f32 %v1042, %v1273
        %v1332 = vadd.f32 %v1044, %v1275
        %v1333 = vadd.f32 %v1048, %v1279
        %v1334 = vadd.f32 %v1050, %v1281
        %s1335 = scalar_lea.vmem %s1, 192
        %v1336 = vld [vmem:[%s1335] sm:$0xff]
        %v1337 = vld [vmem:[%s1335 + $0x8] sm:$0xff]
        %v1338 = vld [vmem:[%s1335 + $0x10] sm:$0xff]
        %v1339 = vld [vmem:[%s1335 + $0x18] sm:$0xff]
        %v1340 = vld [vmem:[%s1335 + $0x20] sm:$0xff]
        %v1341 = vld [vmem:[%s1335 + $0x28] sm:$0xff]
        %v1342 = vld [vmem:[%s1335 + $0x30] sm:$0xf]
        %v1343 = vld [vmem:[%s1335 + $0x38] sm:$0xf]
        %v1345 = vsel %vm538, %v520, 0
        %v1348 = vsel %vm614, %v1342, 0
        %v1351 = vsel %vm614, %v1343, 0
        %1353 = vmatprep.subr.mxu0 %v1337
        %1354 = vmatpush1.msra.mxu0 %v1336
        %1355 = vmatprep.subr.mxu0 %v1339
        %1356 = vmatpush1.msra.mxu0 %v1338
        %1357 = vmatprep.subr.mxu0 %v1341
        %1358 = vmatpush1.msra.mxu0 %v1340
        %1359 = vmatprep.subr.mxu0 %v1351
        %1360 = vmatpush1.msra.mxu0 %v1348
        %1361 = vmatprep.subr.mxu0 0.0
        %1362 = vmatpush1.msra.mxu0 0.0
        %1363 = vmatprep.subr.mxu0 0.0
        %1364 = vmatpush1.msra.mxu0 0.0
        %1365 = vmatprep.subr.mxu0 0.0
        %1366 = vmatpush1.msra.mxu0 0.0
        %1367 = vmatprep.subr.mxu0 0.0
        %1368 = vmatpush1.msra.mxu0 0.0
        %1369 = vmatprep.subr.mxu0 0.0
        %1370 = vmatpush1.msra.mxu0 0.0
        %1371 = vmatprep.subr.mxu0 0.0
        %1372 = vmatpush1.msra.mxu0 0.0
        %1373 = vmatprep.subr.mxu0 0.0
        %1374 = vmatpush1.msra.mxu0 0.0
        %1375 = vmatprep.subr.mxu0 0.0
        %1376 = vmatpush1.msra.mxu0 0.0
        %1377 = vmatprep.subr.mxu0 0.0
        %1378 = vmatpush1.msra.mxu0 0.0
        %1379 = vmatprep.subr.mxu0 0.0
        %1380 = vmatpush1.msra.mxu0 0.0
        %1381 = vmatprep.subr.mxu0 0.0
        %1382 = vmatpush1.msra.mxu0 0.0
        %1383 = vmatprep.subr.mxu0 0.0
        %1384 = vmatpush1.msra.mxu0 0.0
        %1385 = vmatprep.subr.mxu0 0.0
        %1386 = vmatpush1.msra.mxu0 0.0
        %1387 = vmatprep.subr.mxu0 0.0
        %1388 = vmatpush1.msra.mxu0 0.0
        %1389 = vmatprep.subr.mxu0 0.0
        %1390 = vmatpush1.msra.mxu0 0.0
        %1391 = vmatprep.subr.mxu0 0.0
        %1392 = vmatpush1.msra.mxu0 0.0
        %1393 = vmatprep.subr.mxu0 0.0
        %1394 = vmatpush1.msra.mxu0 0.0
        %1395 = vmatprep.subr.mxu0 0.0
        %1396 = vmatpush1.msra.mxu0 0.0
        %1397 = vmatprep.subr.mxu0 0.0
        %1398 = vmatpush1.msra.mxu0 0.0
        %1399 = vmatprep.subr.mxu0 0.0
        %1400 = vmatpush1.msra.mxu0 0.0
        %1401 = vmatprep.subr.mxu0 0.0
        %1402 = vmatpush1.msra.mxu0 0.0
        %1403 = vmatprep.subr.mxu0 0.0
        %1404 = vmatpush1.msra.mxu0 0.0
        %1405 = vmatprep.subr.mxu0 0.0
        %1406 = vmatpush1.msra.mxu0 0.0
        %1407 = vmatprep.subr.mxu0 0.0
        %1408 = vmatpush1.msra.mxu0 0.0
        %1409 = vmatprep.subr.mxu0 0.0
        %1410 = vmatpush1.msra.mxu0 0.0
        %1411 = vmatprep.subr.mxu0 0.0
        %1412 = vmatpush1.msra.mxu0 0.0
        %1413 = vmatprep.subr.mxu0 0.0
        %1414 = vmatpush1.msra.mxu0 0.0
        %1415 = vmatprep.subr.mxu0 0.0
        %1416 = vmatpush1.msra.mxu0 0.0
        %1417 = vmatprep.mubr.f32.mxu0 0.0
        %1418 = vmatmul.mubr.f32.gmra.mrb[0].mxu0 %v546
        %v1419 = vpop.f32.mrb[0].mxu0
        %v1420 = vadd.f32 0.0, %v1419
        %v1421 = vpop.f32.mrb[0].mxu0
        %v1422 = vadd.f32 0.0, %v1421
        %1423 = vmatprep.mubr.f32.mxu0 0.0
        %1424 = vmatmul.mubr.f32.gmra.mrb[0].mxu0 %v549
        %v1425 = vpop.f32.mrb[0].mxu0
        %v1426 = vadd.f32 0.0, %v1425
        %v1427 = vpop.f32.mrb[0].mxu0
        %v1428 = vadd.f32 0.0, %v1427
        %1429 = vmatprep.mubr.f32.mxu0 0.0
        %1430 = vmatmul.mubr.f32.gmra.mrb[0].mxu0 %v552
        %v1431 = vpop.f32.mrb[0].mxu0
        %v1432 = vadd.f32 0.0, %v1431
        %v1433 = vpop.f32.mrb[0].mxu0
        %v1434 = vadd.f32 0.0, %v1433
        %1435 = vmatprep.mubr.f32.mxu0 0.0
        %1436 = vmatmul.mubr.f32.gmra.mrb[0].mxu0 %v555
        %v1437 = vpop.f32.mrb[0].mxu0
        %v1438 = vadd.f32 0.0, %v1437
        %v1439 = vpop.f32.mrb[0].mxu0
        %v1440 = vadd.f32 0.0, %v1439
        %1441 = vmatprep.mubr.f32.mxu0 0.0
        %1442 = vmatmul.mubr.f32.gmra.mrb[0].mxu0 %v558
        %v1443 = vpop.f32.mrb[0].mxu0
        %v1444 = vadd.f32 0.0, %v1443
        %v1445 = vpop.f32.mrb[0].mxu0
        %v1446 = vadd.f32 0.0, %v1445
        %1447 = vmatprep.mubr.f32.mxu0 0.0
        %1448 = vmatmul.mubr.f32.gmra.mrb[0].mxu0 %v561
        %v1449 = vpop.f32.mrb[0].mxu0
        %v1450 = vadd.f32 0.0, %v1449
        %v1451 = vpop.f32.mrb[0].mxu0
        %v1452 = vadd.f32 0.0, %v1451
        %1453 = vmatprep.mubr.f32.mxu0 0.0
        %1454 = vmatmul.mubr.f32.gmra.mrb[0].mxu0 %v564
        %v1455 = vpop.f32.mrb[0].mxu0
        %v1456 = vadd.f32 0.0, %v1455
        %v1457 = vpop.f32.mrb[0].mxu0
        %v1458 = vadd.f32 0.0, %v1457
        %1459 = vmatprep.mubr.f32.mxu0 0.0
        %1460 = vmatmul.mubr.f32.gmra.mrb[0].mxu0 %v567
        %v1461 = vpop.f32.mrb[0].mxu0
        %v1462 = vadd.f32 0.0, %v1461
        %v1463 = vpop.f32.mrb[0].mxu0
        %v1464 = vadd.f32 0.0, %v1463
        %1465 = vmatprep.mubr.f32.mxu0 0.0
        %1466 = vmatmul.mubr.f32.gmra.mrb[0].mxu0 %v570
        %v1467 = vpop.f32.mrb[0].mxu0
        %v1468 = vadd.f32 0.0, %v1467
        %v1469 = vpop.f32.mrb[0].mxu0
        %v1470 = vadd.f32 0.0, %v1469
        %1471 = vmatprep.mubr.f32.mxu0 0.0
        %1472 = vmatmul.mubr.f32.gmra.mrb[0].mxu0 %v573
        %v1473 = vpop.f32.mrb[0].mxu0
        %v1474 = vadd.f32 0.0, %v1473
        %v1475 = vpop.f32.mrb[0].mxu0
        %v1476 = vadd.f32 0.0, %v1475
        %1477 = vmatprep.mubr.f32.mxu0 0.0
        %1478 = vmatmul.mubr.f32.gmra.mrb[0].mxu0 %v576
        %v1479 = vpop.f32.mrb[0].mxu0
        %v1480 = vadd.f32 0.0, %v1479
        %v1481 = vpop.f32.mrb[0].mxu0
        %v1482 = vadd.f32 0.0, %v1481
        %1483 = vmatprep.mubr.f32.mxu0 0.0
        %1484 = vmatmul.mubr.f32.gmra.mrb[0].mxu0 %v579
        %v1485 = vpop.f32.mrb[0].mxu0
        %v1486 = vadd.f32 0.0, %v1485
        %v1487 = vpop.f32.mrb[0].mxu0
        %v1488 = vadd.f32 0.0, %v1487
        %1489 = vmatprep.mubr.f32.mxu0 0.0
        %1490 = vmatmul.mubr.f32.gmra.mrb[0].mxu0 %v582
        %v1491 = vpop.f32.mrb[0].mxu0
        %v1492 = vadd.f32 0.0, %v1491
        %v1493 = vpop.f32.mrb[0].mxu0
        %v1494 = vadd.f32 0.0, %v1493
        %1495 = vmatprep.mubr.f32.mxu0 0.0
        %1496 = vmatmul.mubr.f32.gmra.mrb[0].mxu0 %v585
        %v1497 = vpop.f32.mrb[0].mxu0
        %v1498 = vadd.f32 0.0, %v1497
        %v1499 = vpop.f32.mrb[0].mxu0
        %v1500 = vadd.f32 0.0, %v1499
        %1501 = vmatprep.mubr.f32.mxu0 0.0
        %1502 = vmatmul.mubr.f32.gmra.mrb[0].mxu0 %v588
        %v1503 = vpop.f32.mrb[0].mxu0
        %v1504 = vadd.f32 0.0, %v1503
        %v1505 = vpop.f32.mrb[0].mxu0
        %v1506 = vadd.f32 0.0, %v1505
        %1507 = vmatprep.mubr.f32.mxu0 0.0
        %1508 = vmatmul.mubr.f32.gmra.mrb[0].mxu0 %v591
        %v1509 = vpop.f32.mrb[0].mxu0
        %v1510 = vadd.f32 0.0, %v1509
        %v1511 = vpop.f32.mrb[0].mxu0
        %v1512 = vadd.f32 0.0, %v1511
        %1513 = vmatprep.mubr.f32.mxu0 0.0
        %1514 = vmatmul.mubr.f32.gmra.mrb[0].mxu0 %v594
        %v1515 = vpop.f32.mrb[0].mxu0
        %v1516 = vadd.f32 0.0, %v1515
        %v1517 = vpop.f32.mrb[0].mxu0
        %v1518 = vadd.f32 0.0, %v1517
        %1519 = vmatprep.mubr.f32.mxu0 0.0
        %1520 = vmatmul.mubr.f32.gmra.mrb[0].mxu0 %v597
        %v1521 = vpop.f32.mrb[0].mxu0
        %v1522 = vadd.f32 0.0, %v1521
        %v1523 = vpop.f32.mrb[0].mxu0
        %v1524 = vadd.f32 0.0, %v1523
        %1525 = vmatprep.mubr.f32.mxu0 0.0
        %1526 = vmatmul.mubr.f32.gmra.mrb[0].mxu0 %v600
        %v1527 = vpop.f32.mrb[0].mxu0
        %v1528 = vadd.f32 0.0, %v1527
        %v1529 = vpop.f32.mrb[0].mxu0
        %v1530 = vadd.f32 0.0, %v1529
        %1531 = vmatprep.mubr.f32.mxu0 0.0
        %1532 = vmatmul.mubr.f32.gmra.mrb[0].mxu0 %v603
        %v1533 = vpop.f32.mrb[0].mxu0
        %v1534 = vadd.f32 0.0, %v1533
        %v1535 = vpop.f32.mrb[0].mxu0
        %v1536 = vadd.f32 0.0, %v1535
        %1537 = vmatprep.mubr.f32.mxu0 0.0
        %1538 = vmatmul.mubr.f32.gmra.mrb[0].mxu0 %v606
        %v1539 = vpop.f32.mrb[0].mxu0
        %v1540 = vadd.f32 0.0, %v1539
        %v1541 = vpop.f32.mrb[0].mxu0
        %v1542 = vadd.f32 0.0, %v1541
        %1543 = vmatprep.mubr.f32.mxu0 0.0
        %1544 = vmatmul.mubr.f32.gmra.mrb[0].mxu0 %v609
        %v1545 = vpop.f32.mrb[0].mxu0
        %v1546 = vadd.f32 0.0, %v1545
        %v1547 = vpop.f32.mrb[0].mxu0
        %v1548 = vadd.f32 0.0, %v1547
        %1549 = vmatprep.mubr.f32.mxu0 0.0
        %1550 = vmatmul.mubr.f32.gmra.mrb[0].mxu0 %v612
        %v1551 = vpop.f32.mrb[0].mxu0
        %v1552 = vadd.f32 0.0, %v1551
        %v1553 = vpop.f32.mrb[0].mxu0
        %v1554 = vadd.f32 0.0, %v1553
        %1555 = vmatprep.mubr.f32.mxu0 0.0
        %1556 = vmatmul.mubr.f32.gmra.mrb[0].mxu0 %v1066
        %v1557 = vpop.f32.mrb[0].mxu0
        %v1558 = vadd.f32 0.0, %v1557
        %v1559 = vpop.f32.mrb[0].mxu0
        %v1560 = vadd.f32 0.0, %v1559
        %1561 = vmatprep.mubr.f32.mxu0 0.0
        %1562 = vmatmul.mubr.f32.gmra.mrb[0].mxu0 %v1345
        %v1563 = vpop.f32.mrb[0].mxu0
        %v1564 = vpop.f32.mrb[0].mxu0
        %1565 = vdwg.mxu0
        %v1566 = vadd.f32 %v1287, %v1420
        %v1567 = vadd.f32 %v1288, %v1422
        %v1568 = vadd.f32 %v1289, %v1426
        %v1569 = vadd.f32 %v1290, %v1428
        %v1570 = vadd.f32 %v1291, %v1432
        %v1571 = vadd.f32 %v1292, %v1434
        %v1572 = vadd.f32 %v1293, %v1438
        %v1573 = vadd.f32 %v1294, %v1440
        %v1574 = vadd.f32 %v1295, %v1444
        %v1575 = vadd.f32 %v1296, %v1446
        %v1576 = vadd.f32 %v1297, %v1450
        %v1577 = vadd.f32 %v1298, %v1452
        %v1578 = vadd.f32 %v1299, %v1456
        %v1579 = vadd.f32 %v1300, %v1458
        %v1580 = vadd.f32 %v1301, %v1462
        %v1581 = vadd.f32 %v1302, %v1464
        %v1582 = vadd.f32 %v1303, %v1468
        %v1583 = vadd.f32 %v1304, %v1470
        %v1584 = vadd.f32 %v1305, %v1474
        %v1585 = vadd.f32 %v1306, %v1476
        %v1586 = vadd.f32 %v1307, %v1480
        %v1587 = vadd.f32 %v1308, %v1482
        %v1588 = vadd.f32 %v1309, %v1486
        %v1589 = vadd.f32 %v1310, %v1488
        %v1590 = vadd.f32 %v1311, %v1492
        %v1591 = vadd.f32 %v1312, %v1494
        %v1592 = vadd.f32 %v1313, %v1498
        %v1593 = vadd.f32 %v1314, %v1500
        %v1594 = vadd.f32 %v1315, %v1504
        %v1595 = vadd.f32 %v1316, %v1506
        %v1596 = vadd.f32 %v1317, %v1510
        %v1597 = vadd.f32 %v1318, %v1512
        %v1598 = vadd.f32 %v1319, %v1516
        %v1599 = vadd.f32 %v1320, %v1518
        %v1600 = vadd.f32 %v1321, %v1522
        %v1601 = vadd.f32 %v1322, %v1524
        %v1602 = vadd.f32 %v1323, %v1528
        %v1603 = vadd.f32 %v1324, %v1530
        %v1604 = vadd.f32 %v1325, %v1534
        %v1605 = vadd.f32 %v1326, %v1536
        %v1606 = vadd.f32 %v1327, %v1540
        %v1607 = vadd.f32 %v1328, %v1542
        %v1608 = vadd.f32 %v1329, %v1546
        %v1609 = vadd.f32 %v1330, %v1548
        %v1610 = vadd.f32 %v1331, %v1552
        %v1611 = vadd.f32 %v1332, %v1554
        %v1612 = vadd.f32 %v1333, %v1558
        %v1613 = vadd.f32 %v1334, %v1560
        %v1614 = vld [vmem:[%s2] sm:$0x3]
        %v1616 = vlaneseq
        %v1617 = vshrl.u32 %v1616, 7
        %v1618 = vsub.s32 0, %v1617
        %v1619 = vrot.slane %v1614, %v1618
        %v1620 = vlaneseq
        %v1621 = vshrl.u32 %v1620, 7
        %v1622 = vsub.s32 1, %v1621
        %v1623 = vrot.slane %v1614, %v1622
        %v1626 = vadd.f32 %v1566, %v1619
        %v1627 = vadd.f32 %v1567, %v1623
        %v1628 = vadd.f32 %v1568, %v1619
        %v1629 = vadd.f32 %v1569, %v1623
        %v1630 = vadd.f32 %v1570, %v1619
        %v1631 = vadd.f32 %v1571, %v1623
        %v1632 = vadd.f32 %v1572, %v1619
        %v1633 = vadd.f32 %v1573, %v1623
        %v1634 = vadd.f32 %v1574, %v1619
        %v1635 = vadd.f32 %v1575, %v1623
        %v1636 = vadd.f32 %v1576, %v1619
        %v1637 = vadd.f32 %v1577, %v1623
        %v1638 = vadd.f32 %v1578, %v1619
        %v1639 = vadd.f32 %v1579, %v1623
        %v1640 = vadd.f32 %v1580, %v1619
        %v1641 = vadd.f32 %v1581, %v1623
        %v1642 = vadd.f32 %v1582, %v1619
        %v1643 = vadd.f32 %v1583, %v1623
        %v1644 = vadd.f32 %v1584, %v1619
        %v1645 = vadd.f32 %v1585, %v1623
        %v1646 = vadd.f32 %v1586, %v1619
        %v1647 = vadd.f32 %v1587, %v1623
        %v1648 = vadd.f32 %v1588, %v1619
        %v1649 = vadd.f32 %v1589, %v1623
        %v1650 = vadd.f32 %v1590, %v1619
        %v1651 = vadd.f32 %v1591, %v1623
        %v1652 = vadd.f32 %v1592, %v1619
        %v1653 = vadd.f32 %v1593, %v1623
        %v1654 = vadd.f32 %v1594, %v1619
        %v1655 = vadd.f32 %v1595, %v1623
        %v1656 = vadd.f32 %v1596, %v1619
        %v1657 = vadd.f32 %v1597, %v1623
        %v1658 = vadd.f32 %v1598, %v1619
        %v1659 = vadd.f32 %v1599, %v1623
        %v1660 = vadd.f32 %v1600, %v1619
        %v1661 = vadd.f32 %v1601, %v1623
        %v1662 = vadd.f32 %v1602, %v1619
        %v1663 = vadd.f32 %v1603, %v1623
        %v1664 = vadd.f32 %v1604, %v1619
        %v1665 = vadd.f32 %v1605, %v1623
        %v1666 = vadd.f32 %v1606, %v1619
        %v1667 = vadd.f32 %v1607, %v1623
        %v1668 = vadd.f32 %v1608, %v1619
        %v1669 = vadd.f32 %v1609, %v1623
        %v1670 = vadd.f32 %v1610, %v1619
        %v1671 = vadd.f32 %v1611, %v1623
        %v1672 = vadd.f32 %v1612, %v1619
        %v1673 = vadd.f32 %v1613, %v1623
        %v1674 = vmax.f32 %v1626, 0.0
        %v1675 = vmax.f32 %v1627, 0.0
        %v1676 = vmax.f32 %v1628, 0.0
        %v1677 = vmax.f32 %v1629, 0.0
        %v1678 = vmax.f32 %v1630, 0.0
        %v1679 = vmax.f32 %v1631, 0.0
        %v1680 = vmax.f32 %v1632, 0.0
        %v1681 = vmax.f32 %v1633, 0.0
        %v1682 = vmax.f32 %v1634, 0.0
        %v1683 = vmax.f32 %v1635, 0.0
        %v1684 = vmax.f32 %v1636, 0.0
        %v1685 = vmax.f32 %v1637, 0.0
        %v1686 = vmax.f32 %v1638, 0.0
        %v1687 = vmax.f32 %v1639, 0.0
        %v1688 = vmax.f32 %v1640, 0.0
        %v1689 = vmax.f32 %v1641, 0.0
        %v1690 = vmax.f32 %v1642, 0.0
        %v1691 = vmax.f32 %v1643, 0.0
        %v1692 = vmax.f32 %v1644, 0.0
        %v1693 = vmax.f32 %v1645, 0.0
        %v1694 = vmax.f32 %v1646, 0.0
        %v1695 = vmax.f32 %v1647, 0.0
        %v1696 = vmax.f32 %v1648, 0.0
        %v1697 = vmax.f32 %v1649, 0.0
        %v1698 = vmax.f32 %v1650, 0.0
        %v1699 = vmax.f32 %v1651, 0.0
        %v1700 = vmax.f32 %v1652, 0.0
        %v1701 = vmax.f32 %v1653, 0.0
        %v1702 = vmax.f32 %v1654, 0.0
        %v1703 = vmax.f32 %v1655, 0.0
        %v1704 = vmax.f32 %v1656, 0.0
        %v1705 = vmax.f32 %v1657, 0.0
        %v1706 = vmax.f32 %v1658, 0.0
        %v1707 = vmax.f32 %v1659, 0.0
        %v1708 = vmax.f32 %v1660, 0.0
        %v1709 = vmax.f32 %v1661, 0.0
        %v1710 = vmax.f32 %v1662, 0.0
        %v1711 = vmax.f32 %v1663, 0.0
        %v1712 = vmax.f32 %v1664, 0.0
        %v1713 = vmax.f32 %v1665, 0.0
        %v1714 = vmax.f32 %v1666, 0.0
        %v1715 = vmax.f32 %v1667, 0.0
        %v1716 = vmax.f32 %v1668, 0.0
        %v1717 = vmax.f32 %v1669, 0.0
        %v1718 = vmax.f32 %v1670, 0.0
        %v1719 = vmax.f32 %v1671, 0.0
        %v1720 = vmax.f32 %v1672, 0.0
        %v1721 = vmax.f32 %v1673, 0.0
        %v1722 = vmax.f32 %v1674, %v1676
        %v1723 = vmax.f32 %v1675, %v1677
        %v1724 = vmax.f32 %v1678, %v1680
        %v1725 = vmax.f32 %v1679, %v1681
        %v1726 = vmax.f32 %v1682, %v1684
        %v1727 = vmax.f32 %v1683, %v1685
        %v1728 = vmax.f32 %v1686, %v1688
        %v1729 = vmax.f32 %v1687, %v1689
        %v1730 = vmax.f32 %v1690, %v1692
        %v1731 = vmax.f32 %v1691, %v1693
        %v1732 = vmax.f32 %v1694, %v1696
        %v1733 = vmax.f32 %v1695, %v1697
        %v1734 = vmax.f32 %v1698, %v1700
        %v1735 = vmax.f32 %v1699, %v1701
        %v1736 = vmax.f32 %v1702, %v1704
        %v1737 = vmax.f32 %v1703, %v1705
        %v1738 = vmax.f32 %v1706, %v1708
        %v1739 = vmax.f32 %v1707, %v1709
        %v1740 = vmax.f32 %v1710, %v1712
        %v1741 = vmax.f32 %v1711, %v1713
        %v1742 = vmax.f32 %v1714, %v1716
        %v1743 = vmax.f32 %v1715, %v1717
        %v1744 = vmax.f32 %v1718, %v1720
        %v1745 = vmax.f32 %v1719, %v1721
        %v1746 = vld [vmem:[%s3] sm:$0xff]
        %v1747 = vld [vmem:[%s3 + $0x8] sm:$0xff]
        %v1748 = vld [vmem:[%s3 + $0x10] sm:$0xff]
        %v1749 = vld [vmem:[%s3 + $0x18] sm:$0xff]
        %v1750 = vld [vmem:[%s3 + $0x20] sm:$0xff]
        %v1751 = vld [vmem:[%s3 + $0x28] sm:$0xff]
        %v1752 = vld [vmem:[%s3 + $0x30] sm:$0xff]
        %v1753 = vld [vmem:[%s3 + $0x38] sm:$0xff]
        %v1754 = vld [vmem:[%s3 + $0x40] sm:$0xff]
        %v1755 = vld [vmem:[%s3 + $0x48] sm:$0xff]
        %v1756 = vld [vmem:[%s3 + $0x50] sm:$0xff]
        %v1757 = vld [vmem:[%s3 + $0x58] sm:$0xff]
        %v1758 = vld [vmem:[%s3 + $0x60] sm:$0xff]
        %v1759 = vld [vmem:[%s3 + $0x68] sm:$0xff]
        %v1760 = vld [vmem:[%s3 + $0x70] sm:$0xff]
        %v1761 = vld [vmem:[%s3 + $0x78] sm:$0xff]
        %v1762 = vld [vmem:[%s3 + $0x80] sm:$0xff]
        %v1763 = vld [vmem:[%s3 + $0x88] sm:$0xff]
        %v1764 = vld [vmem:[%s3 + $0x90] sm:$0x3f]
        %vm1765 = vcmask 179200
        %v1767 = vsel %vm1765, %v1723, 0
        %v1770 = vsel %vm1765, %v1725, 0
        %v1773 = vsel %vm1765, %v1727, 0
        %v1776 = vsel %vm1765, %v1729, 0
        %v1779 = vsel %vm1765, %v1731, 0
        %v1782 = vsel %vm1765, %v1733, 0
        %v1785 = vsel %vm1765, %v1735, 0
        %v1788 = vsel %vm1765, %v1737, 0
        %v1791 = vsel %vm1765, %v1739, 0
        %v1794 = vsel %vm1765, %v1741, 0
        %v1797 = vsel %vm1765, %v1743, 0
        %v1800 = vsel %vm1765, %v1745, 0
        %vm1802 = vcmask 1045504
        %v1804 = vsel %vm1802, %v1764, 0
        %1806 = vmatprep.subr.mxu0 0.0
        %1807 = vmatpush1.msra.mxu0 %v1746
        %1808 = vmatprep.subr.mxu0 0.0
        %1809 = vmatpush1.msra.mxu0 %v1747
        %1810 = vmatprep.subr.mxu0 0.0
        %1811 = vmatpush1.msra.mxu0 %v1748
        %1812 = vmatprep.subr.mxu0 0.0
        %1813 = vmatpush1.msra.mxu0 %v1749
        %1814 = vmatprep.subr.mxu0 0.0
        %1815 = vmatpush1.msra.mxu0 %v1750
        %1816 = vmatprep.subr.mxu0 0.0
        %1817 = vmatpush1.msra.mxu0 %v1751
        %1818 = vmatprep.subr.mxu0 0.0
        %1819 = vmatpush1.msra.mxu0 %v1752
        %1820 = vmatprep.subr.mxu0 0.0
        %1821 = vmatpush1.msra.mxu0 %v1753
        %1822 = vmatprep.subr.mxu0 0.0
        %1823 = vmatpush1.msra.mxu0 %v1754
        %1824 = vmatprep.subr.mxu0 0.0
        %1825 = vmatpush1.msra.mxu0 %v1755
        %1826 = vmatprep.subr.mxu0 0.0
        %1827 = vmatpush1.msra.mxu0 %v1756
        %1828 = vmatprep.subr.mxu0 0.0
        %1829 = vmatpush1.msra.mxu0 %v1757
        %1830 = vmatprep.subr.mxu0 0.0
        %1831 = vmatpush1.msra.mxu0 %v1758
        %1832 = vmatprep.subr.mxu0 0.0
        %1833 = vmatpush1.msra.mxu0 %v1759
        %1834 = vmatprep.subr.mxu0 0.0
        %1835 = vmatpush1.msra.mxu0 %v1760
        %1836 = vmatprep.subr.mxu0 0.0
        %1837 = vmatpush1.msra.mxu0 %v1761
        %1838 = vmatprep.subr.mxu0 0.0
        %1839 = vmatpush1.msra.mxu0 %v1762
        %1840 = vmatprep.subr.mxu0 0.0
        %1841 = vmatpush1.msra.mxu0 %v1763
        %1842 = vmatprep.subr.mxu0 0.0
        %1843 = vmatpush1.msra.mxu0 %v1804
        %1844 = vmatprep.subr.mxu0 0.0
        %1845 = vmatpush1.msra.mxu0 0.0
        %1846 = vmatprep.subr.mxu0 0.0
        %1847 = vmatpush1.msra.mxu0 0.0
        %1848 = vmatprep.subr.mxu0 0.0
        %1849 = vmatpush1.msra.mxu0 0.0
        %1850 = vmatprep.subr.mxu0 0.0
        %1851 = vmatpush1.msra.mxu0 0.0
        %1852 = vmatprep.subr.mxu0 0.0
        %1853 = vmatpush1.msra.mxu0 0.0
        %1854 = vmatprep.subr.mxu0 0.0
        %1855 = vmatpush1.msra.mxu0 0.0
        %1856 = vmatprep.subr.mxu0 0.0
        %1857 = vmatpush1.msra.mxu0 0.0
        %1858 = vmatprep.subr.mxu0 0.0
        %1859 = vmatpush1.msra.mxu0 0.0
        %1860 = vmatprep.subr.mxu0 0.0
        %1861 = vmatpush1.msra.mxu0 0.0
        %1862 = vmatprep.subr.mxu0 0.0
        %1863 = vmatpush1.msra.mxu0 0.0
        %1864 = vmatprep.subr.mxu0 0.0
        %1865 = vmatpush1.msra.mxu0 0.0
        %1866 = vmatprep.subr.mxu0 0.0
        %1867 = vmatpush1.msra.mxu0 0.0
        %1868 = vmatprep.subr.mxu0 0.0
        %1869 = vmatpush1.msra.mxu0 0.0
        %1870 = vmatprep.mubr.f32.mxu0 %v1767
        %1871 = vmatmul.mubr.f32.gmra.mrb[0].mxu0 %v1722
        %v1872 = vpop.f32.mrb[0].mxu0
        %v1873 = vadd.f32 0.0, %v1872
        %v1874 = vpop.f32.mrb[0].mxu0
        %1875 = vmatprep.mubr.f32.mxu0 %v1770
        %1876 = vmatmul.mubr.f32.gmra.mrb[0].mxu0 %v1724
        %v1877 = vpop.f32.mrb[0].mxu0
        %v1878 = vadd.f32 0.0, %v1877
        %v1879 = vpop.f32.mrb[0].mxu0
        %1880 = vmatprep.mubr.f32.mxu0 %v1773
        %1881 = vmatmul.mubr.f32.gmra.mrb[0].mxu0 %v1726
        %v1882 = vpop.f32.mrb[0].mxu0
        %v1883 = vadd.f32 0.0, %v1882
        %v1884 = vpop.f32.mrb[0].mxu0
        %1885 = vmatprep.mubr.f32.mxu0 %v1776
        %1886 = vmatmul.mubr.f32.gmra.mrb[0].mxu0 %v1728
        %v1887 = vpop.f32.mrb[0].mxu0
        %v1888 = vadd.f32 0.0, %v1887
        %v1889 = vpop.f32.mrb[0].mxu0
        %1890 = vmatprep.mubr.f32.mxu0 %v1779
        %1891 = vmatmul.mubr.f32.gmra.mrb[0].mxu0 %v1730
        %v1892 = vpop.f32.mrb[0].mxu0
        %v1893 = vadd.f32 0.0, %v1892
        %v1894 = vpop.f32.mrb[0].mxu0
        %1895 = vmatprep.mubr.f32.mxu0 %v1782
        %1896 = vmatmul.mubr.f32.gmra.mrb[0].mxu0 %v1732
        %v1897 = vpop.f32.mrb[0].mxu0
        %v1898 = vadd.f32 0.0, %v1897
        %v1899 = vpop.f32.mrb[0].mxu0
        %1900 = vmatprep.mubr.f32.mxu0 %v1785
        %1901 = vmatmul.mubr.f32.gmra.mrb[0].mxu0 %v1734
        %v1902 = vpop.f32.mrb[0].mxu0
        %v1903 = vadd.f32 0.0, %v1902
        %v1904 = vpop.f32.mrb[0].mxu0
        %1905 = vmatprep.mubr.f32.mxu0 %v1788
        %1906 = vmatmul.mubr.f32.gmra.mrb[0].mxu0 %v1736
        %v1907 = vpop.f32.mrb[0].mxu0
        %v1908 = vadd.f32 0.0, %v1907
        %v1909 = vpop.f32.mrb[0].mxu0
        %1910 = vmatprep.mubr.f32.mxu0 %v1791
        %1911 = vmatmul.mubr.f32.gmra.mrb[0].mxu0 %v1738
        %v1912 = vpop.f32.mrb[0].mxu0
        %v1913 = vadd.f32 0.0, %v1912
        %v1914 = vpop.f32.mrb[0].mxu0
        %1915 = vmatprep.mubr.f32.mxu0 %v1794
        %1916 = vmatmul.mubr.f32.gmra.mrb[0].mxu0 %v1740
        %v1917 = vpop.f32.mrb[0].mxu0
        %v1918 = vadd.f32 0.0, %v1917
        %v1919 = vpop.f32.mrb[0].mxu0
        %1920 = vmatprep.mubr.f32.mxu0 %v1797
        %1921 = vmatmul.mubr.f32.gmra.mrb[0].mxu0 %v1742
        %v1922 = vpop.f32.mrb[0].mxu0
        %v1923 = vadd.f32 0.0, %v1922
        %v1924 = vpop.f32.mrb[0].mxu0
        %1925 = vmatprep.mubr.f32.mxu0 %v1800
        %1926 = vmatmul.mubr.f32.gmra.mrb[0].mxu0 %v1744
        %v1927 = vpop.f32.mrb[0].mxu0
        %v1928 = vadd.f32 0.0, %v1927
        %v1929 = vpop.f32.mrb[0].mxu0
        %1930 = vdwg.mxu0
        %v1931 = vld [vmem:[%s4] sm:$0xff]
        %v1932 = vld [vmem:[%s4 + $0x8] sm:$0xff]
        %v1933 = vld [vmem:[%s4 + $0x10] sm:$0xff]
        %v1934 = vld [vmem:[%s4 + $0x18] sm:$0xff]
        %v1935 = vld [vmem:[%s4 + $0x20] sm:$0xff]
        %v1936 = vld [vmem:[%s4 + $0x28] sm:$0xff]
        %v1937 = vld [vmem:[%s4 + $0x30] sm:$0xff]
        %v1938 = vld [vmem:[%s4 + $0x38] sm:$0xff]
        %v1939 = vld [vmem:[%s4 + $0x40] sm:$0xff]
        %v1940 = vld [vmem:[%s4 + $0x48] sm:$0xff]
        %v1941 = vld [vmem:[%s4 + $0x50] sm:$0xff]
        %v1942 = vld [vmem:[%s4 + $0x58] sm:$0xff]
        %v1943 = vld [vmem:[%s4 + $0x60] sm:$0xff]
        %v1944 = vld [vmem:[%s4 + $0x68] sm:$0xff]
        %v1945 = vld [vmem:[%s4 + $0x70] sm:$0xff]
        %v1946 = vld [vmem:[%s4 + $0x78] sm:$0xff]
        %v1947 = vld [vmem:[%s4 + $0x80] sm:$0xff]
        %v1948 = vld [vmem:[%s4 + $0x88] sm:$0xff]
        %v1949 = vld [vmem:[%s4 + $0x90] sm:$0x3f]
        %v1951 = vsel %vm1802, %v1949, 0
        %1953 = vmatprep.subr.mxu0 0.0
        %1954 = vmatpush1.msra.mxu0 %v1931
        %1955 = vmatprep.subr.mxu0 0.0
        %1956 = vmatpush1.msra.mxu0 %v1932
        %1957 = vmatprep.subr.mxu0 0.0
        %1958 = vmatpush1.msra.mxu0 %v1933
        %1959 = vmatprep.subr.mxu0 0.0
        %1960 = vmatpush1.msra.mxu0 %v1934
        %1961 = vmatprep.subr.mxu0 0.0
        %1962 = vmatpush1.msra.mxu0 %v1935
        %1963 = vmatprep.subr.mxu0 0.0
        %1964 = vmatpush1.msra.mxu0 %v1936
        %1965 = vmatprep.subr.mxu0 0.0
        %1966 = vmatpush1.msra.mxu0 %v1937
        %1967 = vmatprep.subr.mxu0 0.0
        %1968 = vmatpush1.msra.mxu0 %v1938
        %1969 = vmatprep.subr.mxu0 0.0
        %1970 = vmatpush1.msra.mxu0 %v1939
        %1971 = vmatprep.subr.mxu0 0.0
        %1972 = vmatpush1.msra.mxu0 %v1940
        %1973 = vmatprep.subr.mxu0 0.0
        %1974 = vmatpush1.msra.mxu0 %v1941
        %1975 = vmatprep.subr.mxu0 0.0
        %1976 = vmatpush1.msra.mxu0 %v1942
        %1977 = vmatprep.subr.mxu0 0.0
        %1978 = vmatpush1.msra.mxu0 %v1943
        %1979 = vmatprep.subr.mxu0 0.0
        %1980 = vmatpush1.msra.mxu0 %v1944
        %1981 = vmatprep.subr.mxu0 0.0
        %1982 = vmatpush1.msra.mxu0 %v1945
        %1983 = vmatprep.subr.mxu0 0.0
        %1984 = vmatpush1.msra.mxu0 %v1946
        %1985 = vmatprep.subr.mxu0 0.0
        %1986 = vmatpush1.msra.mxu0 %v1947
        %1987 = vmatprep.subr.mxu0 0.0
        %1988 = vmatpush1.msra.mxu0 %v1948
        %1989 = vmatprep.subr.mxu0 0.0
        %1990 = vmatpush1.msra.mxu0 %v1951
        %1991 = vmatprep.subr.mxu0 0.0
        %1992 = vmatpush1.msra.mxu0 0.0
        %1993 = vmatprep.subr.mxu0 0.0
        %1994 = vmatpush1.msra.mxu0 0.0
        %1995 = vmatprep.subr.mxu0 0.0
        %1996 = vmatpush1.msra.mxu0 0.0
        %1997 = vmatprep.subr.mxu0 0.0
        %1998 = vmatpush1.msra.mxu0 0.0
        %1999 = vmatprep.subr.mxu0 0.0
        %2000 = vmatpush1.msra.mxu0 0.0
        %2001 = vmatprep.subr.mxu0 0.0
        %2002 = vmatpush1.msra.mxu0 0.0
        %2003 = vmatprep.subr.mxu0 0.0
        %2004 = vmatpush1.msra.mxu0 0.0
        %2005 = vmatprep.subr.mxu0 0.0
        %2006 = vmatpush1.msra.mxu0 0.0
        %2007 = vmatprep.subr.mxu0 0.0
        %2008 = vmatpush1.msra.mxu0 0.0
        %2009 = vmatprep.subr.mxu0 0.0
        %2010 = vmatpush1.msra.mxu0 0.0
        %2011 = vmatprep.subr.mxu0 0.0
        %2012 = vmatpush1.msra.mxu0 0.0
        %2013 = vmatprep.subr.mxu0 0.0
        %2014 = vmatpush1.msra.mxu0 0.0
        %2015 = vmatprep.subr.mxu0 0.0
        %2016 = vmatpush1.msra.mxu0 0.0
        %2017 = vmatprep.mubr.f32.mxu0 %v1767
        %2018 = vmatmul.mubr.f32.gmra.mrb[0].mxu0 %v1722
        %v2019 = vpop.f32.mrb[0].mxu0
        %v2020 = vadd.f32 0.0, %v2019
        %v2021 = vpop.f32.mrb[0].mxu0
        %2022 = vmatprep.mubr.f32.mxu0 %v1770
        %2023 = vmatmul.mubr.f32.gmra.mrb[0].mxu0 %v1724
        %v2024 = vpop.f32.mrb[0].mxu0
        %v2025 = vadd.f32 0.0, %v2024
        %v2026 = vpop.f32.mrb[0].mxu0
        %2027 = vmatprep.mubr.f32.mxu0 %v1773
        %2028 = vmatmul.mubr.f32.gmra.mrb[0].mxu0 %v1726
        %v2029 = vpop.f32.mrb[0].mxu0
        %v2030 = vadd.f32 0.0, %v2029
        %v2031 = vpop.f32.mrb[0].mxu0
        %2032 = vmatprep.mubr.f32.mxu0 %v1776
        %2033 = vmatmul.mubr.f32.gmra.mrb[0].mxu0 %v1728
        %v2034 = vpop.f32.mrb[0].mxu0
        %v2035 = vadd.f32 0.0, %v2034
        %v2036 = vpop.f32.mrb[0].mxu0
        %2037 = vmatprep.mubr.f32.mxu0 %v1779
        %2038 = vmatmul.mubr.f32.gmra.mrb[0].mxu0 %v1730
        %v2039 = vpop.f32.mrb[0].mxu0
        %v2040 = vadd.f32 0.0, %v2039
        %v2041 = vpop.f32.mrb[0].mxu0
        %2042 = vmatprep.mubr.f32.mxu0 %v1782
        %2043 = vmatmul.mubr.f32.gmra.mrb[0].mxu0 %v1732
        %v2044 = vpop.f32.mrb[0].mxu0
        %v2045 = vadd.f32 0.0, %v2044
        %v2046 = vpop.f32.mrb[0].mxu0
        %2047 = vmatprep.mubr.f32.mxu0 %v1785
        %2048 = vmatmul.mubr.f32.gmra.mrb[0].mxu0 %v1734
        %v2049 = vpop.f32.mrb[0].mxu0
        %v2050 = vadd.f32 0.0, %v2049
        %v2051 = vpop.f32.mrb[0].mxu0
        %2052 = vmatprep.mubr.f32.mxu0 %v1788
        %2053 = vmatmul.mubr.f32.gmra.mrb[0].mxu0 %v1736
        %v2054 = vpop.f32.mrb[0].mxu0
        %v2055 = vadd.f32 0.0, %v2054
        %v2056 = vpop.f32.mrb[0].mxu0
        %2057 = vmatprep.mubr.f32.mxu0 %v1791
        %2058 = vmatmul.mubr.f32.gmra.mrb[0].mxu0 %v1738
        %v2059 = vpop.f32.mrb[0].mxu0
        %v2060 = vadd.f32 0.0, %v2059
        %v2061 = vpop.f32.mrb[0].mxu0
        %2062 = vmatprep.mubr.f32.mxu0 %v1794
        %2063 = vmatmul.mubr.f32.gmra.mrb[0].mxu0 %v1740
        %v2064 = vpop.f32.mrb[0].mxu0
        %v2065 = vadd.f32 0.0, %v2064
        %v2066 = vpop.f32.mrb[0].mxu0
        %2067 = vmatprep.mubr.f32.mxu0 %v1797
        %2068 = vmatmul.mubr.f32.gmra.mrb[0].mxu0 %v1742
        %v2069 = vpop.f32.mrb[0].mxu0
        %v2070 = vadd.f32 0.0, %v2069
        %v2071 = vpop.f32.mrb[0].mxu0
        %2072 = vmatprep.mubr.f32.mxu0 %v1800
        %2073 = vmatmul.mubr.f32.gmra.mrb[0].mxu0 %v1744
        %v2074 = vpop.f32.mrb[0].mxu0
        %v2075 = vadd.f32 0.0, %v2074
        %v2076 = vpop.f32.mrb[0].mxu0
        %2077 = vdwg.mxu0
        %v2078 = vmax.f32 %v1873, %v2020
        %v2079 = vmax.f32 %v1878, %v2025
        %v2080 = vmax.f32 %v1883, %v2030
        %v2081 = vmax.f32 %v1888, %v2035
        %v2082 = vmax.f32 %v1893, %v2040
        %v2083 = vmax.f32 %v1898, %v2045
        %v2084 = vmax.f32 %v1903, %v2050
        %v2085 = vmax.f32 %v1908, %v2055
        %v2086 = vmax.f32 %v1913, %v2060
        %v2087 = vmax.f32 %v1918, %v2065
        %v2088 = vmax.f32 %v1923, %v2070
        %v2089 = vmax.f32 %v1928, %v2075
        %v2090 = vld [vmem:[%s5] sm:$0xff]
        %v2091 = vld [vmem:[%s5 + $0x8] sm:$0xff]
        %v2092 = vld [vmem:[%s5 + $0x10] sm:$0xff]
        %v2093 = vld [vmem:[%s5 + $0x18] sm:$0xff]
        %v2094 = vld [vmem:[%s5 + $0x20] sm:$0xff]
        %v2095 = vld [vmem:[%s5 + $0x28] sm:$0xff]
        %v2096 = vld [vmem:[%s5 + $0x30] sm:$0xff]
        %v2097 = vld [vmem:[%s5 + $0x38] sm:$0xff]
        %v2098 = vld [vmem:[%s5 + $0x40] sm:$0xff]
        %v2099 = vld [vmem:[%s5 + $0x48] sm:$0xff]
        %v2100 = vld [vmem:[%s5 + $0x50] sm:$0xff]
        %v2101 = vld [vmem:[%s5 + $0x58] sm:$0xff]
        %v2102 = vld [vmem:[%s5 + $0x60] sm:$0xff]
        %v2103 = vld [vmem:[%s5 + $0x68] sm:$0xff]
        %v2104 = vld [vmem:[%s5 + $0x70] sm:$0xff]
        %v2105 = vld [vmem:[%s5 + $0x78] sm:$0xff]
        %v2106 = vld [vmem:[%s5 + $0x80] sm:$0xff]
        %v2107 = vld [vmem:[%s5 + $0x88] sm:$0xff]
        %s2108 = scalar_lea.vmem %s5, 144
        %v2109 = vld [vmem:[%s2108] sm:$0xff]
        %v2110 = vld [vmem:[%s2108 + $0x8] sm:$0xff]
        %v2111 = vld [vmem:[%s2108 + $0x10] sm:$0xff]
        %v2112 = vld [vmem:[%s2108 + $0x18] sm:$0xff]
        %v2113 = vld [vmem:[%s2108 + $0x20] sm:$0xff]
        %v2114 = vld [vmem:[%s2108 + $0x28] sm:$0xff]
        %v2115 = vld [vmem:[%s2108 + $0x30] sm:$0xff]
        %v2116 = vld [vmem:[%s2108 + $0x38] sm:$0xff]
        %v2117 = vld [vmem:[%s2108 + $0x40] sm:$0xff]
        %v2118 = vld [vmem:[%s2108 + $0x48] sm:$0xff]
        %v2119 = vld [vmem:[%s2108 + $0x50] sm:$0xff]
        %v2120 = vld [vmem:[%s2108 + $0x58] sm:$0xff]
        %v2121 = vld [vmem:[%s2108 + $0x60] sm:$0xff]
        %v2122 = vld [vmem:[%s2108 + $0x68] sm:$0xff]
        %v2123 = vld [vmem:[%s2108 + $0x70] sm:$0xff]
        %v2124 = vld [vmem:[%s2108 + $0x78] sm:$0xff]
        %v2125 = vld [vmem:[%s2108 + $0x80] sm:$0xff]
        %v2126 = vld [vmem:[%s2108 + $0x88] sm:$0xff]
        %vm2127 = vcmask 588800
        %v2129 = vsel %vm2127, %v2079, 0
        %v2132 = vsel %vm2127, %v2080, 0
        %v2135 = vsel %vm2127, %v2081, 0
        %v2138 = vsel %vm2127, %v2082, 0
        %v2141 = vsel %vm2127, %v2083, 0
        %v2144 = vsel %vm2127, %v2084, 0
        %v2147 = vsel %vm2127, %v2085, 0
        %v2150 = vsel %vm2127, %v2086, 0
        %v2153 = vsel %vm2127, %v2087, 0
        %2155 = vmatprep.subr.mxu0 %v2110
        %2156 = vmatpush1.msra.mxu0 %v2109
        %2157 = vmatprep.subr.mxu0 %v2112
        %2158 = vmatpush1.msra.mxu0 %v2111
        %2159 = vmatprep.subr.mxu0 %v2114
        %2160 = vmatpush1.msra.mxu0 %v2113
        %2161 = vmatprep.subr.mxu0 %v2116
        %2162 = vmatpush1.msra.mxu0 %v2115
        %2163 = vmatprep.subr.mxu0 %v2118
        %2164 = vmatpush1.msra.mxu0 %v2117
        %2165 = vmatprep.subr.mxu0 %v2120
        %2166 = vmatpush1.msra.mxu0 %v2119
        %2167 = vmatprep.subr.mxu0 %v2122
        %2168 = vmatpush1.msra.mxu0 %v2121
        %2169 = vmatprep.subr.mxu0 %v2124
        %2170 = vmatpush1.msra.mxu0 %v2123
        %2171 = vmatprep.subr.mxu0 %v2126
        %2172 = vmatpush1.msra.mxu0 %v2125
        %2173 = vmatprep.subr.mxu0 0.0
        %2174 = vmatpush1.msra.mxu0 0.0
        %2175 = vmatprep.subr.mxu0 0.0
        %2176 = vmatpush1.msra.mxu0 0.0
        %2177 = vmatprep.subr.mxu0 0.0
        %2178 = vmatpush1.msra.mxu0 0.0
        %2179 = vmatprep.subr.mxu0 0.0
        %2180 = vmatpush1.msra.mxu0 0.0
        %2181 = vmatprep.subr.mxu0 0.0
        %2182 = vmatpush1.msra.mxu0 0.0
        %2183 = vmatprep.subr.mxu0 0.0
        %2184 = vmatpush1.msra.mxu0 0.0
        %2185 = vmatprep.subr.mxu0 0.0
        %2186 = vmatpush1.msra.mxu0 0.0
        %2187 = vmatprep.subr.mxu0 0.0
        %2188 = vmatpush1.msra.mxu0 0.0
        %2189 = vmatprep.subr.mxu0 0.0
        %2190 = vmatpush1.msra.mxu0 0.0
        %2191 = vmatprep.subr.mxu0 0.0
        %2192 = vmatpush1.msra.mxu0 0.0
        %2193 = vmatprep.subr.mxu0 0.0
        %2194 = vmatpush1.msra.mxu0 0.0
        %2195 = vmatprep.subr.mxu0 0.0
        %2196 = vmatpush1.msra.mxu0 0.0
        %2197 = vmatprep.subr.mxu0 0.0
        %2198 = vmatpush1.msra.mxu0 0.0
        %2199 = vmatprep.subr.mxu0 0.0
        %2200 = vmatpush1.msra.mxu0 0.0
        %2201 = vmatprep.subr.mxu0 0.0
        %2202 = vmatpush1.msra.mxu0 0.0
        %2203 = vmatprep.subr.mxu0 0.0
        %2204 = vmatpush1.msra.mxu0 0.0
        %2205 = vmatprep.subr.mxu0 0.0
        %2206 = vmatpush1.msra.mxu0 0.0
        %2207 = vmatprep.subr.mxu0 0.0
        %2208 = vmatpush1.msra.mxu0 0.0
        %2209 = vmatprep.subr.mxu0 0.0
        %2210 = vmatpush1.msra.mxu0 0.0
        %2211 = vmatprep.subr.mxu0 0.0
        %2212 = vmatpush1.msra.mxu0 0.0
        %2213 = vmatprep.subr.mxu0 0.0
        %2214 = vmatpush1.msra.mxu0 0.0
        %2215 = vmatprep.subr.mxu0 0.0
        %2216 = vmatpush1.msra.mxu0 0.0
        %2217 = vmatprep.subr.mxu0 0.0
        %2218 = vmatpush1.msra.mxu0 0.0
        %2219 = vmatprep.mubr.f32.mxu0 0.0
        %2220 = vmatmul.mubr.f32.gmra.mrb[0].mxu0 %v2129
        %v2221 = vpop.f32.mrb[0].mxu0
        %v2222 = vadd.f32 0.0, %v2221
        %v2223 = vpop.f32.mrb[0].mxu0
        %v2224 = vadd.f32 0.0, %v2223
        %2225 = vmatprep.mubr.f32.mxu0 0.0
        %2226 = vmatmul.mubr.f32.gmra.mrb[0].mxu0 %v2132
        %v2227 = vpop.f32.mrb[0].mxu0
        %v2228 = vadd.f32 0.0, %v2227
        %v2229 = vpop.f32.mrb[0].mxu0
        %v2230 = vadd.f32 0.0, %v2229
        %2231 = vmatprep.mubr.f32.mxu0 0.0
        %2232 = vmatmul.mubr.f32.gmra.mrb[0].mxu0 %v2135
        %v2233 = vpop.f32.mrb[0].mxu0
        %v2234 = vadd.f32 0.0, %v2233
        %v2235 = vpop.f32.mrb[0].mxu0
        %v2236 = vadd.f32 0.0, %v2235
        %2237 = vmatprep.mubr.f32.mxu0 0.0
        %2238 = vmatmul.mubr.f32.gmra.mrb[0].mxu0 %v2138
        %v2239 = vpop.f32.mrb[0].mxu0
        %v2240 = vadd.f32 0.0, %v2239
        %v2241 = vpop.f32.mrb[0].mxu0
        %v2242 = vadd.f32 0.0, %v2241
        %2243 = vmatprep.mubr.f32.mxu0 0.0
        %2244 = vmatmul.mubr.f32.gmra.mrb[0].mxu0 %v2141
        %v2245 = vpop.f32.mrb[0].mxu0
        %v2246 = vadd.f32 0.0, %v2245
        %v2247 = vpop.f32.mrb[0].mxu0
        %v2248 = vadd.f32 0.0, %v2247
        %2249 = vmatprep.mubr.f32.mxu0 0.0
        %2250 = vmatmul.mubr.f32.gmra.mrb[0].mxu0 %v2144
        %v2251 = vpop.f32.mrb[0].mxu0
        %v2252 = vadd.f32 0.0, %v2251
        %v2253 = vpop.f32.mrb[0].mxu0
        %v2254 = vadd.f32 0.0, %v2253
        %2255 = vmatprep.mubr.f32.mxu0 0.0
        %2256 = vmatmul.mubr.f32.gmra.mrb[0].mxu0 %v2147
        %v2257 = vpop.f32.mrb[0].mxu0
        %v2258 = vadd.f32 0.0, %v2257
        %v2259 = vpop.f32.mrb[0].mxu0
        %v2260 = vadd.f32 0.0, %v2259
        %2261 = vmatprep.mubr.f32.mxu0 0.0
        %2262 = vmatmul.mubr.f32.gmra.mrb[0].mxu0 %v2150
        %v2263 = vpop.f32.mrb[0].mxu0
        %v2264 = vadd.f32 0.0, %v2263
        %v2265 = vpop.f32.mrb[0].mxu0
        %v2266 = vadd.f32 0.0, %v2265
        %2267 = vmatprep.mubr.f32.mxu0 0.0
        %2268 = vmatmul.mubr.f32.gmra.mrb[0].mxu0 %v2153
        %v2269 = vpop.f32.mrb[0].mxu0
        %v2270 = vpop.f32.mrb[0].mxu0
        %2271 = vdwg.mxu0
        %v2273 = vsel %vm2127, %v2078, 0
        %2275 = vmatprep.subr.mxu0 %v2091
        %2276 = vmatpush1.msra.mxu0 %v2090
        %2277 = vmatprep.subr.mxu0 %v2093
        %2278 = vmatpush1.msra.mxu0 %v2092
        %2279 = vmatprep.subr.mxu0 %v2095
        %2280 = vmatpush1.msra.mxu0 %v2094
        %2281 = vmatprep.subr.mxu0 %v2097
        %2282 = vmatpush1.msra.mxu0 %v2096
        %2283 = vmatprep.subr.mxu0 %v2099
        %2284 = vmatpush1.msra.mxu0 %v2098
        %2285 = vmatprep.subr.mxu0 %v2101
        %2286 = vmatpush1.msra.mxu0 %v2100
        %2287 = vmatprep.subr.mxu0 %v2103
        %2288 = vmatpush1.msra.mxu0 %v2102
        %2289 = vmatprep.subr.mxu0 %v2105
        %2290 = vmatpush1.msra.mxu0 %v2104
        %2291 = vmatprep.subr.mxu0 %v2107
        %2292 = vmatpush1.msra.mxu0 %v2106
        %2293 = vmatprep.subr.mxu0 0.0
        %2294 = vmatpush1.msra.mxu0 0.0
        %2295 = vmatprep.subr.mxu0 0.0
        %2296 = vmatpush1.msra.mxu0 0.0
        %2297 = vmatprep.subr.mxu0 0.0
        %2298 = vmatpush1.msra.mxu0 0.0
        %2299 = vmatprep.subr.mxu0 0.0
        %2300 = vmatpush1.msra.mxu0 0.0
        %2301 = vmatprep.subr.mxu0 0.0
        %2302 = vmatpush1.msra.mxu0 0.0
        %2303 = vmatprep.subr.mxu0 0.0
        %2304 = vmatpush1.msra.mxu0 0.0
        %2305 = vmatprep.subr.mxu0 0.0
        %2306 = vmatpush1.msra.mxu0 0.0
        %2307 = vmatprep.subr.mxu0 0.0
        %2308 = vmatpush1.msra.mxu0 0.0
        %2309 = vmatprep.subr.mxu0 0.0
        %2310 = vmatpush1.msra.mxu0 0.0
        %2311 = vmatprep.subr.mxu0 0.0
        %2312 = vmatpush1.msra.mxu0 0.0
        %2313 = vmatprep.subr.mxu0 0.0
        %2314 = vmatpush1.msra.mxu0 0.0
        %2315 = vmatprep.subr.mxu0 0.0
        %2316 = vmatpush1.msra.mxu0 0.0
        %2317 = vmatprep.subr.mxu0 0.0
        %2318 = vmatpush1.msra.mxu0 0.0
        %2319 = vmatprep.subr.mxu0 0.0
        %2320 = vmatpush1.msra.mxu0 0.0
        %2321 = vmatprep.subr.mxu0 0.0
        %2322 = vmatpush1.msra.mxu0 0.0
        %2323 = vmatprep.subr.mxu0 0.0
        %2324 = vmatpush1.msra.mxu0 0.0
        %2325 = vmatprep.subr.mxu0 0.0
        %2326 = vmatpush1.msra.mxu0 0.0
        %2327 = vmatprep.subr.mxu0 0.0
        %2328 = vmatpush1.msra.mxu0 0.0
        %2329 = vmatprep.subr.mxu0 0.0
        %2330 = vmatpush1.msra.mxu0 0.0
        %2331 = vmatprep.subr.mxu0 0.0
        %2332 = vmatpush1.msra.mxu0 0.0
        %2333 = vmatprep.subr.mxu0 0.0
        %2334 = vmatpush1.msra.mxu0 0.0
        %2335 = vmatprep.subr.mxu0 0.0
        %2336 = vmatpush1.msra.mxu0 0.0
        %2337 = vmatprep.subr.mxu0 0.0
        %2338 = vmatpush1.msra.mxu0 0.0
        %2339 = vmatprep.mubr.f32.mxu0 0.0
        %2340 = vmatmul.mubr.f32.gmra.mrb[0].mxu0 %v2273
        %v2341 = vpop.f32.mrb[0].mxu0
        %v2342 = vadd.f32 %v2222, %v2341
        %v2343 = vpop.f32.mrb[0].mxu0
        %v2344 = vadd.f32 %v2224, %v2343
        %2345 = vmatprep.mubr.f32.mxu0 0.0
        %2346 = vmatmul.mubr.f32.gmra.mrb[0].mxu0 %v2129
        %v2347 = vpop.f32.mrb[0].mxu0
        %v2348 = vadd.f32 %v2228, %v2347
        %v2349 = vpop.f32.mrb[0].mxu0
        %v2350 = vadd.f32 %v2230, %v2349
        %2351 = vmatprep.mubr.f32.mxu0 0.0
        %2352 = vmatmul.mubr.f32.gmra.mrb[0].mxu0 %v2132
        %v2353 = vpop.f32.mrb[0].mxu0
        %v2354 = vadd.f32 %v2234, %v2353
        %v2355 = vpop.f32.mrb[0].mxu0
        %v2356 = vadd.f32 %v2236, %v2355
        %2357 = vmatprep.mubr.f32.mxu0 0.0
        %2358 = vmatmul.mubr.f32.gmra.mrb[0].mxu0 %v2135
        %v2359 = vpop.f32.mrb[0].mxu0
        %v2360 = vadd.f32 %v2240, %v2359
        %v2361 = vpop.f32.mrb[0].mxu0
        %v2362 = vadd.f32 %v2242, %v2361
        %2363 = vmatprep.mubr.f32.mxu0 0.0
        %2364 = vmatmul.mubr.f32.gmra.mrb[0].mxu0 %v2138
        %v2365 = vpop.f32.mrb[0].mxu0
        %v2366 = vadd.f32 %v2246, %v2365
        %v2367 = vpop.f32.mrb[0].mxu0
        %v2368 = vadd.f32 %v2248, %v2367
        %2369 = vmatprep.mubr.f32.mxu0 0.0
        %2370 = vmatmul.mubr.f32.gmra.mrb[0].mxu0 %v2141
        %v2371 = vpop.f32.mrb[0].mxu0
        %v2372 = vadd.f32 %v2252, %v2371
        %v2373 = vpop.f32.mrb[0].mxu0
        %v2374 = vadd.f32 %v2254, %v2373
        %2375 = vmatprep.mubr.f32.mxu0 0.0
        %2376 = vmatmul.mubr.f32.gmra.mrb[0].mxu0 %v2144
        %v2377 = vpop.f32.mrb[0].mxu0
        %v2378 = vadd.f32 %v2258, %v2377
        %v2379 = vpop.f32.mrb[0].mxu0
        %v2380 = vadd.f32 %v2260, %v2379
        %2381 = vmatprep.mubr.f32.mxu0 0.0
        %2382 = vmatmul.mubr.f32.gmra.mrb[0].mxu0 %v2147
        %v2383 = vpop.f32.mrb[0].mxu0
        %v2384 = vadd.f32 %v2264, %v2383
        %v2385 = vpop.f32.mrb[0].mxu0
        %v2386 = vadd.f32 %v2266, %v2385
        %2387 = vmatprep.mubr.f32.mxu0 0.0
        %2388 = vmatmul.mubr.f32.gmra.mrb[0].mxu0 %v2150
        %v2389 = vpop.f32.mrb[0].mxu0
        %v2390 = vpop.f32.mrb[0].mxu0
        %2391 = vdwg.mxu0
        %s2392 = scalar_lea.vmem %s5, 288
        %v2393 = vld [vmem:[%s2392] sm:$0xff]
        %v2394 = vld [vmem:[%s2392 + $0x8] sm:$0xff]
        %v2395 = vld [vmem:[%s2392 + $0x10] sm:$0xff]
        %v2396 = vld [vmem:[%s2392 + $0x18] sm:$0xff]
        %v2397 = vld [vmem:[%s2392 + $0x20] sm:$0xff]
        %v2398 = vld [vmem:[%s2392 + $0x28] sm:$0xff]
        %v2399 = vld [vmem:[%s2392 + $0x30] sm:$0xff]
        %v2400 = vld [vmem:[%s2392 + $0x38] sm:$0xff]
        %v2401 = vld [vmem:[%s2392 + $0x40] sm:$0xff]
        %v2402 = vld [vmem:[%s2392 + $0x48] sm:$0xff]
        %v2403 = vld [vmem:[%s2392 + $0x50] sm:$0xff]
        %v2404 = vld [vmem:[%s2392 + $0x58] sm:$0xff]
        %v2405 = vld [vmem:[%s2392 + $0x60] sm:$0xff]
        %v2406 = vld [vmem:[%s2392 + $0x68] sm:$0xff]
        %v2407 = vld [vmem:[%s2392 + $0x70] sm:$0xff]
        %v2408 = vld [vmem:[%s2392 + $0x78] sm:$0xff]
        %v2409 = vld [vmem:[%s2392 + $0x80] sm:$0xff]
        %v2410 = vld [vmem:[%s2392 + $0x88] sm:$0xff]
        %v2412 = vsel %vm2127, %v2088, 0
        %2414 = vmatprep.subr.mxu0 %v2394
        %2415 = vmatpush1.msra.mxu0 %v2393
        %2416 = vmatprep.subr.mxu0 %v2396
        %2417 = vmatpush1.msra.mxu0 %v2395
        %2418 = vmatprep.subr.mxu0 %v2398
        %2419 = vmatpush1.msra.mxu0 %v2397
        %2420 = vmatprep.subr.mxu0 %v2400
        %2421 = vmatpush1.msra.mxu0 %v2399
        %2422 = vmatprep.subr.mxu0 %v2402
        %2423 = vmatpush1.msra.mxu0 %v2401
        %2424 = vmatprep.subr.mxu0 %v2404
        %2425 = vmatpush1.msra.mxu0 %v2403
        %2426 = vmatprep.subr.mxu0 %v2406
        %2427 = vmatpush1.msra.mxu0 %v2405
        %2428 = vmatprep.subr.mxu0 %v2408
        %2429 = vmatpush1.msra.mxu0 %v2407
        %2430 = vmatprep.subr.mxu0 %v2410
        %2431 = vmatpush1.msra.mxu0 %v2409
        %2432 = vmatprep.subr.mxu0 0.0
        %2433 = vmatpush1.msra.mxu0 0.0
        %2434 = vmatprep.subr.mxu0 0.0
        %2435 = vmatpush1.msra.mxu0 0.0
        %2436 = vmatprep.subr.mxu0 0.0
        %2437 = vmatpush1.msra.mxu0 0.0
        %2438 = vmatprep.subr.mxu0 0.0
        %2439 = vmatpush1.msra.mxu0 0.0
        %2440 = vmatprep.subr.mxu0 0.0
        %2441 = vmatpush1.msra.mxu0 0.0
        %2442 = vmatprep.subr.mxu0 0.0
        %2443 = vmatpush1.msra.mxu0 0.0
        %2444 = vmatprep.subr.mxu0 0.0
        %2445 = vmatpush1.msra.mxu0 0.0
        %2446 = vmatprep.subr.mxu0 0.0
        %2447 = vmatpush1.msra.mxu0 0.0
        %2448 = vmatprep.subr.mxu0 0.0
        %2449 = vmatpush1.msra.mxu0 0.0
        %2450 = vmatprep.subr.mxu0 0.0
        %2451 = vmatpush1.msra.mxu0 0.0
        %2452 = vmatprep.subr.mxu0 0.0
        %2453 = vmatpush1.msra.mxu0 0.0
        %2454 = vmatprep.subr.mxu0 0.0
        %2455 = vmatpush1.msra.mxu0 0.0
        %2456 = vmatprep.subr.mxu0 0.0
        %2457 = vmatpush1.msra.mxu0 0.0
        %2458 = vmatprep.subr.mxu0 0.0
        %2459 = vmatpush1.msra.mxu0 0.0
        %2460 = vmatprep.subr.mxu0 0.0
        %2461 = vmatpush1.msra.mxu0 0.0
        %2462 = vmatprep.subr.mxu0 0.0
        %2463 = vmatpush1.msra.mxu0 0.0
        %2464 = vmatprep.subr.mxu0 0.0
        %2465 = vmatpush1.msra.mxu0 0.0
        %2466 = vmatprep.subr.mxu0 0.0
        %2467 = vmatpush1.msra.mxu0 0.0
        %2468 = vmatprep.subr.mxu0 0.0
        %2469 = vmatpush1.msra.mxu0 0.0
        %2470 = vmatprep.subr.mxu0 0.0
        %2471 = vmatpush1.msra.mxu0 0.0
        %2472 = vmatprep.subr.mxu0 0.0
        %2473 = vmatpush1.msra.mxu0 0.0
        %2474 = vmatprep.subr.mxu0 0.0
        %2475 = vmatpush1.msra.mxu0 0.0
        %2476 = vmatprep.subr.mxu0 0.0
        %2477 = vmatpush1.msra.mxu0 0.0
        %2478 = vmatprep.mubr.f32.mxu0 0.0
        %2479 = vmatmul.mubr.f32.gmra.mrb[0].mxu0 %v2132
        %v2480 = vpop.f32.mrb[0].mxu0
        %v2481 = vadd.f32 0.0, %v2480
        %v2482 = vpop.f32.mrb[0].mxu0
        %v2483 = vadd.f32 0.0, %v2482
        %2484 = vmatprep.mubr.f32.mxu0 0.0
        %2485 = vmatmul.mubr.f32.gmra.mrb[0].mxu0 %v2135
        %v2486 = vpop.f32.mrb[0].mxu0
        %v2487 = vadd.f32 0.0, %v2486
        %v2488 = vpop.f32.mrb[0].mxu0
        %v2489 = vadd.f32 0.0, %v2488
        %2490 = vmatprep.mubr.f32.mxu0 0.0
        %2491 = vmatmul.mubr.f32.gmra.mrb[0].mxu0 %v2138
        %v2492 = vpop.f32.mrb[0].mxu0
        %v2493 = vadd.f32 0.0, %v2492
        %v2494 = vpop.f32.mrb[0].mxu0
        %v2495 = vadd.f32 0.0, %v2494
        %2496 = vmatprep.mubr.f32.mxu0 0.0
        %2497 = vmatmul.mubr.f32.gmra.mrb[0].mxu0 %v2141
        %v2498 = vpop.f32.mrb[0].mxu0
        %v2499 = vadd.f32 0.0, %v2498
        %v2500 = vpop.f32.mrb[0].mxu0
        %v2501 = vadd.f32 0.0, %v2500
        %2502 = vmatprep.mubr.f32.mxu0 0.0
        %2503 = vmatmul.mubr.f32.gmra.mrb[0].mxu0 %v2144
        %v2504 = vpop.f32.mrb[0].mxu0
        %v2505 = vadd.f32 0.0, %v2504
        %v2506 = vpop.f32.mrb[0].mxu0
        %v2507 = vadd.f32 0.0, %v2506
        %2508 = vmatprep.mubr.f32.mxu0 0.0
        %2509 = vmatmul.mubr.f32.gmra.mrb[0].mxu0 %v2147
        %v2510 = vpop.f32.mrb[0].mxu0
        %v2511 = vadd.f32 0.0, %v2510
        %v2512 = vpop.f32.mrb[0].mxu0
        %v2513 = vadd.f32 0.0, %v2512
        %2514 = vmatprep.mubr.f32.mxu0 0.0
        %2515 = vmatmul.mubr.f32.gmra.mrb[0].mxu0 %v2150
        %v2516 = vpop.f32.mrb[0].mxu0
        %v2517 = vadd.f32 0.0, %v2516
        %v2518 = vpop.f32.mrb[0].mxu0
        %v2519 = vadd.f32 0.0, %v2518
        %2520 = vmatprep.mubr.f32.mxu0 0.0
        %2521 = vmatmul.mubr.f32.gmra.mrb[0].mxu0 %v2153
        %v2522 = vpop.f32.mrb[0].mxu0
        %v2523 = vadd.f32 0.0, %v2522
        %v2524 = vpop.f32.mrb[0].mxu0
        %v2525 = vadd.f32 0.0, %v2524
        %2526 = vmatprep.mubr.f32.mxu0 0.0
        %2527 = vmatmul.mubr.f32.gmra.mrb[0].mxu0 %v2412
        %v2528 = vpop.f32.mrb[0].mxu0
        %v2529 = vpop.f32.mrb[0].mxu0
        %2530 = vdwg.mxu0
        %v2531 = vadd.f32 %v2342, %v2481
        %v2532 = vadd.f32 %v2344, %v2483
        %v2533 = vadd.f32 %v2348, %v2487
        %v2534 = vadd.f32 %v2350, %v2489
        %v2535 = vadd.f32 %v2354, %v2493
        %v2536 = vadd.f32 %v2356, %v2495
        %v2537 = vadd.f32 %v2360, %v2499
        %v2538 = vadd.f32 %v2362, %v2501
        %v2539 = vadd.f32 %v2366, %v2505
        %v2540 = vadd.f32 %v2368, %v2507
        %v2541 = vadd.f32 %v2372, %v2511
        %v2542 = vadd.f32 %v2374, %v2513
        %v2543 = vadd.f32 %v2378, %v2517
        %v2544 = vadd.f32 %v2380, %v2519
        %v2545 = vadd.f32 %v2384, %v2523
        %v2546 = vadd.f32 %v2386, %v2525
        %s2547 = scalar_lea.vmem %s5, 432
        %v2548 = vld [vmem:[%s2547] sm:$0xff]
        %v2549 = vld [vmem:[%s2547 + $0x8] sm:$0xff]
        %v2550 = vld [vmem:[%s2547 + $0x10] sm:$0xff]
        %v2551 = vld [vmem:[%s2547 + $0x18] sm:$0xff]
        %v2552 = vld [vmem:[%s2547 + $0x20] sm:$0xff]
        %v2553 = vld [vmem:[%s2547 + $0x28] sm:$0xff]
        %v2554 = vld [vmem:[%s2547 + $0x30] sm:$0xff]
        %v2555 = vld [vmem:[%s2547 + $0x38] sm:$0xff]
        %v2556 = vld [vmem:[%s2547 + $0x40] sm:$0xff]
        %v2557 = vld [vmem:[%s2547 + $0x48] sm:$0xff]
        %v2558 = vld [vmem:[%s2547 + $0x50] sm:$0xff]
        %v2559 = vld [vmem:[%s2547 + $0x58] sm:$0xff]
        %v2560 = vld [vmem:[%s2547 + $0x60] sm:$0xff]
        %v2561 = vld [vmem:[%s2547 + $0x68] sm:$0xff]
        %v2562 = vld [vmem:[%s2547 + $0x70] sm:$0xff]
        %v2563 = vld [vmem:[%s2547 + $0x78] sm:$0xff]
        %v2564 = vld [vmem:[%s2547 + $0x80] sm:$0xff]
        %v2565 = vld [vmem:[%s2547 + $0x88] sm:$0xff]
        %v2567 = vsel %vm2127, %v2089, 0
        %2569 = vmatprep.subr.mxu0 %v2549
        %2570 = vmatpush1.msra.mxu0 %v2548
        %2571 = vmatprep.subr.mxu0 %v2551
        %2572 = vmatpush1.msra.mxu0 %v2550
        %2573 = vmatprep.subr.mxu0 %v2553
        %2574 = vmatpush1.msra.mxu0 %v2552
        %2575 = vmatprep.subr.mxu0 %v2555
        %2576 = vmatpush1.msra.mxu0 %v2554
        %2577 = vmatprep.subr.mxu0 %v2557
        %2578 = vmatpush1.msra.mxu0 %v2556
        %2579 = vmatprep.subr.mxu0 %v2559
        %2580 = vmatpush1.msra.mxu0 %v2558
        %2581 = vmatprep.subr.mxu0 %v2561
        %2582 = vmatpush1.msra.mxu0 %v2560
        %2583 = vmatprep.subr.mxu0 %v2563
        %2584 = vmatpush1.msra.mxu0 %v2562
        %2585 = vmatprep.subr.mxu0 %v2565
        %2586 = vmatpush1.msra.mxu0 %v2564
        %2587 = vmatprep.subr.mxu0 0.0
        %2588 = vmatpush1.msra.mxu0 0.0
        %2589 = vmatprep.subr.mxu0 0.0
        %2590 = vmatpush1.msra.mxu0 0.0
        %2591 = vmatprep.subr.mxu0 0.0
        %2592 = vmatpush1.msra.mxu0 0.0
        %2593 = vmatprep.subr.mxu0 0.0
        %2594 = vmatpush1.msra.mxu0 0.0
        %2595 = vmatprep.subr.mxu0 0.0
        %2596 = vmatpush1.msra.mxu0 0.0
        %2597 = vmatprep.subr.mxu0 0.0
        %2598 = vmatpush1.msra.mxu0 0.0
        %2599 = vmatprep.subr.mxu0 0.0
        %2600 = vmatpush1.msra.mxu0 0.0
        %2601 = vmatprep.subr.mxu0 0.0
        %2602 = vmatpush1.msra.mxu0 0.0
        %2603 = vmatprep.subr.mxu0 0.0
        %2604 = vmatpush1.msra.mxu0 0.0
        %2605 = vmatprep.subr.mxu0 0.0
        %2606 = vmatpush1.msra.mxu0 0.0
        %2607 = vmatprep.subr.mxu0 0.0
        %2608 = vmatpush1.msra.mxu0 0.0
        %2609 = vmatprep.subr.mxu0 0.0
        %2610 = vmatpush1.msra.mxu0 0.0
        %2611 = vmatprep.subr.mxu0 0.0
        %2612 = vmatpush1.msra.mxu0 0.0
        %2613 = vmatprep.subr.mxu0 0.0
        %2614 = vmatpush1.msra.mxu0 0.0
        %2615 = vmatprep.subr.mxu0 0.0
        %2616 = vmatpush1.msra.mxu0 0.0
        %2617 = vmatprep.subr.mxu0 0.0
        %2618 = vmatpush1.msra.mxu0 0.0
        %2619 = vmatprep.subr.mxu0 0.0
        %2620 = vmatpush1.msra.mxu0 0.0
        %2621 = vmatprep.subr.mxu0 0.0
        %2622 = vmatpush1.msra.mxu0 0.0
        %2623 = vmatprep.subr.mxu0 0.0
        %2624 = vmatpush1.msra.mxu0 0.0
        %2625 = vmatprep.subr.mxu0 0.0
        %2626 = vmatpush1.msra.mxu0 0.0
        %2627 = vmatprep.subr.mxu0 0.0
        %2628 = vmatpush1.msra.mxu0 0.0
        %2629 = vmatprep.subr.mxu0 0.0
        %2630 = vmatpush1.msra.mxu0 0.0
        %2631 = vmatprep.subr.mxu0 0.0
        %2632 = vmatpush1.msra.mxu0 0.0
        %2633 = vmatprep.mubr.f32.mxu0 0.0
        %2634 = vmatmul.mubr.f32.gmra.mrb[0].mxu0 %v2135
        %v2635 = vpop.f32.mrb[0].mxu0
        %v2636 = vadd.f32 0.0, %v2635
        %v2637 = vpop.f32.mrb[0].mxu0
        %v2638 = vadd.f32 0.0, %v2637
        %2639 = vmatprep.mubr.f32.mxu0 0.0
        %2640 = vmatmul.mubr.f32.gmra.mrb[0].mxu0 %v2138
        %v2641 = vpop.f32.mrb[0].mxu0
        %v2642 = vadd.f32 0.0, %v2641
        %v2643 = vpop.f32.mrb[0].mxu0
        %v2644 = vadd.f32 0.0, %v2643
        %2645 = vmatprep.mubr.f32.mxu0 0.0
        %2646 = vmatmul.mubr.f32.gmra.mrb[0].mxu0 %v2141
        %v2647 = vpop.f32.mrb[0].mxu0
        %v2648 = vadd.f32 0.0, %v2647
        %v2649 = vpop.f32.mrb[0].mxu0
        %v2650 = vadd.f32 0.0, %v2649
        %2651 = vmatprep.mubr.f32.mxu0 0.0
        %2652 = vmatmul.mubr.f32.gmra.mrb[0].mxu0 %v2144
        %v2653 = vpop.f32.mrb[0].mxu0
        %v2654 = vadd.f32 0.0, %v2653
        %v2655 = vpop.f32.mrb[0].mxu0
        %v2656 = vadd.f32 0.0, %v2655
        %2657 = vmatprep.mubr.f32.mxu0 0.0
        %2658 = vmatmul.mubr.f32.gmra.mrb[0].mxu0 %v2147
        %v2659 = vpop.f32.mrb[0].mxu0
        %v2660 = vadd.f32 0.0, %v2659
        %v2661 = vpop.f32.mrb[0].mxu0
        %v2662 = vadd.f32 0.0, %v2661
        %2663 = vmatprep.mubr.f32.mxu0 0.0
        %2664 = vmatmul.mubr.f32.gmra.mrb[0].mxu0 %v2150
        %v2665 = vpop.f32.mrb[0].mxu0
        %v2666 = vadd.f32 0.0, %v2665
        %v2667 = vpop.f32.mrb[0].mxu0
        %v2668 = vadd.f32 0.0, %v2667
        %2669 = vmatprep.mubr.f32.mxu0 0.0
        %2670 = vmatmul.mubr.f32.gmra.mrb[0].mxu0 %v2153
        %v2671 = vpop.f32.mrb[0].mxu0
        %v2672 = vadd.f32 0.0, %v2671
        %v2673 = vpop.f32.mrb[0].mxu0
        %v2674 = vadd.f32 0.0, %v2673
        %2675 = vmatprep.mubr.f32.mxu0 0.0
        %2676 = vmatmul.mubr.f32.gmra.mrb[0].mxu0 %v2412
        %v2677 = vpop.f32.mrb[0].mxu0
        %v2678 = vadd.f32 0.0, %v2677
        %v2679 = vpop.f32.mrb[0].mxu0
        %v2680 = vadd.f32 0.0, %v2679
        %2681 = vmatprep.mubr.f32.mxu0 0.0
        %2682 = vmatmul.mubr.f32.gmra.mrb[0].mxu0 %v2567
        %v2683 = vpop.f32.mrb[0].mxu0
        %v2684 = vpop.f32.mrb[0].mxu0
        %2685 = vdwg.mxu0
        %v2686 = vadd.f32 %v2531, %v2636
        %v2687 = vadd.f32 %v2532, %v2638
        %v2688 = vadd.f32 %v2533, %v2642
        %v2689 = vadd.f32 %v2534, %v2644
        %v2690 = vadd.f32 %v2535, %v2648
        %v2691 = vadd.f32 %v2536, %v2650
        %v2692 = vadd.f32 %v2537, %v2654
        %v2693 = vadd.f32 %v2538, %v2656
        %v2694 = vadd.f32 %v2539, %v2660
        %v2695 = vadd.f32 %v2540, %v2662
        %v2696 = vadd.f32 %v2541, %v2666
        %v2697 = vadd.f32 %v2542, %v2668
        %v2698 = vadd.f32 %v2543, %v2672
        %v2699 = vadd.f32 %v2544, %v2674
        %v2700 = vadd.f32 %v2545, %v2678
        %v2701 = vadd.f32 %v2546, %v2680
        %v2702 = vld [vmem:[%s6] sm:$0x3]
        %v2704 = vlaneseq
        %v2705 = vshrl.u32 %v2704, 7
        %v2706 = vsub.s32 0, %v2705
        %v2707 = vrot.slane %v2702, %v2706
        %v2708 = vlaneseq
        %v2709 = vshrl.u32 %v2708, 7
        %v2710 = vsub.s32 1, %v2709
        %v2711 = vrot.slane %v2702, %v2710
        %v2714 = vadd.f32 %v2686, %v2707
        %v2715 = vadd.f32 %v2687, %v2711
        %v2716 = vadd.f32 %v2688, %v2707
        %v2717 = vadd.f32 %v2689, %v2711
        %v2718 = vadd.f32 %v2690, %v2707
        %v2719 = vadd.f32 %v2691, %v2711
        %v2720 = vadd.f32 %v2692, %v2707
        %v2721 = vadd.f32 %v2693, %v2711
        %v2722 = vadd.f32 %v2694, %v2707
        %v2723 = vadd.f32 %v2695, %v2711
        %v2724 = vadd.f32 %v2696, %v2707
        %v2725 = vadd.f32 %v2697, %v2711
        %v2726 = vadd.f32 %v2698, %v2707
        %v2727 = vadd.f32 %v2699, %v2711
        %v2728 = vadd.f32 %v2700, %v2707
        %v2729 = vadd.f32 %v2701, %v2711
        %v2730 = vmax.f32 %v2714, 0.0
        %v2731 = vmax.f32 %v2715, 0.0
        %v2732 = vmax.f32 %v2716, 0.0
        %v2733 = vmax.f32 %v2717, 0.0
        %v2734 = vmax.f32 %v2718, 0.0
        %v2735 = vmax.f32 %v2719, 0.0
        %v2736 = vmax.f32 %v2720, 0.0
        %v2737 = vmax.f32 %v2721, 0.0
        %v2738 = vmax.f32 %v2722, 0.0
        %v2739 = vmax.f32 %v2723, 0.0
        %v2740 = vmax.f32 %v2724, 0.0
        %v2741 = vmax.f32 %v2725, 0.0
        %v2742 = vmax.f32 %v2726, 0.0
        %v2743 = vmax.f32 %v2727, 0.0
        %v2744 = vmax.f32 %v2728, 0.0
        %v2745 = vmax.f32 %v2729, 0.0
        %v2746 = vmax.f32 %v2730, %v2732
        %v2747 = vmax.f32 %v2731, %v2733
        %v2748 = vmax.f32 %v2734, %v2736
        %v2749 = vmax.f32 %v2735, %v2737
        %v2750 = vmax.f32 %v2738, %v2740
        %v2751 = vmax.f32 %v2739, %v2741
        %v2752 = vmax.f32 %v2742, %v2744
        %v2753 = vmax.f32 %v2743, %v2745
        %v2754 = vld [vmem:[%s7] sm:$0xff]
        %v2755 = vld [vmem:[%s7 + $0x8] sm:$0xff]
        %v2756 = vld [vmem:[%s7 + $0x10] sm:$0xff]
        %v2757 = vld [vmem:[%s7 + $0x18] sm:$0xff]
        %v2758 = vld [vmem:[%s7 + $0x20] sm:$0xff]
        %v2759 = vld [vmem:[%s7 + $0x28] sm:$0xff]
        %v2760 = vld [vmem:[%s7 + $0x30] sm:$0xff]
        %v2761 = vld [vmem:[%s7 + $0x38] sm:$0xff]
        %v2762 = vld [vmem:[%s7 + $0x40] sm:$0xff]
        %v2763 = vld [vmem:[%s7 + $0x48] sm:$0xff]
        %v2764 = vld [vmem:[%s7 + $0x50] sm:$0xff]
        %v2765 = vld [vmem:[%s7 + $0x58] sm:$0xff]
        %v2766 = vld [vmem:[%s7 + $0x60] sm:$0xff]
        %v2767 = vld [vmem:[%s7 + $0x68] sm:$0xff]
        %v2768 = vld [vmem:[%s7 + $0x70] sm:$0xff]
        %v2769 = vld [vmem:[%s7 + $0x78] sm:$0xff]
        %v2770 = vld [vmem:[%s7 + $0x80] sm:$0xff]
        %v2771 = vld [vmem:[%s7 + $0x88] sm:$0xff]
        %vm2772 = vcmask 130048
        %v2774 = vsel %vm2772, %v2747, 0
        %v2777 = vsel %vm2772, %v2749, 0
        %v2780 = vsel %vm2772, %v2751, 0
        %v2783 = vsel %vm2772, %v2753, 0
        %2785 = vmatprep.subr.mxu0 0.0
        %2786 = vmatpush1.msra.mxu0 %v2754
        %2787 = vmatprep.subr.mxu0 0.0
        %2788 = vmatpush1.msra.mxu0 %v2755
        %2789 = vmatprep.subr.mxu0 0.0
        %2790 = vmatpush1.msra.mxu0 %v2756
        %2791 = vmatprep.subr.mxu0 0.0
        %2792 = vmatpush1.msra.mxu0 %v2757
        %2793 = vmatprep.subr.mxu0 0.0
        %2794 = vmatpush1.msra.mxu0 %v2758
        %2795 = vmatprep.subr.mxu0 0.0
        %2796 = vmatpush1.msra.mxu0 %v2759
        %2797 = vmatprep.subr.mxu0 0.0
        %2798 = vmatpush1.msra.mxu0 %v2760
        %2799 = vmatprep.subr.mxu0 0.0
        %2800 = vmatpush1.msra.mxu0 %v2761
        %2801 = vmatprep.subr.mxu0 0.0
        %2802 = vmatpush1.msra.mxu0 %v2762
        %2803 = vmatprep.subr.mxu0 0.0
        %2804 = vmatpush1.msra.mxu0 %v2763
        %2805 = vmatprep.subr.mxu0 0.0
        %2806 = vmatpush1.msra.mxu0 %v2764
        %2807 = vmatprep.subr.mxu0 0.0
        %2808 = vmatpush1.msra.mxu0 %v2765
        %2809 = vmatprep.subr.mxu0 0.0
        %2810 = vmatpush1.msra.mxu0 %v2766
        %2811 = vmatprep.subr.mxu0 0.0
        %2812 = vmatpush1.msra.mxu0 %v2767
        %2813 = vmatprep.subr.mxu0 0.0
        %2814 = vmatpush1.msra.mxu0 %v2768
        %2815 = vmatprep.subr.mxu0 0.0
        %2816 = vmatpush1.msra.mxu0 %v2769
        %2817 = vmatprep.subr.mxu0 0.0
        %2818 = vmatpush1.msra.mxu0 %v2770
        %2819 = vmatprep.subr.mxu0 0.0
        %2820 = vmatpush1.msra.mxu0 %v2771
        %2821 = vmatprep.subr.mxu0 0.0
        %2822 = vmatpush1.msra.mxu0 0.0
        %2823 = vmatprep.subr.mxu0 0.0
        %2824 = vmatpush1.msra.mxu0 0.0
        %2825 = vmatprep.subr.mxu0 0.0
        %2826 = vmatpush1.msra.mxu0 0.0
        %2827 = vmatprep.subr.mxu0 0.0
        %2828 = vmatpush1.msra.mxu0 0.0
        %2829 = vmatprep.subr.mxu0 0.0
        %2830 = vmatpush1.msra.mxu0 0.0
        %2831 = vmatprep.subr.mxu0 0.0
        %2832 = vmatpush1.msra.mxu0 0.0
        %2833 = vmatprep.subr.mxu0 0.0
        %2834 = vmatpush1.msra.mxu0 0.0
        %2835 = vmatprep.subr.mxu0 0.0
        %2836 = vmatpush1.msra.mxu0 0.0
        %2837 = vmatprep.subr.mxu0 0.0
        %2838 = vmatpush1.msra.mxu0 0.0
        %2839 = vmatprep.subr.mxu0 0.0
        %2840 = vmatpush1.msra.mxu0 0.0
        %2841 = vmatprep.subr.mxu0 0.0
        %2842 = vmatpush1.msra.mxu0 0.0
        %2843 = vmatprep.subr.mxu0 0.0
        %2844 = vmatpush1.msra.mxu0 0.0
        %2845 = vmatprep.subr.mxu0 0.0
        %2846 = vmatpush1.msra.mxu0 0.0
        %2847 = vmatprep.subr.mxu0 0.0
        %2848 = vmatpush1.msra.mxu0 0.0
        %2849 = vmatprep.mubr.f32.mxu0 %v2774
        %2850 = vmatmul.mubr.f32.gmra.mrb[0].mxu0 %v2746
        %v2851 = vpop.f32.mrb[0].mxu0
        %v2852 = vadd.f32 0.0, %v2851
        %v2853 = vpop.f32.mrb[0].mxu0
        %2854 = vmatprep.mubr.f32.mxu0 %v2777
        %2855 = vmatmul.mubr.f32.gmra.mrb[0].mxu0 %v2748
        %v2856 = vpop.f32.mrb[0].mxu0
        %v2857 = vadd.f32 0.0, %v2856
        %v2858 = vpop.f32.mrb[0].mxu0
        %2859 = vmatprep.mubr.f32.mxu0 %v2780
        %2860 = vmatmul.mubr.f32.gmra.mrb[0].mxu0 %v2750
        %v2861 = vpop.f32.mrb[0].mxu0
        %v2862 = vadd.f32 0.0, %v2861
        %v2863 = vpop.f32.mrb[0].mxu0
        %2864 = vmatprep.mubr.f32.mxu0 %v2783
        %2865 = vmatmul.mubr.f32.gmra.mrb[0].mxu0 %v2752
        %v2866 = vpop.f32.mrb[0].mxu0
        %v2867 = vadd.f32 0.0, %v2866
        %v2868 = vpop.f32.mrb[0].mxu0
        %2869 = vdwg.mxu0
        %v2870 = vld [vmem:[%s8] sm:$0xff]
        %v2871 = vld [vmem:[%s8 + $0x8] sm:$0xff]
        %v2872 = vld [vmem:[%s8 + $0x10] sm:$0xff]
        %v2873 = vld [vmem:[%s8 + $0x18] sm:$0xff]
        %v2874 = vld [vmem:[%s8 + $0x20] sm:$0xff]
        %v2875 = vld [vmem:[%s8 + $0x28] sm:$0xff]
        %v2876 = vld [vmem:[%s8 + $0x30] sm:$0xff]
        %v2877 = vld [vmem:[%s8 + $0x38] sm:$0xff]
        %v2878 = vld [vmem:[%s8 + $0x40] sm:$0xff]
        %v2879 = vld [vmem:[%s8 + $0x48] sm:$0xff]
        %v2880 = vld [vmem:[%s8 + $0x50] sm:$0xff]
        %v2881 = vld [vmem:[%s8 + $0x58] sm:$0xff]
        %v2882 = vld [vmem:[%s8 + $0x60] sm:$0xff]
        %v2883 = vld [vmem:[%s8 + $0x68] sm:$0xff]
        %v2884 = vld [vmem:[%s8 + $0x70] sm:$0xff]
        %v2885 = vld [vmem:[%s8 + $0x78] sm:$0xff]
        %v2886 = vld [vmem:[%s8 + $0x80] sm:$0xff]
        %v2887 = vld [vmem:[%s8 + $0x88] sm:$0xff]
        %2888 = vmatprep.subr.mxu0 0.0
        %2889 = vmatpush1.msra.mxu0 %v2870
        %2890 = vmatprep.subr.mxu0 0.0
        %2891 = vmatpush1.msra.mxu0 %v2871
        %2892 = vmatprep.subr.mxu0 0.0
        %2893 = vmatpush1.msra.mxu0 %v2872
        %2894 = vmatprep.subr.mxu0 0.0
        %2895 = vmatpush1.msra.mxu0 %v2873
        %2896 = vmatprep.subr.mxu0 0.0
        %2897 = vmatpush1.msra.mxu0 %v2874
        %2898 = vmatprep.subr.mxu0 0.0
        %2899 = vmatpush1.msra.mxu0 %v2875
        %2900 = vmatprep.subr.mxu0 0.0
        %2901 = vmatpush1.msra.mxu0 %v2876
        %2902 = vmatprep.subr.mxu0 0.0
        %2903 = vmatpush1.msra.mxu0 %v2877
        %2904 = vmatprep.subr.mxu0 0.0
        %2905 = vmatpush1.msra.mxu0 %v2878
        %2906 = vmatprep.subr.mxu0 0.0
        %2907 = vmatpush1.msra.mxu0 %v2879
        %2908 = vmatprep.subr.mxu0 0.0
        %2909 = vmatpush1.msra.mxu0 %v2880
        %2910 = vmatprep.subr.mxu0 0.0
        %2911 = vmatpush1.msra.mxu0 %v2881
        %2912 = vmatprep.subr.mxu0 0.0
        %2913 = vmatpush1.msra.mxu0 %v2882
        %2914 = vmatprep.subr.mxu0 0.0
        %2915 = vmatpush1.msra.mxu0 %v2883
        %2916 = vmatprep.subr.mxu0 0.0
        %2917 = vmatpush1.msra.mxu0 %v2884
        %2918 = vmatprep.subr.mxu0 0.0
        %2919 = vmatpush1.msra.mxu0 %v2885
        %2920 = vmatprep.subr.mxu0 0.0
        %2921 = vmatpush1.msra.mxu0 %v2886
        %2922 = vmatprep.subr.mxu0 0.0
        %2923 = vmatpush1.msra.mxu0 %v2887
        %2924 = vmatprep.subr.mxu0 0.0
        %2925 = vmatpush1.msra.mxu0 0.0
        %2926 = vmatprep.subr.mxu0 0.0
        %2927 = vmatpush1.msra.mxu0 0.0
        %2928 = vmatprep.subr.mxu0 0.0
        %2929 = vmatpush1.msra.mxu0 0.0
        %2930 = vmatprep.subr.mxu0 0.0
        %2931 = vmatpush1.msra.mxu0 0.0
        %2932 = vmatprep.subr.mxu0 0.0
        %2933 = vmatpush1.msra.mxu0 0.0
        %2934 = vmatprep.subr.mxu0 0.0
        %2935 = vmatpush1.msra.mxu0 0.0
        %2936 = vmatprep.subr.mxu0 0.0
        %2937 = vmatpush1.msra.mxu0 0.0
        %2938 = vmatprep.subr.mxu0 0.0
        %2939 = vmatpush1.msra.mxu0 0.0
        %2940 = vmatprep.subr.mxu0 0.0
        %2941 = vmatpush1.msra.mxu0 0.0
        %2942 = vmatprep.subr.mxu0 0.0
        %2943 = vmatpush1.msra.mxu0 0.0
        %2944 = vmatprep.subr.mxu0 0.0
        %2945 = vmatpush1.msra.mxu0 0.0
        %2946 = vmatprep.subr.mxu0 0.0
        %2947 = vmatpush1.msra.mxu0 0.0
        %2948 = vmatprep.subr.mxu0 0.0
        %2949 = vmatpush1.msra.mxu0 0.0
        %2950 = vmatprep.subr.mxu0 0.0
        %2951 = vmatpush1.msra.mxu0 0.0
        %2952 = vmatprep.mubr.f32.mxu0 %v2774
        %2953 = vmatmul.mubr.f32.gmra.mrb[0].mxu0 %v2746
        %v2954 = vpop.f32.mrb[0].mxu0
        %v2955 = vadd.f32 0.0, %v2954
        %v2956 = vpop.f32.mrb[0].mxu0
        %2957 = vmatprep.mubr.f32.mxu0 %v2777
        %2958 = vmatmul.mubr.f32.gmra.mrb[0].mxu0 %v2748
        %v2959 = vpop.f32.mrb[0].mxu0
        %v2960 = vadd.f32 0.0, %v2959
        %v2961 = vpop.f32.mrb[0].mxu0
        %2962 = vmatprep.mubr.f32.mxu0 %v2780
        %2963 = vmatmul.mubr.f32.gmra.mrb[0].mxu0 %v2750
        %v2964 = vpop.f32.mrb[0].mxu0
        %v2965 = vadd.f32 0.0, %v2964
        %v2966 = vpop.f32.mrb[0].mxu0
        %2967 = vmatprep.mubr.f32.mxu0 %v2783
        %2968 = vmatmul.mubr.f32.gmra.mrb[0].mxu0 %v2752
        %v2969 = vpop.f32.mrb[0].mxu0
        %v2970 = vadd.f32 0.0, %v2969
        %v2971 = vpop.f32.mrb[0].mxu0
        %2972 = vdwg.mxu0
        %v2973 = vmax.f32 %v2852, %v2955
        %v2974 = vmax.f32 %v2857, %v2960
        %v2975 = vmax.f32 %v2862, %v2965
        %v2976 = vmax.f32 %v2867, %v2970
        %v2977 = vld [vmem:[%s9] sm:$0xff]
        %v2978 = vld [vmem:[%s9 + $0x8] sm:$0xff]
        %v2979 = vld [vmem:[%s9 + $0x10] sm:$0xff]
        %v2980 = vld [vmem:[%s9 + $0x18] sm:$0xff]
        %v2981 = vld [vmem:[%s9 + $0x20] sm:$0xff]
        %v2982 = vld [vmem:[%s9 + $0x28] sm:$0xff]
        %v2983 = vld [vmem:[%s9 + $0x30] sm:$0xff]
        %v2984 = vld [vmem:[%s9 + $0x38] sm:$0xff]
        %s2985 = scalar_lea.vmem %s9, 64
        %v2986 = vld [vmem:[%s2985] sm:$0xff]
        %v2987 = vld [vmem:[%s2985 + $0x8] sm:$0xff]
        %v2988 = vld [vmem:[%s2985 + $0x10] sm:$0xff]
        %v2989 = vld [vmem:[%s2985 + $0x18] sm:$0xff]
        %v2990 = vld [vmem:[%s2985 + $0x20] sm:$0xff]
        %v2991 = vld [vmem:[%s2985 + $0x28] sm:$0xff]
        %v2992 = vld [vmem:[%s2985 + $0x30] sm:$0xff]
        %v2993 = vld [vmem:[%s2985 + $0x38] sm:$0xff]
        %vm2994 = vcmask 523264
        %v2996 = vsel %vm2994, %v2974, 0
        %2998 = vmatprep.subr.mxu0 0.0
        %2999 = vmatpush1.msra.mxu0 %v2986
        %3000 = vmatprep.subr.mxu0 0.0
        %3001 = vmatpush1.msra.mxu0 %v2987
        %3002 = vmatprep.subr.mxu0 0.0
        %3003 = vmatpush1.msra.mxu0 %v2988
        %3004 = vmatprep.subr.mxu0 0.0
        %3005 = vmatpush1.msra.mxu0 %v2989
        %3006 = vmatprep.subr.mxu0 0.0
        %3007 = vmatpush1.msra.mxu0 %v2990
        %3008 = vmatprep.subr.mxu0 0.0
        %3009 = vmatpush1.msra.mxu0 %v2991
        %3010 = vmatprep.subr.mxu0 0.0
        %3011 = vmatpush1.msra.mxu0 %v2992
        %3012 = vmatprep.subr.mxu0 0.0
        %3013 = vmatpush1.msra.mxu0 %v2993
        %3014 = vmatprep.subr.mxu0 0.0
        %3015 = vmatpush1.msra.mxu0 0.0
        %3016 = vmatprep.subr.mxu0 0.0
        %3017 = vmatpush1.msra.mxu0 0.0
        %3018 = vmatprep.subr.mxu0 0.0
        %3019 = vmatpush1.msra.mxu0 0.0
        %3020 = vmatprep.subr.mxu0 0.0
        %3021 = vmatpush1.msra.mxu0 0.0
        %3022 = vmatprep.subr.mxu0 0.0
        %3023 = vmatpush1.msra.mxu0 0.0
        %3024 = vmatprep.subr.mxu0 0.0
        %3025 = vmatpush1.msra.mxu0 0.0
        %3026 = vmatprep.subr.mxu0 0.0
        %3027 = vmatpush1.msra.mxu0 0.0
        %3028 = vmatprep.subr.mxu0 0.0
        %3029 = vmatpush1.msra.mxu0 0.0
        %3030 = vmatprep.subr.mxu0 0.0
        %3031 = vmatpush1.msra.mxu0 0.0
        %3032 = vmatprep.subr.mxu0 0.0
        %3033 = vmatpush1.msra.mxu0 0.0
        %3034 = vmatprep.subr.mxu0 0.0
        %3035 = vmatpush1.msra.mxu0 0.0
        %3036 = vmatprep.subr.mxu0 0.0
        %3037 = vmatpush1.msra.mxu0 0.0
        %3038 = vmatprep.subr.mxu0 0.0
        %3039 = vmatpush1.msra.mxu0 0.0
        %3040 = vmatprep.subr.mxu0 0.0
        %3041 = vmatpush1.msra.mxu0 0.0
        %3042 = vmatprep.subr.mxu0 0.0
        %3043 = vmatpush1.msra.mxu0 0.0
        %3044 = vmatprep.subr.mxu0 0.0
        %3045 = vmatpush1.msra.mxu0 0.0
        %3046 = vmatprep.subr.mxu0 0.0
        %3047 = vmatpush1.msra.mxu0 0.0
        %3048 = vmatprep.subr.mxu0 0.0
        %3049 = vmatpush1.msra.mxu0 0.0
        %3050 = vmatprep.subr.mxu0 0.0
        %3051 = vmatpush1.msra.mxu0 0.0
        %3052 = vmatprep.subr.mxu0 0.0
        %3053 = vmatpush1.msra.mxu0 0.0
        %3054 = vmatprep.subr.mxu0 0.0
        %3055 = vmatpush1.msra.mxu0 0.0
        %3056 = vmatprep.subr.mxu0 0.0
        %3057 = vmatpush1.msra.mxu0 0.0
        %3058 = vmatprep.subr.mxu0 0.0
        %3059 = vmatpush1.msra.mxu0 0.0
        %3060 = vmatprep.subr.mxu0 0.0
        %3061 = vmatpush1.msra.mxu0 0.0
        %3062 = vmatprep.mubr.f32.mxu0 0.0
        %3063 = vmatmul.mubr.f32.gmra.mrb[0].mxu0 %v2996
        %v3064 = vpop.f32.mrb[0].mxu0
        %v3065 = vadd.f32 0.0, %v3064
        %v3066 = vpop.f32.mrb[0].mxu0
        %3067 = vdwg.mxu0
        %v3069 = vsel %vm2994, %v2973, 0
        %3071 = vmatprep.subr.mxu0 0.0
        %3072 = vmatpush1.msra.mxu0 %v2977
        %3073 = vmatprep.subr.mxu0 0.0
        %3074 = vmatpush1.msra.mxu0 %v2978
        %3075 = vmatprep.subr.mxu0 0.0
        %3076 = vmatpush1.msra.mxu0 %v2979
        %3077 = vmatprep.subr.mxu0 0.0
        %3078 = vmatpush1.msra.mxu0 %v2980
        %3079 = vmatprep.subr.mxu0 0.0
        %3080 = vmatpush1.msra.mxu0 %v2981
        %3081 = vmatprep.subr.mxu0 0.0
        %3082 = vmatpush1.msra.mxu0 %v2982
        %3083 = vmatprep.subr.mxu0 0.0
        %3084 = vmatpush1.msra.mxu0 %v2983
        %3085 = vmatprep.subr.mxu0 0.0
        %3086 = vmatpush1.msra.mxu0 %v2984
        %3087 = vmatprep.subr.mxu0 0.0
        %3088 = vmatpush1.msra.mxu0 0.0
        %3089 = vmatprep.subr.mxu0 0.0
        %3090 = vmatpush1.msra.mxu0 0.0
        %3091 = vmatprep.subr.mxu0 0.0
        %3092 = vmatpush1.msra.mxu0 0.0
        %3093 = vmatprep.subr.mxu0 0.0
        %3094 = vmatpush1.msra.mxu0 0.0
        %3095 = vmatprep.subr.mxu0 0.0
        %3096 = vmatpush1.msra.mxu0 0.0
        %3097 = vmatprep.subr.mxu0 0.0
        %3098 = vmatpush1.msra.mxu0 0.0
        %3099 = vmatprep.subr.mxu0 0.0
        %3100 = vmatpush1.msra.mxu0 0.0
        %3101 = vmatprep.subr.mxu0 0.0
        %3102 = vmatpush1.msra.mxu0 0.0
        %3103 = vmatprep.subr.mxu0 0.0
        %3104 = vmatpush1.msra.mxu0 0.0
        %3105 = vmatprep.subr.mxu0 0.0
        %3106 = vmatpush1.msra.mxu0 0.0
        %3107 = vmatprep.subr.mxu0 0.0
        %3108 = vmatpush1.msra.mxu0 0.0
        %3109 = vmatprep.subr.mxu0 0.0
        %3110 = vmatpush1.msra.mxu0 0.0
        %3111 = vmatprep.subr.mxu0 0.0
        %3112 = vmatpush1.msra.mxu0 0.0
        %3113 = vmatprep.subr.mxu0 0.0
        %3114 = vmatpush1.msra.mxu0 0.0
        %3115 = vmatprep.subr.mxu0 0.0
        %3116 = vmatpush1.msra.mxu0 0.0
        %3117 = vmatprep.subr.mxu0 0.0
        %3118 = vmatpush1.msra.mxu0 0.0
        %3119 = vmatprep.subr.mxu0 0.0
        %3120 = vmatpush1.msra.mxu0 0.0
        %3121 = vmatprep.subr.mxu0 0.0
        %3122 = vmatpush1.msra.mxu0 0.0
        %3123 = vmatprep.subr.mxu0 0.0
        %3124 = vmatpush1.msra.mxu0 0.0
        %3125 = vmatprep.subr.mxu0 0.0
        %3126 = vmatpush1.msra.mxu0 0.0
        %3127 = vmatprep.subr.mxu0 0.0
        %3128 = vmatpush1.msra.mxu0 0.0
        %3129 = vmatprep.subr.mxu0 0.0
        %3130 = vmatpush1.msra.mxu0 0.0
        %3131 = vmatprep.subr.mxu0 0.0
        %3132 = vmatpush1.msra.mxu0 0.0
        %3133 = vmatprep.subr.mxu0 0.0
        %3134 = vmatpush1.msra.mxu0 0.0
        %3135 = vmatprep.mubr.f32.mxu0 0.0
        %3136 = vmatmul.mubr.f32.gmra.mrb[0].mxu0 %v3069
        %v3137 = vpop.f32.mrb[0].mxu0
        %v3138 = vadd.f32 %v3065, %v3137
        %v3139 = vpop.f32.mrb[0].mxu0
        %3140 = vdwg.mxu0
        %s3141 = scalar_lea.vmem %s9, 128
        %v3142 = vld [vmem:[%s3141] sm:$0xff]
        %v3143 = vld [vmem:[%s3141 + $0x8] sm:$0xff]
        %v3144 = vld [vmem:[%s3141 + $0x10] sm:$0xff]
        %v3145 = vld [vmem:[%s3141 + $0x18] sm:$0xff]
        %v3146 = vld [vmem:[%s3141 + $0x20] sm:$0xff]
        %v3147 = vld [vmem:[%s3141 + $0x28] sm:$0xff]
        %v3148 = vld [vmem:[%s3141 + $0x30] sm:$0xff]
        %v3149 = vld [vmem:[%s3141 + $0x38] sm:$0xff]
        %v3151 = vsel %vm2994, %v2975, 0
        %3153 = vmatprep.subr.mxu0 0.0
        %3154 = vmatpush1.msra.mxu0 %v3142
        %3155 = vmatprep.subr.mxu0 0.0
        %3156 = vmatpush1.msra.mxu0 %v3143
        %3157 = vmatprep.subr.mxu0 0.0
        %3158 = vmatpush1.msra.mxu0 %v3144
        %3159 = vmatprep.subr.mxu0 0.0
        %3160 = vmatpush1.msra.mxu0 %v3145
        %3161 = vmatprep.subr.mxu0 0.0
        %3162 = vmatpush1.msra.mxu0 %v3146
        %3163 = vmatprep.subr.mxu0 0.0
        %3164 = vmatpush1.msra.mxu0 %v3147
        %3165 = vmatprep.subr.mxu0 0.0
        %3166 = vmatpush1.msra.mxu0 %v3148
        %3167 = vmatprep.subr.mxu0 0.0
        %3168 = vmatpush1.msra.mxu0 %v3149
        %3169 = vmatprep.subr.mxu0 0.0
        %3170 = vmatpush1.msra.mxu0 0.0
        %3171 = vmatprep.subr.mxu0 0.0
        %3172 = vmatpush1.msra.mxu0 0.0
        %3173 = vmatprep.subr.mxu0 0.0
        %3174 = vmatpush1.msra.mxu0 0.0
        %3175 = vmatprep.subr.mxu0 0.0
        %3176 = vmatpush1.msra.mxu0 0.0
        %3177 = vmatprep.subr.mxu0 0.0
        %3178 = vmatpush1.msra.mxu0 0.0
        %3179 = vmatprep.subr.mxu0 0.0
        %3180 = vmatpush1.msra.mxu0 0.0
        %3181 = vmatprep.subr.mxu0 0.0
        %3182 = vmatpush1.msra.mxu0 0.0
        %3183 = vmatprep.subr.mxu0 0.0
        %3184 = vmatpush1.msra.mxu0 0.0
        %3185 = vmatprep.subr.mxu0 0.0
        %3186 = vmatpush1.msra.mxu0 0.0
        %3187 = vmatprep.subr.mxu0 0.0
        %3188 = vmatpush1.msra.mxu0 0.0
        %3189 = vmatprep.subr.mxu0 0.0
        %3190 = vmatpush1.msra.mxu0 0.0
        %3191 = vmatprep.subr.mxu0 0.0
        %3192 = vmatpush1.msra.mxu0 0.0
        %3193 = vmatprep.subr.mxu0 0.0
        %3194 = vmatpush1.msra.mxu0 0.0
        %3195 = vmatprep.subr.mxu0 0.0
        %3196 = vmatpush1.msra.mxu0 0.0
        %3197 = vmatprep.subr.mxu0 0.0
        %3198 = vmatpush1.msra.mxu0 0.0
        %3199 = vmatprep.subr.mxu0 0.0
        %3200 = vmatpush1.msra.mxu0 0.0
        %3201 = vmatprep.subr.mxu0 0.0
        %3202 = vmatpush1.msra.mxu0 0.0
        %3203 = vmatprep.subr.mxu0 0.0
        %3204 = vmatpush1.msra.mxu0 0.0
        %3205 = vmatprep.subr.mxu0 0.0
        %3206 = vmatpush1.msra.mxu0 0.0
        %3207 = vmatprep.subr.mxu0 0.0
        %3208 = vmatpush1.msra.mxu0 0.0
        %3209 = vmatprep.subr.mxu0 0.0
        %3210 = vmatpush1.msra.mxu0 0.0
        %3211 = vmatprep.subr.mxu0 0.0
        %3212 = vmatpush1.msra.mxu0 0.0
        %3213 = vmatprep.subr.mxu0 0.0
        %3214 = vmatpush1.msra.mxu0 0.0
        %3215 = vmatprep.subr.mxu0 0.0
        %3216 = vmatpush1.msra.mxu0 0.0
        %3217 = vmatprep.mubr.f32.mxu0 0.0
        %3218 = vmatmul.mubr.f32.gmra.mrb[0].mxu0 %v3151
        %v3219 = vpop.f32.mrb[0].mxu0
        %v3220 = vadd.f32 0.0, %v3219
        %v3221 = vpop.f32.mrb[0].mxu0
        %3222 = vdwg.mxu0
        %v3223 = vadd.f32 %v3138, %v3220
        %s3224 = scalar_lea.vmem %s9, 192
        %v3225 = vld [vmem:[%s3224] sm:$0xff]
        %v3226 = vld [vmem:[%s3224 + $0x8] sm:$0xff]
        %v3227 = vld [vmem:[%s3224 + $0x10] sm:$0xff]
        %v3228 = vld [vmem:[%s3224 + $0x18] sm:$0xff]
        %v3229 = vld [vmem:[%s3224 + $0x20] sm:$0xff]
        %v3230 = vld [vmem:[%s3224 + $0x28] sm:$0xff]
        %v3231 = vld [vmem:[%s3224 + $0x30] sm:$0xff]
        %v3232 = vld [vmem:[%s3224 + $0x38] sm:$0xff]
        %v3234 = vsel %vm2994, %v2976, 0
        %3236 = vmatprep.subr.mxu0 0.0
        %3237 = vmatpush1.msra.mxu0 %v3225
        %3238 = vmatprep.subr.mxu0 0.0
        %3239 = vmatpush1.msra.mxu0 %v3226
        %3240 = vmatprep.subr.mxu0 0.0
        %3241 = vmatpush1.msra.mxu0 %v3227
        %3242 = vmatprep.subr.mxu0 0.0
        %3243 = vmatpush1.msra.mxu0 %v3228
        %3244 = vmatprep.subr.mxu0 0.0
        %3245 = vmatpush1.msra.mxu0 %v3229
        %3246 = vmatprep.subr.mxu0 0.0
        %3247 = vmatpush1.msra.mxu0 %v3230
        %3248 = vmatprep.subr.mxu0 0.0
        %3249 = vmatpush1.msra.mxu0 %v3231
        %3250 = vmatprep.subr.mxu0 0.0
        %3251 = vmatpush1.msra.mxu0 %v3232
        %3252 = vmatprep.subr.mxu0 0.0
        %3253 = vmatpush1.msra.mxu0 0.0
        %3254 = vmatprep.subr.mxu0 0.0
        %3255 = vmatpush1.msra.mxu0 0.0
        %3256 = vmatprep.subr.mxu0 0.0
        %3257 = vmatpush1.msra.mxu0 0.0
        %3258 = vmatprep.subr.mxu0 0.0
        %3259 = vmatpush1.msra.mxu0 0.0
        %3260 = vmatprep.subr.mxu0 0.0
        %3261 = vmatpush1.msra.mxu0 0.0
        %3262 = vmatprep.subr.mxu0 0.0
        %3263 = vmatpush1.msra.mxu0 0.0
        %3264 = vmatprep.subr.mxu0 0.0
        %3265 = vmatpush1.msra.mxu0 0.0
        %3266 = vmatprep.subr.mxu0 0.0
        %3267 = vmatpush1.msra.mxu0 0.0
        %3268 = vmatprep.subr.mxu0 0.0
        %3269 = vmatpush1.msra.mxu0 0.0
        %3270 = vmatprep.subr.mxu0 0.0
        %3271 = vmatpush1.msra.mxu0 0.0
        %3272 = vmatprep.subr.mxu0 0.0
        %3273 = vmatpush1.msra.mxu0 0.0
        %3274 = vmatprep.subr.mxu0 0.0
        %3275 = vmatpush1.msra.mxu0 0.0
        %3276 = vmatprep.subr.mxu0 0.0
        %3277 = vmatpush1.msra.mxu0 0.0
        %3278 = vmatprep.subr.mxu0 0.0
        %3279 = vmatpush1.msra.mxu0 0.0
        %3280 = vmatprep.subr.mxu0 0.0
        %3281 = vmatpush1.msra.mxu0 0.0
        %3282 = vmatprep.subr.mxu0 0.0
        %3283 = vmatpush1.msra.mxu0 0.0
        %3284 = vmatprep.subr.mxu0 0.0
        %3285 = vmatpush1.msra.mxu0 0.0
        %3286 = vmatprep.subr.mxu0 0.0
        %3287 = vmatpush1.msra.mxu0 0.0
        %3288 = vmatprep.subr.mxu0 0.0
        %3289 = vmatpush1.msra.mxu0 0.0
        %3290 = vmatprep.subr.mxu0 0.0
        %3291 = vmatpush1.msra.mxu0 0.0
        %3292 = vmatprep.subr.mxu0 0.0
        %3293 = vmatpush1.msra.mxu0 0.0
        %3294 = vmatprep.subr.mxu0 0.0
        %3295 = vmatpush1.msra.mxu0 0.0
        %3296 = vmatprep.subr.mxu0 0.0
        %3297 = vmatpush1.msra.mxu0 0.0
        %3298 = vmatprep.subr.mxu0 0.0
        %3299 = vmatpush1.msra.mxu0 0.0
        %3300 = vmatprep.mubr.f32.mxu0 0.0
        %3301 = vmatmul.mubr.f32.gmra.mrb[0].mxu0 %v3234
        %v3302 = vpop.f32.mrb[0].mxu0
        %v3303 = vadd.f32 0.0, %v3302
        %v3304 = vpop.f32.mrb[0].mxu0
        %3305 = vdwg.mxu0
        %v3306 = vadd.f32 %v3223, %v3303
        %v3307 = vld [vmem:[%s10] sm:$0x1]
        %v3309 = vlaneseq
        %v3310 = vshrl.u32 %v3309, 7
        %v3311 = vsub.s32 0, %v3310
        %v3312 = vrot.slane %v3307, %v3311
        %v3314 = vadd.f32 %v3306, %v3312
        %v3315 = vmax.f32 %v3314, 0.0
        %v3316 = vld [vmem:[%s11] sm:$0xff]
        %v3317 = vld [vmem:[%s11 + $0x8] sm:$0xff]
        %v3318 = vld [vmem:[%s11 + $0x10] sm:$0xff]
        %v3319 = vld [vmem:[%s11 + $0x18] sm:$0xff]
        %v3320 = vld [vmem:[%s11 + $0x20] sm:$0xff]
        %v3321 = vld [vmem:[%s11 + $0x28] sm:$0xff]
        %v3322 = vld [vmem:[%s11 + $0x30] sm:$0xff]
        %v3323 = vld [vmem:[%s11 + $0x38] sm:$0xff]
        %v3324 = vld [vmem:[%s11 + $0x40] sm:$0xff]
        %v3325 = vld [vmem:[%s11 + $0x48] sm:$0xff]
        %v3326 = vld [vmem:[%s11 + $0x50] sm:$0xff]
        %v3327 = vld [vmem:[%s11 + $0x58] sm:$0xff]
        %v3328 = vld [vmem:[%s11 + $0x60] sm:$0xff]
        %v3329 = vld [vmem:[%s11 + $0x68] sm:$0xff]
        %v3330 = vld [vmem:[%s11 + $0x70] sm:$0xff]
        %v3331 = vld [vmem:[%s11 + $0x78] sm:$0xff]
        %v3332 = vld [vmem:[%s12] sm:$0x1]
        %v3334 = vlaneseq
        %v3335 = vshrl.u32 %v3334, 7
        %v3336 = vsub.s32 0, %v3335
        %v3337 = vrot.slane %v3332, %v3336
        %3339 = vmatprep.subr.mxu0 0.0
        %3340 = vmatpush1.msra.mxu0 %v3316
        %3341 = vmatprep.subr.mxu0 0.0
        %3342 = vmatpush1.msra.mxu0 %v3317
        %3343 = vmatprep.subr.mxu0 0.0
        %3344 = vmatpush1.msra.mxu0 %v3318
        %3345 = vmatprep.subr.mxu0 0.0
        %3346 = vmatpush1.msra.mxu0 %v3319
        %3347 = vmatprep.subr.mxu0 0.0
        %3348 = vmatpush1.msra.mxu0 %v3320
        %3349 = vmatprep.subr.mxu0 0.0
        %3350 = vmatpush1.msra.mxu0 %v3321
        %3351 = vmatprep.subr.mxu0 0.0
        %3352 = vmatpush1.msra.mxu0 %v3322
        %3353 = vmatprep.subr.mxu0 0.0
        %3354 = vmatpush1.msra.mxu0 %v3323
        %3355 = vmatprep.subr.mxu0 0.0
        %3356 = vmatpush1.msra.mxu0 %v3324
        %3357 = vmatprep.subr.mxu0 0.0
        %3358 = vmatpush1.msra.mxu0 %v3325
        %3359 = vmatprep.subr.mxu0 0.0
        %3360 = vmatpush1.msra.mxu0 %v3326
        %3361 = vmatprep.subr.mxu0 0.0
        %3362 = vmatpush1.msra.mxu0 %v3327
        %3363 = vmatprep.subr.mxu0 0.0
        %3364 = vmatpush1.msra.mxu0 %v3328
        %3365 = vmatprep.subr.mxu0 0.0
        %3366 = vmatpush1.msra.mxu0 %v3329
        %3367 = vmatprep.subr.mxu0 0.0
        %3368 = vmatpush1.msra.mxu0 %v3330
        %3369 = vmatprep.subr.mxu0 0.0
        %3370 = vmatpush1.msra.mxu0 %v3331
        %3371 = vmatprep.subr.mxu0 0.0
        %3372 = vmatpush1.msra.mxu0 0.0
        %3373 = vmatprep.subr.mxu0 0.0
        %3374 = vmatpush1.msra.mxu0 0.0
        %3375 = vmatprep.subr.mxu0 0.0
        %3376 = vmatpush1.msra.mxu0 0.0
        %3377 = vmatprep.subr.mxu0 0.0
        %3378 = vmatpush1.msra.mxu0 0.0
        %3379 = vmatprep.subr.mxu0 0.0
        %3380 = vmatpush1.msra.mxu0 0.0
        %3381 = vmatprep.subr.mxu0 0.0
        %3382 = vmatpush1.msra.mxu0 0.0
        %3383 = vmatprep.subr.mxu0 0.0
        %3384 = vmatpush1.msra.mxu0 0.0
        %3385 = vmatprep.subr.mxu0 0.0
        %3386 = vmatpush1.msra.mxu0 0.0
        %3387 = vmatprep.subr.mxu0 0.0
        %3388 = vmatpush1.msra.mxu0 0.0
        %3389 = vmatprep.subr.mxu0 0.0
        %3390 = vmatpush1.msra.mxu0 0.0
        %3391 = vmatprep.subr.mxu0 0.0
        %3392 = vmatpush1.msra.mxu0 0.0
        %3393 = vmatprep.subr.mxu0 0.0
        %3394 = vmatpush1.msra.mxu0 0.0
        %3395 = vmatprep.subr.mxu0 0.0
        %3396 = vmatpush1.msra.mxu0 0.0
        %3397 = vmatprep.subr.mxu0 0.0
        %3398 = vmatpush1.msra.mxu0 0.0
        %3399 = vmatprep.subr.mxu0 0.0
        %3400 = vmatpush1.msra.mxu0 0.0
        %3401 = vmatprep.subr.mxu0 0.0
        %3402 = vmatpush1.msra.mxu0 0.0
        %3403 = vmatprep.mubr.f32.mxu0 0.0
        %3404 = vmatmul.mubr.f32.gmra.mrb[0].mxu0 %v3315
        %v3405 = vpop.f32.mrb[0].mxu0
        %v3406 = vadd.f32 %v3337, %v3405
        %v3407 = vpop.f32.mrb[0].mxu0
        %3408 = vdwg.mxu0
        %v3409 = vmax.f32 %v3406, 0.0
        %v3410 = vld [vmem:[%s13] sm:$0xff]
        %v3411 = vld [vmem:[%s13 + $0x8] sm:$0xff]
        %v3412 = vld [vmem:[%s13 + $0x10] sm:$0xff]
        %v3413 = vld [vmem:[%s13 + $0x18] sm:$0xff]
        %v3414 = vld [vmem:[%s13 + $0x20] sm:$0xff]
        %v3415 = vld [vmem:[%s13 + $0x28] sm:$0xff]
        %v3416 = vld [vmem:[%s13 + $0x30] sm:$0xff]
        %v3417 = vld [vmem:[%s13 + $0x38] sm:$0xff]
        %v3418 = vld [vmem:[%s13 + $0x40] sm:$0xff]
        %v3419 = vld [vmem:[%s13 + $0x48] sm:$0xff]
        %v3420 = vld [vmem:[%s13 + $0x50] sm:$0xff]
        %v3421 = vld [vmem:[%s13 + $0x58] sm:$0xff]
        %v3422 = vld [vmem:[%s13 + $0x60] sm:$0xff]
        %v3423 = vld [vmem:[%s13 + $0x68] sm:$0xff]
        %v3424 = vld [vmem:[%s13 + $0x70] sm:$0xff]
        %v3425 = vld [vmem:[%s13 + $0x78] sm:$0xff]
        %v3426 = vld [vmem:[%s14] sm:$0x1]
        %v3428 = vlaneseq
        %v3429 = vshrl.u32 %v3428, 7
        %v3430 = vsub.s32 0, %v3429
        %v3431 = vrot.slane %v3426, %v3430
        %3433 = vmatprep.subr.mxu0 0.0
        %3434 = vmatpush1.msra.mxu0 %v3410
        %3435 = vmatprep.subr.mxu0 0.0
        %3436 = vmatpush1.msra.mxu0 %v3411
        %3437 = vmatprep.subr.mxu0 0.0
        %3438 = vmatpush1.msra.mxu0 %v3412
        %3439 = vmatprep.subr.mxu0 0.0
        %3440 = vmatpush1.msra.mxu0 %v3413
        %3441 = vmatprep.subr.mxu0 0.0
        %3442 = vmatpush1.msra.mxu0 %v3414
        %3443 = vmatprep.subr.mxu0 0.0
        %3444 = vmatpush1.msra.mxu0 %v3415
        %3445 = vmatprep.subr.mxu0 0.0
        %3446 = vmatpush1.msra.mxu0 %v3416
        %3447 = vmatprep.subr.mxu0 0.0
        %3448 = vmatpush1.msra.mxu0 %v3417
        %3449 = vmatprep.subr.mxu0 0.0
        %3450 = vmatpush1.msra.mxu0 %v3418
        %3451 = vmatprep.subr.mxu0 0.0
        %3452 = vmatpush1.msra.mxu0 %v3419
        %3453 = vmatprep.subr.mxu0 0.0
        %3454 = vmatpush1.msra.mxu0 %v3420
        %3455 = vmatprep.subr.mxu0 0.0
        %3456 = vmatpush1.msra.mxu0 %v3421
        %3457 = vmatprep.subr.mxu0 0.0
        %3458 = vmatpush1.msra.mxu0 %v3422
        %3459 = vmatprep.subr.mxu0 0.0
        %3460 = vmatpush1.msra.mxu0 %v3423
        %3461 = vmatprep.subr.mxu0 0.0
        %3462 = vmatpush1.msra.mxu0 %v3424
        %3463 = vmatprep.subr.mxu0 0.0
        %3464 = vmatpush1.msra.mxu0 %v3425
        %3465 = vmatprep.subr.mxu0 0.0
        %3466 = vmatpush1.msra.mxu0 0.0
        %3467 = vmatprep.subr.mxu0 0.0
        %3468 = vmatpush1.msra.mxu0 0.0
        %3469 = vmatprep.subr.mxu0 0.0
        %3470 = vmatpush1.msra.mxu0 0.0
        %3471 = vmatprep.subr.mxu0 0.0
        %3472 = vmatpush1.msra.mxu0 0.0
        %3473 = vmatprep.subr.mxu0 0.0
        %3474 = vmatpush1.msra.mxu0 0.0
        %3475 = vmatprep.subr.mxu0 0.0
        %3476 = vmatpush1.msra.mxu0 0.0
        %3477 = vmatprep.subr.mxu0 0.0
        %3478 = vmatpush1.msra.mxu0 0.0
        %3479 = vmatprep.subr.mxu0 0.0
        %3480 = vmatpush1.msra.mxu0 0.0
        %3481 = vmatprep.subr.mxu0 0.0
        %3482 = vmatpush1.msra.mxu0 0.0
        %3483 = vmatprep.subr.mxu0 0.0
        %3484 = vmatpush1.msra.mxu0 0.0
        %3485 = vmatprep.subr.mxu0 0.0
        %3486 = vmatpush1.msra.mxu0 0.0
        %3487 = vmatprep.subr.mxu0 0.0
        %3488 = vmatpush1.msra.mxu0 0.0
        %3489 = vmatprep.subr.mxu0 0.0
        %3490 = vmatpush1.msra.mxu0 0.0
        %3491 = vmatprep.subr.mxu0 0.0
        %3492 = vmatpush1.msra.mxu0 0.0
        %3493 = vmatprep.subr.mxu0 0.0
        %3494 = vmatpush1.msra.mxu0 0.0
        %3495 = vmatprep.subr.mxu0 0.0
        %3496 = vmatpush1.msra.mxu0 0.0
        %3497 = vmatprep.mubr.f32.mxu0 0.0
        %3498 = vmatmul.mubr.f32.gmra.mrb[0].mxu0 %v3409
        %v3499 = vpop.f32.mrb[0].mxu0
        %v3500 = vadd.f32 %v3431, %v3499
        %v3501 = vpop.f32.mrb[0].mxu0
        %3502 = vdwg.mxu0
        %3503 = vst [vmem:[%s487] sm:$0xff] %v3500
        %s3504 = sand.u32 %s357, 1
        %s3505 = scalar_lea.sflag [#allocation3], %s3504
        %s3506 = sand.u32 %s357, 1
        %s3507 = smul.addr %s3506, 8
        %s3508 = scalar_lea.vmem [#allocation2], %s3507
        // Predicated region
        $region81: #{lenet5_forward.1} parent=79 // pred_check
          %p3509 = pneg %p367
        $region82: #{lenet5_forward.1} parent=79 // pred_check_branch
          %3511 = sbr.rel (%p3509) target = $region84
        $region83: #{lenet5_forward.1} parent=79 // pred_region
          %s3513 = ssub.s32 128, 128
          %3514 = vsyncadd %s3505, %s3513
          %s3515 = smul.addr %s29, 128
          %s3516 = scalar_lea.hbm %s15, %s3515
          %s3518 = sshll.u32 %s3508, 4
          %s3519 = int_to_ptr.vmem [resolvable:$true] %s3518
          %3521 = dma.vmem_to_hbm [thread:$0]  %s3519, 128, %s3516, %s3505
        $region84: #{lenet5_forward.1} parent=79 // pred_fallthru
          _
      $region80: #{lenet5_forward.1} parent=5 // pred_fallthru
        _
      %p3522 = scmp.le.s32.totalorder 2, %s24
      // Predicated region
      $region85: #{lenet5_forward.1} parent=5 // pred_check
        %p3523 = pneg %p3522
      $region86: #{lenet5_forward.1} parent=5 // pred_check_branch
        %3525 = sbr.rel (%p3523) target = $region88
      $region87: #{lenet5_forward.1} parent=5 // pred_region
        %s3526 = ssub.s32 %s24, 2
        // Predicated region
        $region89: #{lenet5_forward.1} parent=87 // pred_check
          %p3527 = pneg %p373
        $region90: #{lenet5_forward.1} parent=87 // pred_check_branch
          %3529 = sbr.rel (%p3527) target = $region92
        $region91: #{lenet5_forward.1} parent=87 // pred_region
          %s3530 = sand.u32 %s358, 1
          %s3531 = scalar_lea.sflag [#allocation3], %s3530
          %s3532 = sand.u32 %s358, 1
          %s3533 = smul.addr %s3532, 8
          %s3534 = scalar_lea.vmem [#allocation2], %s3533
          %3535 = dma.done %s3531, 128
        $region92: #{lenet5_forward.1} parent=87 // pred_fallthru
          _
      $region88: #{lenet5_forward.1} parent=5 // pred_fallthru
        _
    $region6: #{lenet5_forward.1} parent=1 // loop_footer
      %s28 = sadd.s32 1, %s24
    $region7: #{lenet5_forward.1} parent=1 // loop_footer_branch
      %23 = sbr.rel target = $region3
    $region8: #{lenet5_forward.1} parent=1 // loop_exit
      _
    %3536 = vsyncpa [#allocation3], 1
    %s3537 = scalar_lea.sflag [#allocation3], 1
    %3538 = vsyncpa %s3537, 1

</llo_original>
